<compile_context>
chip_gen: v6e
topology: v6e:2x2x1
jax: 0.10.0
libtpu: 0.0.40
codegen_flags: <defaults>
</compile_context>

<pallas_src>
import functools

import numpy as np

import jax
import jax.numpy as jnp
from jax import lax
from jax.experimental import pallas as pl
from jax.experimental.pallas import tpu as pltpu


def _rvs_kernel(vid_ref, pts_ref, uni_ref, out_ref, if_scr, *,
                n_pad, tile_j, sample_cap, s_pad):
    """One batch element.

    vid_ref : (1, Npad) int32  -- flat voxel id per point, -1 = out-of-range / pad
    pts_ref : (C, Npad) f32    -- points, channel-major (lane-dense)
    uni_ref : (1, SP)  f32     -- uniforms in [0,1) for the random padding slots
    out_ref : (C, SP)  f32     -- compacted + randomly padded sample (channel-major)
    if_scr  : (1, Npad) f32    -- VMEM scratch: is-first-occurrence mask
    """
    N, TJ, S, SP = n_pad, tile_j, sample_cap, s_pad
    n_chunks = N // TJ

    # ---- hoisted loop invariants (JAX does not CSE broadcast/iota) ----
    ii = lax.broadcasted_iota(jnp.int32, (1, N), 1)        # query index (lanes)
    tt = lax.broadcasted_iota(jnp.int32, (TJ, 1), 0)       # in-chunk candidate idx
    r0 = lax.broadcasted_iota(jnp.int32, (TJ, TJ), 0)
    r1 = lax.broadcasted_iota(jnp.int32, (TJ, TJ), 1)
    eye = r0 == r1                                         # diagonal-select mask
    low = r1 < r0                                          # strict lower: u < t
    ones_row = jnp.ones((1, TJ), jnp.float32)

    vid_row = vid_ref[...]                                 # (1, N) int32

    # ---- pass 1: first-occurrence dedup, tiled over the candidate axis ----
    # dup_cnt[i] = #{ j < i : vid[j] == vid[i] }   (f32 integer counts, exact)
    def dedup_body(c, dup_cnt):
        j0 = pl.multiple_of(c * TJ, TJ)
        vch = vid_ref[:, pl.ds(j0, TJ)]                    # (1, TJ)
        # lane row -> sublane column without a (N,1) input: diagonal select + reduce
        vj_col = jnp.sum(jnp.where(eye, vch, 0), axis=1, keepdims=True)   # (TJ, 1)
        cand = tt + j0                                     # (TJ, 1) global candidate idx
        hit = ((vj_col == vid_row) & (cand < ii)).astype(jnp.float32)     # (TJ, N)
        # reduce over candidates on the otherwise idle MXU
        return dup_cnt + jnp.dot(ones_row, hit, preferred_element_type=jnp.float32)

    dup_cnt = lax.fori_loop(0, n_chunks, dedup_body,
                            jnp.zeros((1, N), jnp.float32), unroll=2)

    is_first = ((vid_row >= 0) & (dup_cnt == 0.0)).astype(jnp.float32)    # (1, N)
    if_scr[...] = is_first

    # number of sampled voxels, capped at max_num_voxels == sample_num
    ns = jnp.minimum(jnp.sum(is_first, axis=1, keepdims=True),
                     jnp.float32(S))                                      # (1, 1)

    # ---- padding slots: slot < ns -> identity, else random index in [0, ns) ----
    slot_i = lax.broadcasted_iota(jnp.int32, (1, SP), 1)
    slot_f = slot_i.astype(jnp.float32)
    pad = jnp.clip(jnp.floor(uni_ref[...] * ns), 0.0, jnp.maximum(ns - 1.0, 0.0))
    src = jnp.where(slot_f < ns, slot_f, pad)                             # (1, SP)

    # ---- pass 2: chunked compaction  acc += pts_chunk @ onehot_chunk (MXU) ----
    def compact_body(c, carry):
        base, acc = carry
        j0 = pl.multiple_of(c * TJ, TJ)
        if_chunk = if_scr[:, pl.ds(j0, TJ)]                # (1, TJ)
        if_col = jnp.sum(jnp.where(eye, if_chunk, 0.0), axis=1, keepdims=True)
        cum_col = jnp.sum(jnp.where(low, if_chunk, 0.0), axis=1, keepdims=True)
        rank_col = base + cum_col                          # exclusive rank, (TJ, 1)
        ranksel = jnp.where(if_col > 0.5, rank_col, -1.0)  # non-first never matches
        onehot = (ranksel == src).astype(jnp.float32)      # (TJ, SP)
        pts_chunk = pts_ref[:, pl.ds(j0, TJ)]              # (C, TJ)
        acc = acc + jnp.dot(pts_chunk, onehot, preferred_element_type=jnp.float32)
        base = base + jnp.sum(if_chunk, axis=1, keepdims=True)
        return base, acc

    _, acc = lax.fori_loop(
        0, n_chunks, compact_body,
        (jnp.zeros((1, 1), jnp.float32),
         jnp.zeros(out_ref.shape, jnp.float32)),
        unroll=2)

    out_ref[...] = acc                                     # lane-dense (C, SP) store


def random_voxel_sampling(xyz, *, voxel, coors_range, sample_num,
                          seed=0, tile_j=512):
    """xyz: (B, N, C>=3) -> (B, sample_num, C) float32."""
    xyz = xyz.astype(jnp.float32)
    B, N, C = xyz.shape
    assert C >= 3, "need at least xyz channels"

    vx, vy, vz = (float(v) for v in voxel)
    xmin, ymin, zmin, xmax, ymax, zmax = (float(v) for v in coors_range)
    gx = int(round((xmax - xmin) / vx))
    gy = int(round((ymax - ymin) / vy))
    gz = int(round((zmax - zmin) / vz))
    assert gx * gy * gz < 2 ** 31, "voxel grid too large for int32 flat ids"

    # --- cheap O(N) voxelization in plain JAX (elementwise, fuses) ---
    mins = jnp.array([xmin, ymin, zmin], jnp.float32)
    inv = jnp.array([1.0 / vx, 1.0 / vy, 1.0 / vz], jnp.float32)
    gd = jnp.array([gx, gy, gz], jnp.int32)
    coords = jnp.floor((xyz[..., :3] - mins) * inv).astype(jnp.int32)   # (B,N,3)
    in_range = jnp.all((coords >= 0) & (coords < gd), axis=-1)          # (B,N)
    vid = coords[..., 0] + coords[..., 1] * gx + coords[..., 2] * (gx * gy)
    vid = jnp.where(in_range, vid, -1).astype(jnp.int32)                # (B,N)

    # --- tiling: candidate-chunk size from a VMEM budget; pad N to a multiple ---
    n128 = max(128, ((N + 127) // 128) * 128)
    TJ = max(128, (min(int(tile_j), n128) // 128) * 128)
    while TJ > 128 and TJ * n128 * 7 > 24 * 2 ** 20:     # (TJ, Npad) transient budget
        TJ = max(128, ((TJ // 2) // 128) * 128)
    n_pad = ((N + TJ - 1) // TJ) * TJ

    S = int(sample_num)
    SP = max(128, ((S + 127) // 128) * 128)              # lane-dense slot/output dim

    # pad: sentinel ids (-1, never sampled) and zero coordinates
    vid_row = jnp.pad(vid, ((0, 0), (0, n_pad - N)), constant_values=-1)
    vid_row = vid_row.reshape(B, 1, n_pad)
    pts_cn = jnp.pad(jnp.swapaxes(xyz, 1, 2), ((0, 0), (0, 0), (0, n_pad - N)))

    # random padding draws (torch.randint equivalent), generated outside the
    # kernel: pltpu.prng_* has no interpret-mode lowering and this is O(SP) work.
    key = jax.random.PRNGKey(int(seed))
    uni = jax.random.uniform(key, (B, 1, SP), dtype=jnp.float32)

    kernel = functools.partial(_rvs_kernel, n_pad=n_pad, tile_j=TJ,
                               sample_cap=S, s_pad=SP)

    # per-step VMEM: double-buffered blocks + in-kernel transients
    est = (2 * 4 * (n_pad * (1 + C) + SP * (1 + C))
           + 7 * TJ * n_pad + 12 * TJ * TJ + 12 * n_pad)
    cp_kwargs = {}
    if est > 12 * 2 ** 20:
        # stay well under v7x's 64 MiB physical VMEM
        cp_kwargs["vmem_limit_bytes"] = int(min(est + (16 << 20), 48 * 2 ** 20))

    out = pl.pallas_call(
        kernel,
        out_shape=jax.ShapeDtypeStruct((B, C, SP), jnp.float32),
        grid_spec=pltpu.PrefetchScalarGridSpec(
            num_scalar_prefetch=0,
            grid=(B,),
            in_specs=[
                pl.BlockSpec((None, 1, n_pad), lambda b: (b, 0, 0)),
                pl.BlockSpec((None, C, n_pad), lambda b: (b, 0, 0)),
                pl.BlockSpec((None, 1, SP), lambda b: (b, 0, 0)),
            ],
            out_specs=pl.BlockSpec((None, C, SP), lambda b: (b, 0, 0)),
            scratch_shapes=[pltpu.VMEM((1, n_pad), jnp.float32)],
        ),
        compiler_params=pltpu.CompilerParams(
            dimension_semantics=("parallel",), **cp_kwargs),
    )(vid_row, pts_cn, uni)

    return jnp.swapaxes(out[:, :, :S], 1, 2)             # (B, sample_num, C)


if __name__ == "__main__":
    key = jax.random.PRNGKey(0)
    k_pts, _ = jax.random.split(key)

    B, N = 2, 512
    sample_num = 64
    voxel = (0.5, 0.5, 0.5)
    coors_range = (0.0, 0.0, 0.0, 4.0, 4.0, 2.0)    # -> grid 8 x 8 x 4

    # points mostly inside the range, a few outside (exercises the range mask)
    xyz = jax.random.uniform(
        k_pts, (B, N, 3), dtype=jnp.float32,
        minval=jnp.array([-0.2, -0.2, -0.1], jnp.float32),
        maxval=jnp.array([4.2, 4.2, 2.1], jnp.float32))

    out = random_voxel_sampling(
        xyz, voxel=voxel, coors_range=coors_range,
        sample_num=sample_num, seed=1234, tile_j=256)   # 2 candidate chunks at N=512
    out = jax.block_until_ready(out)

    assert out.shape == (B, sample_num, 3)
    assert out.dtype == jnp.float32
    out_np = np.asarray(out)
    xyz_np = np.asarray(xyz)
    assert np.all(np.isfinite(out_np))

    # every sampled row must (approximately) be one of the input points
    for b in range(B):
        d = np.abs(out_np[b][:, None, :] - xyz_np[b][None, :, :]).max(-1).min(-1)
        assert float(d.max()) < 3e-2, float(d.max())

    # number of distinct sampled points == min(#occupied voxels, sample_num)
    mins_np = np.array([0.0, 0.0, 0.0], np.float32)
    inv_np = np.array([2.0, 2.0, 2.0], np.float32)
    gd_np = np.array([8, 8, 4], np.int64)
    c_np = np.floor((xyz_np - mins_np) * inv_np).astype(np.int64)
    ok_np = np.all((c_np >= 0) & (c_np < gd_np), axis=-1)
    vid_np = c_np[..., 0] + c_np[..., 1] * 8 + c_np[..., 2] * 64
    for b in range(B):
        nvox = len(np.unique(vid_np[b][ok_np[b]]))
        n_unique = len(np.unique(out_np[b].round(5), axis=0))
        assert n_unique == min(nvox, sample_num), (n_unique, nvox)

    print("KERNEL_OK")
</pallas_src>

<mosaic_0001>
module attributes {stable_mosaic.version = 11 : i64} {
  func.func @_rvs_kernel(%arg0: i32, %arg1: memref<1x1x512xi32, #tpu.memory_space<vmem>>, %arg2: memref<1x3x512xf32, #tpu.memory_space<vmem>>, %arg3: memref<1x1x128xf32, #tpu.memory_space<vmem>>, %arg4: memref<1x3x128xf32, #tpu.memory_space<vmem>>, %arg5: memref<1x512xf32, #tpu.memory_space<vmem>>) attributes {dimension_semantics = [#tpu.dimension_semantics<parallel>], iteration_bounds = array<i64: 2>, scalar_prefetch = 0 : i64, scratch_operands = 1 : i64, tpu.core_type = #tpu.core_type<tc>, window_params = [{transform_indices = @transform_0, window_bounds = array<i64: 1, 1, 512>}, {transform_indices = @transform_1, window_bounds = array<i64: 1, 3, 512>}, {transform_indices = @transform_2, window_bounds = array<i64: 1, 1, 128>}, {transform_indices = @transform_3, window_bounds = array<i64: 1, 3, 128>}]} {
    %0 = tpu.iota {dimensions = array<i32: 1>} : vector<1x512xi32>
    %1 = tpu.iota {dimensions = array<i32: 0>} : vector<256x1xi32>
    %2 = tpu.iota {dimensions = array<i32: 0>} : vector<256x256xi32>
    %3 = tpu.iota {dimensions = array<i32: 1>} : vector<256x256xi32>
    %4 = arith.cmpi eq, %2, %3 : vector<256x256xi32>
    %5 = arith.cmpi slt, %3, %2 : vector<256x256xi32>
    %cst = arith.constant 1.000000e+00 : f32
    %6 = vector.broadcast %cst : f32 to vector<1x256xf32>
    %c0 = arith.constant 0 : index
    %c0_0 = arith.constant 0 : index
    %c0_1 = arith.constant 0 : index
    %7 = vector.load %arg1[%c0, %c0_0, %c0_1] : memref<1x1x512xi32, #tpu.memory_space<vmem>>, vector<1x1x512xi32>
    %8 = vector.shape_cast %7 : vector<1x1x512xi32> to vector<1x512xi32>
    %cst_2 = arith.constant 0.000000e+00 : f32
    %9 = vector.broadcast %cst_2 : f32 to vector<1x512xf32>
    %c0_i32 = arith.constant 0 : i32
    %c256_i32 = arith.constant 256 : i32
    %10 = arith.muli %c0_i32, %c256_i32 : i32
    %11 = tpu.assume_multiple %10, 256 : i32
    %c0_3 = arith.constant 0 : index
    %c0_4 = arith.constant 0 : index
    %12 = arith.index_cast %11 : i32 to index
    %13 = vector.load %arg1[%c0_3, %c0_4, %12] : memref<1x1x512xi32, #tpu.memory_space<vmem>>, vector<1x1x256xi32>
    %14 = vector.shape_cast %13 : vector<1x1x256xi32> to vector<1x256xi32>
    %c0_i32_5 = arith.constant 0 : i32
    %15 = vector.shape_cast %14 : vector<1x256xi32> to vector<1x256xi32>
    %16 = vector.broadcast %15 : vector<1x256xi32> to vector<256x256xi32>
    %17 = vector.broadcast %c0_i32_5 : i32 to vector<256x256xi32>
    %18 = arith.select %4, %16, %17 : vector<256x256xi1>, vector<256x256xi32>
    %cst_6 = arith.constant dense<0> : vector<256xi32>
    %19 = vector.multi_reduction <add>, %18, %cst_6 [1] : vector<256x256xi32> to vector<256xi32>
    %20 = vector.shape_cast %19 : vector<256xi32> to vector<256x1xi32>
    %21 = vector.broadcast %11 : i32 to vector<256x1xi32>
    %22 = arith.addi %1, %21 : vector<256x1xi32>
    %23 = vector.broadcast %20 : vector<256x1xi32> to vector<256x512xi32>
    %24 = vector.broadcast %8 : vector<1x512xi32> to vector<256x512xi32>
    %25 = arith.cmpi eq, %23, %24 : vector<256x512xi32>
    %26 = vector.broadcast %22 : vector<256x1xi32> to vector<256x512xi32>
    %27 = vector.broadcast %0 : vector<1x512xi32> to vector<256x512xi32>
    %28 = arith.cmpi slt, %26, %27 : vector<256x512xi32>
    %29 = arith.andi %25, %28 : vector<256x512xi1>
    %30 = arith.extui %29 : vector<256x512xi1> to vector<256x512xi32>
    %31 = arith.sitofp %30 : vector<256x512xi32> to vector<256x512xf32>
    %cst_7 = arith.constant dense<0.000000e+00> : vector<1x512xf32>
    %32 = tpu.matmul %6, %31, %cst_7 {dimension_numbers = #tpu.dot_dimension_numbers<[1], [0], [0], [1], [0, 0, 1, 1], [], []>} : vector<1x256xf32>, vector<256x512xf32>, vector<1x512xf32> -> vector<1x512xf32>
    %33 = arith.addf %9, %32 : vector<1x512xf32>
    %c1_i32 = arith.constant 1 : i32
    %c256_i32_8 = arith.constant 256 : i32
    %34 = arith.muli %c1_i32, %c256_i32_8 : i32
    %35 = tpu.assume_multiple %34, 256 : i32
    %c0_9 = arith.constant 0 : index
    %c0_10 = arith.constant 0 : index
    %36 = arith.index_cast %35 : i32 to index
    %37 = vector.load %arg1[%c0_9, %c0_10, %36] : memref<1x1x512xi32, #tpu.memory_space<vmem>>, vector<1x1x256xi32>
    %38 = vector.shape_cast %37 : vector<1x1x256xi32> to vector<1x256xi32>
    %c0_i32_11 = arith.constant 0 : i32
    %39 = vector.shape_cast %38 : vector<1x256xi32> to vector<1x256xi32>
    %40 = vector.broadcast %39 : vector<1x256xi32> to vector<256x256xi32>
    %41 = vector.broadcast %c0_i32_11 : i32 to vector<256x256xi32>
    %42 = arith.select %4, %40, %41 : vector<256x256xi1>, vector<256x256xi32>
    %cst_12 = arith.constant dense<0> : vector<256xi32>
    %43 = vector.multi_reduction <add>, %42, %cst_12 [1] : vector<256x256xi32> to vector<256xi32>
    %44 = vector.shape_cast %43 : vector<256xi32> to vector<256x1xi32>
    %45 = vector.broadcast %35 : i32 to vector<256x1xi32>
    %46 = arith.addi %1, %45 : vector<256x1xi32>
    %47 = vector.broadcast %44 : vector<256x1xi32> to vector<256x512xi32>
    %48 = vector.broadcast %8 : vector<1x512xi32> to vector<256x512xi32>
    %49 = arith.cmpi eq, %47, %48 : vector<256x512xi32>
    %50 = vector.broadcast %46 : vector<256x1xi32> to vector<256x512xi32>
    %51 = vector.broadcast %0 : vector<1x512xi32> to vector<256x512xi32>
    %52 = arith.cmpi slt, %50, %51 : vector<256x512xi32>
    %53 = arith.andi %49, %52 : vector<256x512xi1>
    %54 = arith.extui %53 : vector<256x512xi1> to vector<256x512xi32>
    %55 = arith.sitofp %54 : vector<256x512xi32> to vector<256x512xf32>
    %cst_13 = arith.constant dense<0.000000e+00> : vector<1x512xf32>
    %56 = tpu.matmul %6, %55, %cst_13 {dimension_numbers = #tpu.dot_dimension_numbers<[1], [0], [0], [1], [0, 0, 1, 1], [], []>} : vector<1x256xf32>, vector<256x512xf32>, vector<1x512xf32> -> vector<1x512xf32>
    %57 = arith.addf %33, %56 : vector<1x512xf32>
    %c2_i32 = arith.constant 2 : i32
    %c0_i32_14 = arith.constant 0 : i32
    %58 = vector.broadcast %c0_i32_14 : i32 to vector<1x512xi32>
    %59 = arith.cmpi sge, %8, %58 : vector<1x512xi32>
    %cst_15 = arith.constant 0.000000e+00 : f32
    %60 = vector.broadcast %cst_15 : f32 to vector<1x512xf32>
    %61 = arith.cmpf oeq, %57, %60 : vector<1x512xf32>
    %62 = arith.andi %59, %61 : vector<1x512xi1>
    %63 = arith.extui %62 : vector<1x512xi1> to vector<1x512xi32>
    %64 = arith.sitofp %63 : vector<1x512xi32> to vector<1x512xf32>
    %c0_16 = arith.constant 0 : index
    %c0_17 = arith.constant 0 : index
    %65 = vector.load %arg5[%c0_16, %c0_17] : memref<1x512xf32, #tpu.memory_space<vmem>>, vector<1x512xf32>
    tpu.vector_store %arg5[%c0_16, %c0_17], %64 {strides = array<i32>} : memref<1x512xf32, #tpu.memory_space<vmem>>, vector<1x512xf32>,
    %cst_18 = arith.constant dense<0.000000e+00> : vector<1xf32>
    %66 = vector.multi_reduction <add>, %64, %cst_18 [1] : vector<1x512xf32> to vector<1xf32>
    %67 = vector.shape_cast %66 : vector<1xf32> to vector<1x1xf32>
    %cst_19 = arith.constant 6.400000e+01 : f32
    %68 = vector.broadcast %cst_19 : f32 to vector<1x1xf32>
    %69 = arith.minimumf %67, %68 : vector<1x1xf32>
    %70 = tpu.iota {dimensions = array<i32: 1>} : vector<1x128xi32>
    %71 = arith.sitofp %70 : vector<1x128xi32> to vector<1x128xf32>
    %c0_20 = arith.constant 0 : index
    %c0_21 = arith.constant 0 : index
    %c0_22 = arith.constant 0 : index
    %72 = vector.load %arg3[%c0_20, %c0_21, %c0_22] : memref<1x1x128xf32, #tpu.memory_space<vmem>>, vector<1x1x128xf32>
    %73 = vector.shape_cast %72 : vector<1x1x128xf32> to vector<1x128xf32>
    %74 = vector.broadcast %69 : vector<1x1xf32> to vector<1x128xf32>
    %75 = arith.mulf %73, %74 : vector<1x128xf32>
    %76 = math.floor %75 : vector<1x128xf32>
    %cst_23 = arith.constant 1.000000e+00 : f32
    %77 = vector.broadcast %cst_23 : f32 to vector<1x1xf32>
    %78 = arith.subf %69, %77 : vector<1x1xf32>
    %cst_24 = arith.constant 0.000000e+00 : f32
    %79 = vector.broadcast %cst_24 : f32 to vector<1x1xf32>
    %80 = arith.maximumf %78, %79 : vector<1x1xf32>
    %cst_25 = arith.constant 0.000000e+00 : f32
    %81 = vector.broadcast %cst_25 : f32 to vector<1x128xf32>
    %82 = arith.maximumf %81, %76 : vector<1x128xf32>
    %83 = vector.broadcast %80 : vector<1x1xf32> to vector<1x128xf32>
    %84 = arith.minimumf %83, %82 : vector<1x128xf32>
    %85 = vector.broadcast %69 : vector<1x1xf32> to vector<1x128xf32>
    %86 = arith.cmpf olt, %71, %85 : vector<1x128xf32>
    %87 = arith.select %86, %71, %84 : vector<1x128xi1>, vector<1x128xf32>
    %cst_26 = arith.constant 0.000000e+00 : f32
    %88 = vector.broadcast %cst_26 : f32 to vector<1x1xf32>
    %cst_27 = arith.constant 0.000000e+00 : f32
    %89 = vector.broadcast %cst_27 : f32 to vector<3x128xf32>
    %c0_i32_28 = arith.constant 0 : i32
    %c256_i32_29 = arith.constant 256 : i32
    %90 = arith.muli %c0_i32_28, %c256_i32_29 : i32
    %91 = tpu.assume_multiple %90, 256 : i32
    %c0_30 = arith.constant 0 : index
    %92 = arith.index_cast %91 : i32 to index
    %93 = vector.load %arg5[%c0_30, %92] : memref<1x512xf32, #tpu.memory_space<vmem>>, vector<1x256xf32>
    %cst_31 = arith.constant 0.000000e+00 : f32
    %94 = vector.shape_cast %93 : vector<1x256xf32> to vector<1x256xf32>
    %95 = vector.broadcast %94 : vector<1x256xf32> to vector<256x256xf32>
    %96 = vector.broadcast %cst_31 : f32 to vector<256x256xf32>
    %97 = arith.select %4, %95, %96 : vector<256x256xi1>, vector<256x256xf32>
    %cst_32 = arith.constant dense<0.000000e+00> : vector<256xf32>
    %98 = vector.multi_reduction <add>, %97, %cst_32 [1] : vector<256x256xf32> to vector<256xf32>
    %99 = vector.shape_cast %98 : vector<256xf32> to vector<256x1xf32>
    %cst_33 = arith.constant 0.000000e+00 : f32
    %100 = vector.shape_cast %93 : vector<1x256xf32> to vector<1x256xf32>
    %101 = vector.broadcast %100 : vector<1x256xf32> to vector<256x256xf32>
    %102 = vector.broadcast %cst_33 : f32 to vector<256x256xf32>
    %103 = arith.select %5, %101, %102 : vector<256x256xi1>, vector<256x256xf32>
    %cst_34 = arith.constant dense<0.000000e+00> : vector<256xf32>
    %104 = vector.multi_reduction <add>, %103, %cst_34 [1] : vector<256x256xf32> to vector<256xf32>
    %105 = vector.shape_cast %104 : vector<256xf32> to vector<256x1xf32>
    %106 = vector.broadcast %88 : vector<1x1xf32> to vector<256x1xf32>
    %107 = arith.addf %106, %105 : vector<256x1xf32>
    %cst_35 = arith.constant 5.000000e-01 : f32
    %108 = vector.broadcast %cst_35 : f32 to vector<256x1xf32>
    %109 = arith.cmpf ogt, %99, %108 : vector<256x1xf32>
    %cst_36 = arith.constant -1.000000e+00 : f32
    %110 = vector.broadcast %cst_36 : f32 to vector<256x1xf32>
    %111 = arith.select %109, %107, %110 : vector<256x1xi1>, vector<256x1xf32>
    %112 = vector.broadcast %111 : vector<256x1xf32> to vector<256x128xf32>
    %113 = vector.broadcast %87 : vector<1x128xf32> to vector<256x128xf32>
    %114 = arith.cmpf oeq, %112, %113 : vector<256x128xf32>
    %115 = arith.extui %114 : vector<256x128xi1> to vector<256x128xi32>
    %116 = arith.sitofp %115 : vector<256x128xi32> to vector<256x128xf32>
    %c0_37 = arith.constant 0 : index
    %c0_38 = arith.constant 0 : index
    %117 = arith.index_cast %91 : i32 to index
    %118 = vector.load %arg2[%c0_37, %c0_38, %117] : memref<1x3x512xf32, #tpu.memory_space<vmem>>, vector<1x3x256xf32>
    %119 = vector.shape_cast %118 : vector<1x3x256xf32> to vector<3x256xf32>
    %cst_39 = arith.constant dense<0.000000e+00> : vector<3x128xf32>
    %120 = tpu.matmul %119, %116, %cst_39 {dimension_numbers = #tpu.dot_dimension_numbers<[1], [0], [0], [1], [0, 0, 1, 1], [], []>} : vector<3x256xf32>, vector<256x128xf32>, vector<3x128xf32> -> vector<3x128xf32>
    %121 = arith.addf %89, %120 : vector<3x128xf32>
    %cst_40 = arith.constant dense<0.000000e+00> : vector<1xf32>
    %122 = vector.multi_reduction <add>, %93, %cst_40 [1] : vector<1x256xf32> to vector<1xf32>
    %123 = vector.shape_cast %122 : vector<1xf32> to vector<1x1xf32>
    %124 = arith.addf %88, %123 : vector<1x1xf32>
    %c1_i32_41 = arith.constant 1 : i32
    %c256_i32_42 = arith.constant 256 : i32
    %125 = arith.muli %c1_i32_41, %c256_i32_42 : i32
    %126 = tpu.assume_multiple %125, 256 : i32
    %c0_43 = arith.constant 0 : index
    %127 = arith.index_cast %126 : i32 to index
    %128 = vector.load %arg5[%c0_43, %127] : memref<1x512xf32, #tpu.memory_space<vmem>>, vector<1x256xf32>
    %cst_44 = arith.constant 0.000000e+00 : f32
    %129 = vector.shape_cast %128 : vector<1x256xf32> to vector<1x256xf32>
    %130 = vector.broadcast %129 : vector<1x256xf32> to vector<256x256xf32>
    %131 = vector.broadcast %cst_44 : f32 to vector<256x256xf32>
    %132 = arith.select %4, %130, %131 : vector<256x256xi1>, vector<256x256xf32>
    %cst_45 = arith.constant dense<0.000000e+00> : vector<256xf32>
    %133 = vector.multi_reduction <add>, %132, %cst_45 [1] : vector<256x256xf32> to vector<256xf32>
    %134 = vector.shape_cast %133 : vector<256xf32> to vector<256x1xf32>
    %cst_46 = arith.constant 0.000000e+00 : f32
    %135 = vector.shape_cast %128 : vector<1x256xf32> to vector<1x256xf32>
    %136 = vector.broadcast %135 : vector<1x256xf32> to vector<256x256xf32>
    %137 = vector.broadcast %cst_46 : f32 to vector<256x256xf32>
    %138 = arith.select %5, %136, %137 : vector<256x256xi1>, vector<256x256xf32>
    %cst_47 = arith.constant dense<0.000000e+00> : vector<256xf32>
    %139 = vector.multi_reduction <add>, %138, %cst_47 [1] : vector<256x256xf32> to vector<256xf32>
    %140 = vector.shape_cast %139 : vector<256xf32> to vector<256x1xf32>
    %141 = vector.broadcast %124 : vector<1x1xf32> to vector<256x1xf32>
    %142 = arith.addf %141, %140 : vector<256x1xf32>
    %cst_48 = arith.constant 5.000000e-01 : f32
    %143 = vector.broadcast %cst_48 : f32 to vector<256x1xf32>
    %144 = arith.cmpf ogt, %134, %143 : vector<256x1xf32>
    %cst_49 = arith.constant -1.000000e+00 : f32
    %145 = vector.broadcast %cst_49 : f32 to vector<256x1xf32>
    %146 = arith.select %144, %142, %145 : vector<256x1xi1>, vector<256x1xf32>
    %147 = vector.broadcast %146 : vector<256x1xf32> to vector<256x128xf32>
    %148 = vector.broadcast %87 : vector<1x128xf32> to vector<256x128xf32>
    %149 = arith.cmpf oeq, %147, %148 : vector<256x128xf32>
    %150 = arith.extui %149 : vector<256x128xi1> to vector<256x128xi32>
    %151 = arith.sitofp %150 : vector<256x128xi32> to vector<256x128xf32>
    %c0_50 = arith.constant 0 : index
    %c0_51 = arith.constant 0 : index
    %152 = arith.index_cast %126 : i32 to index
    %153 = vector.load %arg2[%c0_50, %c0_51, %152] : memref<1x3x512xf32, #tpu.memory_space<vmem>>, vector<1x3x256xf32>
    %154 = vector.shape_cast %153 : vector<1x3x256xf32> to vector<3x256xf32>
    %cst_52 = arith.constant dense<0.000000e+00> : vector<3x128xf32>
    %155 = tpu.matmul %154, %151, %cst_52 {dimension_numbers = #tpu.dot_dimension_numbers<[1], [0], [0], [1], [0, 0, 1, 1], [], []>} : vector<3x256xf32>, vector<256x128xf32>, vector<3x128xf32> -> vector<3x128xf32>
    %156 = arith.addf %121, %155 : vector<3x128xf32>
    %cst_53 = arith.constant dense<0.000000e+00> : vector<1xf32>
    %157 = vector.multi_reduction <add>, %128, %cst_53 [1] : vector<1x256xf32> to vector<1xf32>
    %158 = vector.shape_cast %157 : vector<1xf32> to vector<1x1xf32>
    %159 = arith.addf %124, %158 : vector<1x1xf32>
    %c2_i32_54 = arith.constant 2 : i32
    %c0_55 = arith.constant 0 : index
    %c0_56 = arith.constant 0 : index
    %c0_57 = arith.constant 0 : index
    %160 = vector.load %arg4[%c0_55, %c0_56, %c0_57] : memref<1x3x128xf32, #tpu.memory_space<vmem>>, vector<1x3x128xf32>
    %161 = vector.shape_cast %160 : vector<1x3x128xf32> to vector<3x128xf32>
    %162 = vector.shape_cast %156 : vector<3x128xf32> to vector<1x3x128xf32>
    tpu.vector_store %arg4[%c0_55, %c0_56, %c0_57], %162 {strides = array<i32>} : memref<1x3x128xf32, #tpu.memory_space<vmem>>, vector<1x3x128xf32>,
    return
  }
  func.func @transform_0(%arg0: i32) -> (i32, i32, i32) {
    %c0_i32 = arith.constant 0 : i32
    %c0_i32_0 = arith.constant 0 : i32
    %c0_i32_1 = arith.constant 0 : i32
    return %arg0, %c0_i32, %c0_i32_0 : i32, i32, i32
  }
  func.func @transform_1(%arg0: i32) -> (i32, i32, i32) {
    %c0_i32 = arith.constant 0 : i32
    %c0_i32_0 = arith.constant 0 : i32
    %c0_i32_1 = arith.constant 0 : i32
    return %arg0, %c0_i32, %c0_i32_0 : i32, i32, i32
  }
  func.func @transform_2(%arg0: i32) -> (i32, i32, i32) {
    %c0_i32 = arith.constant 0 : i32
    %c0_i32_0 = arith.constant 0 : i32
    %c0_i32_1 = arith.constant 0 : i32
    return %arg0, %c0_i32, %c0_i32_0 : i32, i32, i32
  }
  func.func @transform_3(%arg0: i32) -> (i32, i32, i32) {
    %c0_i32 = arith.constant 0 : i32
    %c0_i32_0 = arith.constant 0 : i32
    %c0_i32_1 = arith.constant 0 : i32
    return %arg0, %c0_i32, %c0_i32_0 : i32, i32, i32
  }
}

</mosaic_0001>

<llo_original>
// kernel: tpu_custom_call.1
$region0: #{tpu_custom_call.1}
  #allocation0 [shape = 'u32[]', space=smem, size = 0x4, offset = 0x4, fixed_abs, tag = 'smem constant byte address 0x4 - core index']
  #allocation1 [shape = 'u32[144,128]{1,0:T(1,128)}', space=vmem, size = 0x12000, scoped, tag = 'internal scratch']
  #allocation2 [shape = 'f32[1,512]{1,0:T(1,128)}', space=vmem, size = 0x800, scoped, tag = 'scratch operand']
  %s0 = inlined_call_operand.vmem [shape: s32[2,1,512], index: 0, kind: input, shape index: {}]
  %s1 = inlined_call_operand.vmem [shape: f32[2,3,512], index: 1, kind: input, shape index: {}]
  %s2 = inlined_call_operand.vmem [shape: f32[2,1,128], index: 2, kind: input, shape index: {}]
  %s3 = inlined_call_operand.vmem [shape: f32[2,3,128], index: 3, kind: output, shape index: {}]
  %s4 = sld [smem:[#allocation0]]
  $region45: #{tpu_custom_call.1} parent=0
    _
  %s6 = ssub.s32 1, %s4
  %s7 = scalar_select 0, %s6, %s4
  loop: start=0, step=1, limit=4
  $region2: #{tpu_custom_call.1} parent=0 // loop_pre_header
    _
  $region3: #{tpu_custom_call.1} parent=0 // loop_header
    %s9 = sphi 0, %s13
    %p10 = scmp.ge.s32.totalorder %s9, 4
    %s19 = sphi 0, %s21
    %s22 = sphi 0, %s19
    %s23 = sphi 0, %s22
    %s39 = sphi 0, %s23
    %s45 = sphi 0, %s47
    %s48 = sphi 0, %s45
    %s49 = sphi 0, %s48
    %s65 = sphi 0, %s49
    %s71 = sphi 0, %s73
    %s74 = sphi 0, %s71
    %s75 = sphi 0, %s74
    %s91 = sphi 0, %s75
    %s97 = sphi 0, %s99
    %s100 = sphi 0, %s97
    %s101 = sphi 0, %s100
    %s117 = sphi 0, %s101
  $region4: #{tpu_custom_call.1} parent=0 // loop_header_branch
    %12 = sbr.rel (%p10) target = $region8
  $region5: #{tpu_custom_call.1} parent=0 // loop_body
    %s14 = ssub.s32 %s9, 1
    %s15 = ssub.s32 %s9, 2
    %s16 = sadd.s32 %s9, 1
    %s17 = ssub.s32 %s9, %s16
    %p18 = scmp.eq.s32.totalorder %s17, 0
    %s20 = sadd.s32 %s19, 1
    %s21 = scalar_select %p18, %s19, %s20
    %p24 = pneg %p18
    %p25 = scmp.eq.s32.totalorder %s9, 1
    %p26 = por %p24, %p25
    %p27 = scmp.ne.s32.totalorder %s19, %s22
    %p28 = scmp.eq.s32.totalorder %s9, 0
    %p29 = por %p27, %p28
    %p30 = scmp.ne.s32.totalorder %s19, %s22
    %p31 = scmp.eq.s32.totalorder %s14, 1
    %p32 = por %p30, %p31
    %p33 = scmp.ne.s32.totalorder %s22, %s23
    %p34 = scmp.eq.s32.totalorder %s14, 0
    %p35 = por %p33, %p34
    %p36 = scmp.ne.s32.totalorder %s22, %s23
    %p37 = scmp.eq.s32.totalorder %s15, 1
    %p38 = por %p36, %p37
    %p40 = scmp.ne.s32.totalorder %s23, %s39
    %p41 = scmp.eq.s32.totalorder %s15, 0
    %p42 = por %p40, %p41
    %s43 = ssub.s32 %s9, %s16
    %p44 = scmp.eq.s32.totalorder %s43, 0
    %s46 = sadd.s32 %s45, 1
    %s47 = scalar_select %p44, %s45, %s46
    %p50 = pneg %p44
    %p51 = scmp.eq.s32.totalorder %s9, 1
    %p52 = por %p50, %p51
    %p53 = scmp.ne.s32.totalorder %s45, %s48
    %p54 = scmp.eq.s32.totalorder %s9, 0
    %p55 = por %p53, %p54
    %p56 = scmp.ne.s32.totalorder %s45, %s48
    %p57 = scmp.eq.s32.totalorder %s14, 1
    %p58 = por %p56, %p57
    %p59 = scmp.ne.s32.totalorder %s48, %s49
    %p60 = scmp.eq.s32.totalorder %s14, 0
    %p61 = por %p59, %p60
    %p62 = scmp.ne.s32.totalorder %s48, %s49
    %p63 = scmp.eq.s32.totalorder %s15, 1
    %p64 = por %p62, %p63
    %p66 = scmp.ne.s32.totalorder %s49, %s65
    %p67 = scmp.eq.s32.totalorder %s15, 0
    %p68 = por %p66, %p67
    %s69 = ssub.s32 %s9, %s16
    %p70 = scmp.eq.s32.totalorder %s69, 0
    %s72 = sadd.s32 %s71, 1
    %s73 = scalar_select %p70, %s71, %s72
    %p76 = pneg %p70
    %p77 = scmp.eq.s32.totalorder %s9, 1
    %p78 = por %p76, %p77
    %p79 = scmp.ne.s32.totalorder %s71, %s74
    %p80 = scmp.eq.s32.totalorder %s9, 0
    %p81 = por %p79, %p80
    %p82 = scmp.ne.s32.totalorder %s71, %s74
    %p83 = scmp.eq.s32.totalorder %s14, 1
    %p84 = por %p82, %p83
    %p85 = scmp.ne.s32.totalorder %s74, %s75
    %p86 = scmp.eq.s32.totalorder %s14, 0
    %p87 = por %p85, %p86
    %p88 = scmp.ne.s32.totalorder %s74, %s75
    %p89 = scmp.eq.s32.totalorder %s15, 1
    %p90 = por %p88, %p89
    %p92 = scmp.ne.s32.totalorder %s75, %s91
    %p93 = scmp.eq.s32.totalorder %s15, 0
    %p94 = por %p92, %p93
    %s95 = ssub.s32 %s9, %s16
    %p96 = scmp.eq.s32.totalorder %s95, 0
    %s98 = sadd.s32 %s97, 1
    %s99 = scalar_select %p96, %s97, %s98
    %p102 = pneg %p96
    %p103 = scmp.eq.s32.totalorder %s9, 1
    %p104 = por %p102, %p103
    %p105 = scmp.ne.s32.totalorder %s97, %s100
    %p106 = scmp.eq.s32.totalorder %s9, 0
    %p107 = por %p105, %p106
    %p108 = scmp.ne.s32.totalorder %s97, %s100
    %p109 = scmp.eq.s32.totalorder %s14, 1
    %p110 = por %p108, %p109
    %p111 = scmp.ne.s32.totalorder %s100, %s101
    %p112 = scmp.eq.s32.totalorder %s14, 0
    %p113 = por %p111, %p112
    %p114 = scmp.ne.s32.totalorder %s100, %s101
    %p115 = scmp.eq.s32.totalorder %s15, 1
    %p116 = por %p114, %p115
    %p118 = scmp.ne.s32.totalorder %s101, %s117
    %p119 = scmp.eq.s32.totalorder %s15, 0
    %p120 = por %p118, %p119
    %p121 = scmp.le.s32.totalorder 1, %s9
    %p122 = scmp.lt.s32.totalorder %s9, 3
    %p123 = pnand %p121, %p122
    %p124 = pneg %p123
    // Predicated region
    $region9: #{tpu_custom_call.1} parent=5 // pred_check
      _
    $region10: #{tpu_custom_call.1} parent=5 // pred_check_branch
      %126 = sbr.rel (%p123) target = $region12
    $region11: #{tpu_custom_call.1} parent=5 // pred_region
      %s127 = ssub.s32 %s9, 1
    $region12: #{tpu_custom_call.1} parent=5 // pred_fallthru
      _
    %p128 = scmp.lt.s32.totalorder %s9, 2
    // Predicated region
    $region13: #{tpu_custom_call.1} parent=5 // pred_check
      %p129 = pneg %p128
    $region14: #{tpu_custom_call.1} parent=5 // pred_check_branch
      %131 = sbr.rel (%p129) target = $region16
    $region15: #{tpu_custom_call.1} parent=5 // pred_region
      // Predicated region
      $region17: #{tpu_custom_call.1} parent=15 // pred_check
        %p132 = pneg %p29
      $region18: #{tpu_custom_call.1} parent=15 // pred_check_branch
        %134 = sbr.rel (%p132) target = $region20
      $region19: #{tpu_custom_call.1} parent=15 // pred_region
        %p135 = scmp.lt.s32.totalorder %s9, 1
        %s136 = scalar_select %p135, %s9, 1
        %s137 = smul.addr %s136, 4
        %s138 = scalar_lea.vmem %s0, %s137
      $region20: #{tpu_custom_call.1} parent=15 // pred_fallthru
        _
      // Predicated region
      $region21: #{tpu_custom_call.1} parent=15 // pred_check
        %p139 = pneg %p55
      $region22: #{tpu_custom_call.1} parent=15 // pred_check_branch
        %141 = sbr.rel (%p139) target = $region24
      $region23: #{tpu_custom_call.1} parent=15 // pred_region
        %p142 = scmp.lt.s32.totalorder %s9, 1
        %s143 = scalar_select %p142, %s9, 1
        %s144 = smul.addr %s143, 4
        %s145 = smul.addr %s144, 4
        %s146 = scalar_lea.vmem %s1, %s145
      $region24: #{tpu_custom_call.1} parent=15 // pred_fallthru
        _
      // Predicated region
      $region25: #{tpu_custom_call.1} parent=15 // pred_check
        %p147 = pneg %p81
      $region26: #{tpu_custom_call.1} parent=15 // pred_check_branch
        %149 = sbr.rel (%p147) target = $region28
      $region27: #{tpu_custom_call.1} parent=15 // pred_region
        %p150 = scmp.lt.s32.totalorder %s9, 1
        %s151 = scalar_select %p150, %s9, 1
        %s152 = scalar_lea.vmem %s2, %s151
      $region28: #{tpu_custom_call.1} parent=15 // pred_fallthru
        _
    $region16: #{tpu_custom_call.1} parent=5 // pred_fallthru
      _
    %p153 = scmp.le.s32.totalorder 1, %s9
    %p154 = scmp.lt.s32.totalorder %s9, 3
    %p155 = pnand %p153, %p154
    %p156 = pneg %p155
    // Predicated region
    $region29: #{tpu_custom_call.1} parent=5 // pred_check
      _
    $region30: #{tpu_custom_call.1} parent=5 // pred_check_branch
      %158 = sbr.rel (%p155) target = $region32
    $region31: #{tpu_custom_call.1} parent=5 // pred_region
      %s159 = ssub.s32 %s9, 1
      %p160 = scmp.lt.s32.totalorder %s14, 1
      %s161 = scalar_select %p160, %s14, 1
      %s162 = smul.addr %s161, 4
      %s163 = scalar_lea.vmem %s0, %s162
      %p164 = pneg %p35
      %p165 = pneg %p32
      %p166 = scmp.lt.s32.totalorder %s14, 1
      %s167 = scalar_select %p166, %s14, 1
      %s168 = smul.addr %s167, 4
      %s169 = smul.addr %s168, 4
      %s170 = scalar_lea.vmem %s1, %s169
      %p171 = pneg %p61
      %p172 = pneg %p58
      %p173 = scmp.lt.s32.totalorder %s14, 1
      %s174 = scalar_select %p173, %s14, 1
      %s175 = scalar_lea.vmem %s2, %s174
      %p176 = pneg %p87
      %p177 = pneg %p84
      %p178 = pneg %p113
      %p179 = pneg %p110
      %p180 = scmp.lt.s32.totalorder %s14, 1
      %s181 = scalar_select %p180, %s14, 1
      %s182 = smul.addr %s181, 4
      %s183 = scalar_lea.vmem %s3, %s182
      %p184 = scmp.lt.s32.totalorder %s14, 1
      %s185 = scalar_select %p184, %s14, 1
      %s186 = smul.addr %s185, 4
      %s187 = scalar_lea.vmem %s0, %s186
      %p188 = scmp.lt.s32.totalorder %s14, 1
      %s189 = scalar_select %p188, %s14, 1
      %s190 = smul.addr %s189, 4
      %s191 = smul.addr %s190, 4
      %s192 = scalar_lea.vmem %s1, %s191
      %p193 = scmp.lt.s32.totalorder %s14, 1
      %s194 = scalar_select %p193, %s14, 1
      %s195 = scalar_lea.vmem %s2, %s194
      %p196 = scmp.lt.s32.totalorder %s14, 1
      %s197 = scalar_select %p196, %s14, 1
      %s198 = smul.addr %s197, 4
      %s199 = scalar_lea.vmem %s3, %s198
      %v200 = vlaneseq
      %v201 = vand.u32 %v200, 127
      %v202 = vadd.s32 %v201, 128
      %v203 = vadd.s32 %v201, 256
      %v204 = vadd.s32 %v201, 384
      %v205 = vlaneseq
      %v206 = vshrl.u32 %v205, 7
      %v207 = vadd.s32 %v206, 8
      %v208 = vadd.s32 %v206, 16
      %v209 = vadd.s32 %v206, 24
      %v210 = vadd.s32 %v206, 32
      %v211 = vadd.s32 %v206, 40
      %v212 = vadd.s32 %v206, 48
      %v213 = vadd.s32 %v206, 56
      %v214 = vadd.s32 %v206, 64
      %v215 = vadd.s32 %v206, 72
      %v216 = vadd.s32 %v206, 80
      %v217 = vadd.s32 %v206, 88
      %v218 = vadd.s32 %v206, 96
      %v219 = vadd.s32 %v206, 104
      %v220 = vadd.s32 %v206, 112
      %v221 = vadd.s32 %v206, 120
      %v222 = vadd.s32 %v206, 128
      %v223 = vadd.s32 %v206, 136
      %v224 = vadd.s32 %v206, 144
      %v225 = vadd.s32 %v206, 152
      %v226 = vadd.s32 %v206, 160
      %v227 = vadd.s32 %v206, 168
      %v228 = vadd.s32 %v206, 176
      %v229 = vadd.s32 %v206, 184
      %v230 = vadd.s32 %v206, 192
      %v231 = vadd.s32 %v206, 200
      %v232 = vadd.s32 %v206, 208
      %v233 = vadd.s32 %v206, 216
      %v234 = vadd.s32 %v206, 224
      %v235 = vadd.s32 %v206, 232
      %v236 = vadd.s32 %v206, 240
      %v237 = vadd.s32 %v206, 248
      %vm238 = vcmp.eq.s32.totalorder %v206, %v201
      %vm239 = vcmp.eq.s32.totalorder %v206, %v202
      %vm240 = vcmp.eq.s32.totalorder %v207, %v201
      %vm241 = vcmp.eq.s32.totalorder %v207, %v202
      %vm242 = vcmp.eq.s32.totalorder %v208, %v201
      %vm243 = vcmp.eq.s32.totalorder %v208, %v202
      %vm244 = vcmp.eq.s32.totalorder %v209, %v201
      %vm245 = vcmp.eq.s32.totalorder %v209, %v202
      %vm246 = vcmp.eq.s32.totalorder %v210, %v201
      %vm247 = vcmp.eq.s32.totalorder %v210, %v202
      %vm248 = vcmp.eq.s32.totalorder %v211, %v201
      %vm249 = vcmp.eq.s32.totalorder %v211, %v202
      %vm250 = vcmp.eq.s32.totalorder %v212, %v201
      %vm251 = vcmp.eq.s32.totalorder %v212, %v202
      %vm252 = vcmp.eq.s32.totalorder %v213, %v201
      %vm253 = vcmp.eq.s32.totalorder %v213, %v202
      %vm254 = vcmp.eq.s32.totalorder %v214, %v201
      %vm255 = vcmp.eq.s32.totalorder %v214, %v202
      %vm256 = vcmp.eq.s32.totalorder %v215, %v201
      %vm257 = vcmp.eq.s32.totalorder %v215, %v202
      %vm258 = vcmp.eq.s32.totalorder %v216, %v201
      %vm259 = vcmp.eq.s32.totalorder %v216, %v202
      %vm260 = vcmp.eq.s32.totalorder %v217, %v201
      %vm261 = vcmp.eq.s32.totalorder %v217, %v202
      %vm262 = vcmp.eq.s32.totalorder %v218, %v201
      %vm263 = vcmp.eq.s32.totalorder %v218, %v202
      %vm264 = vcmp.eq.s32.totalorder %v219, %v201
      %vm265 = vcmp.eq.s32.totalorder %v219, %v202
      %vm266 = vcmp.eq.s32.totalorder %v220, %v201
      %vm267 = vcmp.eq.s32.totalorder %v220, %v202
      %vm268 = vcmp.eq.s32.totalorder %v221, %v201
      %vm269 = vcmp.eq.s32.totalorder %v221, %v202
      %vm270 = vcmp.eq.s32.totalorder %v222, %v201
      %vm271 = vcmp.eq.s32.totalorder %v222, %v202
      %vm272 = vcmp.eq.s32.totalorder %v223, %v201
      %vm273 = vcmp.eq.s32.totalorder %v223, %v202
      %vm274 = vcmp.eq.s32.totalorder %v224, %v201
      %vm275 = vcmp.eq.s32.totalorder %v224, %v202
      %vm276 = vcmp.eq.s32.totalorder %v225, %v201
      %vm277 = vcmp.eq.s32.totalorder %v225, %v202
      %vm278 = vcmp.eq.s32.totalorder %v226, %v201
      %vm279 = vcmp.eq.s32.totalorder %v226, %v202
      %vm280 = vcmp.eq.s32.totalorder %v227, %v201
      %vm281 = vcmp.eq.s32.totalorder %v227, %v202
      %vm282 = vcmp.eq.s32.totalorder %v228, %v201
      %vm283 = vcmp.eq.s32.totalorder %v228, %v202
      %vm284 = vcmp.eq.s32.totalorder %v229, %v201
      %vm285 = vcmp.eq.s32.totalorder %v229, %v202
      %vm286 = vcmp.eq.s32.totalorder %v230, %v201
      %vm287 = vcmp.eq.s32.totalorder %v230, %v202
      %vm288 = vcmp.eq.s32.totalorder %v231, %v201
      %vm289 = vcmp.eq.s32.totalorder %v231, %v202
      %vm290 = vcmp.eq.s32.totalorder %v232, %v201
      %vm291 = vcmp.eq.s32.totalorder %v232, %v202
      %vm292 = vcmp.eq.s32.totalorder %v233, %v201
      %vm293 = vcmp.eq.s32.totalorder %v233, %v202
      %vm294 = vcmp.eq.s32.totalorder %v234, %v201
      %vm295 = vcmp.eq.s32.totalorder %v234, %v202
      %vm296 = vcmp.eq.s32.totalorder %v235, %v201
      %vm297 = vcmp.eq.s32.totalorder %v235, %v202
      %vm298 = vcmp.eq.s32.totalorder %v236, %v201
      %vm299 = vcmp.eq.s32.totalorder %v236, %v202
      %vm300 = vcmp.eq.s32.totalorder %v237, %v201
      %vm301 = vcmp.eq.s32.totalorder %v237, %v202
      %vm302 = vcmp.lt.s32.totalorder %v201, %v206
      %vm303 = vcmp.lt.s32.totalorder %v202, %v206
      %vm304 = vcmp.lt.s32.totalorder %v201, %v207
      %vm305 = vcmp.lt.s32.totalorder %v202, %v207
      %vm306 = vcmp.lt.s32.totalorder %v201, %v208
      %vm307 = vcmp.lt.s32.totalorder %v202, %v208
      %vm308 = vcmp.lt.s32.totalorder %v201, %v209
      %vm309 = vcmp.lt.s32.totalorder %v202, %v209
      %vm310 = vcmp.lt.s32.totalorder %v201, %v210
      %vm311 = vcmp.lt.s32.totalorder %v202, %v210
      %vm312 = vcmp.lt.s32.totalorder %v201, %v211
      %vm313 = vcmp.lt.s32.totalorder %v202, %v211
      %vm314 = vcmp.lt.s32.totalorder %v201, %v212
      %vm315 = vcmp.lt.s32.totalorder %v202, %v212
      %vm316 = vcmp.lt.s32.totalorder %v201, %v213
      %vm317 = vcmp.lt.s32.totalorder %v202, %v213
      %vm318 = vcmp.lt.s32.totalorder %v201, %v214
      %vm319 = vcmp.lt.s32.totalorder %v202, %v214
      %vm320 = vcmp.lt.s32.totalorder %v201, %v215
      %vm321 = vcmp.lt.s32.totalorder %v202, %v215
      %vm322 = vcmp.lt.s32.totalorder %v201, %v216
      %vm323 = vcmp.lt.s32.totalorder %v202, %v216
      %vm324 = vcmp.lt.s32.totalorder %v201, %v217
      %vm325 = vcmp.lt.s32.totalorder %v202, %v217
      %vm326 = vcmp.lt.s32.totalorder %v201, %v218
      %vm327 = vcmp.lt.s32.totalorder %v202, %v218
      %vm328 = vcmp.lt.s32.totalorder %v201, %v219
      %vm329 = vcmp.lt.s32.totalorder %v202, %v219
      %vm330 = vcmp.lt.s32.totalorder %v201, %v220
      %vm331 = vcmp.lt.s32.totalorder %v202, %v220
      %vm332 = vcmp.lt.s32.totalorder %v201, %v221
      %vm333 = vcmp.lt.s32.totalorder %v202, %v221
      %vm334 = vcmp.lt.s32.totalorder %v201, %v222
      %vm335 = vcmp.lt.s32.totalorder %v202, %v222
      %vm336 = vcmp.lt.s32.totalorder %v201, %v223
      %vm337 = vcmp.lt.s32.totalorder %v202, %v223
      %vm338 = vcmp.lt.s32.totalorder %v201, %v224
      %vm339 = vcmp.lt.s32.totalorder %v202, %v224
      %vm340 = vcmp.lt.s32.totalorder %v201, %v225
      %vm341 = vcmp.lt.s32.totalorder %v202, %v225
      %vm342 = vcmp.lt.s32.totalorder %v201, %v226
      %vm343 = vcmp.lt.s32.totalorder %v202, %v226
      %vm344 = vcmp.lt.s32.totalorder %v201, %v227
      %vm345 = vcmp.lt.s32.totalorder %v202, %v227
      %vm346 = vcmp.lt.s32.totalorder %v201, %v228
      %vm347 = vcmp.lt.s32.totalorder %v202, %v228
      %vm348 = vcmp.lt.s32.totalorder %v201, %v229
      %vm349 = vcmp.lt.s32.totalorder %v202, %v229
      %vm350 = vcmp.lt.s32.totalorder %v201, %v230
      %vm351 = vcmp.lt.s32.totalorder %v202, %v230
      %vm352 = vcmp.lt.s32.totalorder %v201, %v231
      %vm353 = vcmp.lt.s32.totalorder %v202, %v231
      %vm354 = vcmp.lt.s32.totalorder %v201, %v232
      %vm355 = vcmp.lt.s32.totalorder %v202, %v232
      %vm356 = vcmp.lt.s32.totalorder %v201, %v233
      %vm357 = vcmp.lt.s32.totalorder %v202, %v233
      %vm358 = vcmp.lt.s32.totalorder %v201, %v234
      %vm359 = vcmp.lt.s32.totalorder %v202, %v234
      %vm360 = vcmp.lt.s32.totalorder %v201, %v235
      %vm361 = vcmp.lt.s32.totalorder %v202, %v235
      %vm362 = vcmp.lt.s32.totalorder %v201, %v236
      %vm363 = vcmp.lt.s32.totalorder %v202, %v236
      %vm364 = vcmp.lt.s32.totalorder %v201, %v237
      %vm365 = vcmp.lt.s32.totalorder %v202, %v237
      %v366 = vld [vmem:[%s187] sm:$0xf]
      %v367 = vld [vmem:[%s187] sm:$0x3]
      %v368 = vlaneseq
      %v369 = vshrl.u32 %v368, 7
      %v370 = vsub.s32 0, %v369
      %v371 = vrot.slane %v367, %v370
      %v372 = vlaneseq
      %v373 = vshrl.u32 %v372, 7
      %v374 = vsub.s32 1, %v373
      %v375 = vrot.slane %v367, %v374
      %v376 = vsel %vm238, %v371, 0
      %v377 = vsel %vm239, %v375, 0
      %v378 = vsel %vm240, %v371, 0
      %v379 = vsel %vm241, %v375, 0
      %v380 = vsel %vm242, %v371, 0
      %v381 = vsel %vm243, %v375, 0
      %v382 = vsel %vm244, %v371, 0
      %v383 = vsel %vm245, %v375, 0
      %v384 = vsel %vm246, %v371, 0
      %v385 = vsel %vm247, %v375, 0
      %v386 = vsel %vm248, %v371, 0
      %v387 = vsel %vm249, %v375, 0
      %v388 = vsel %vm250, %v371, 0
      %v389 = vsel %vm251, %v375, 0
      %v390 = vsel %vm252, %v371, 0
      %v391 = vsel %vm253, %v375, 0
      %v392 = vsel %vm254, %v371, 0
      %v393 = vsel %vm255, %v375, 0
      %v394 = vsel %vm256, %v371, 0
      %v395 = vsel %vm257, %v375, 0
      %v396 = vsel %vm258, %v371, 0
      %v397 = vsel %vm259, %v375, 0
      %v398 = vsel %vm260, %v371, 0
      %v399 = vsel %vm261, %v375, 0
      %v400 = vsel %vm262, %v371, 0
      %v401 = vsel %vm263, %v375, 0
      %v402 = vsel %vm264, %v371, 0
      %v403 = vsel %vm265, %v375, 0
      %v404 = vsel %vm266, %v371, 0
      %v405 = vsel %vm267, %v375, 0
      %v406 = vsel %vm268, %v371, 0
      %v407 = vsel %vm269, %v375, 0
      %v408 = vsel %vm270, %v371, 0
      %v409 = vsel %vm271, %v375, 0
      %v410 = vsel %vm272, %v371, 0
      %v411 = vsel %vm273, %v375, 0
      %v412 = vsel %vm274, %v371, 0
      %v413 = vsel %vm275, %v375, 0
      %v414 = vsel %vm276, %v371, 0
      %v415 = vsel %vm277, %v375, 0
      %v416 = vsel %vm278, %v371, 0
      %v417 = vsel %vm279, %v375, 0
      %v418 = vsel %vm280, %v371, 0
      %v419 = vsel %vm281, %v375, 0
      %v420 = vsel %vm282, %v371, 0
      %v421 = vsel %vm283, %v375, 0
      %v422 = vsel %vm284, %v371, 0
      %v423 = vsel %vm285, %v375, 0
      %v424 = vsel %vm286, %v371, 0
      %v425 = vsel %vm287, %v375, 0
      %v426 = vsel %vm288, %v371, 0
      %v427 = vsel %vm289, %v375, 0
      %v428 = vsel %vm290, %v371, 0
      %v429 = vsel %vm291, %v375, 0
      %v430 = vsel %vm292, %v371, 0
      %v431 = vsel %vm293, %v375, 0
      %v432 = vsel %vm294, %v371, 0
      %v433 = vsel %vm295, %v375, 0
      %v434 = vsel %vm296, %v371, 0
      %v435 = vsel %vm297, %v375, 0
      %v436 = vsel %vm298, %v371, 0
      %v437 = vsel %vm299, %v375, 0
      %v438 = vsel %vm300, %v371, 0
      %v439 = vsel %vm301, %v375, 0
      %v440 = vadd.s32 %v376, %v377
      %v441 = vand.u32 %v440, 65535
      %v442 = vshrl.u32 %v440, 16
      %v443 = vcvt.s32.f32 %v441
      %v444 = vcvt.s32.f32 %v442
      %445 = vadd.xlane.f32.xlu0 %v443
      %v446 = vpop.xlane.xlu0 %445
      %447 = vadd.xlane.f32.xlu0 %v444
      %v448 = vpop.xlane.xlu0 %447
      %v449 = vcvt.f32.s32 %v446
      %v450 = vcvt.f32.s32 %v448
      %v451 = vshll.u32 %v450, 16
      %v452 = vadd.s32 %v451, %v449
      %v453 = vadd.s32 %v378, %v379
      %v454 = vand.u32 %v453, 65535
      %v455 = vshrl.u32 %v453, 16
      %v456 = vcvt.s32.f32 %v454
      %v457 = vcvt.s32.f32 %v455
      %458 = vadd.xlane.f32.xlu0 %v456
      %v459 = vpop.xlane.xlu0 %458
      %460 = vadd.xlane.f32.xlu0 %v457
      %v461 = vpop.xlane.xlu0 %460
      %v462 = vcvt.f32.s32 %v459
      %v463 = vcvt.f32.s32 %v461
      %v464 = vshll.u32 %v463, 16
      %v465 = vadd.s32 %v464, %v462
      %v466 = vadd.s32 %v380, %v381
      %v467 = vand.u32 %v466, 65535
      %v468 = vshrl.u32 %v466, 16
      %v469 = vcvt.s32.f32 %v467
      %v470 = vcvt.s32.f32 %v468
      %471 = vadd.xlane.f32.xlu0 %v469
      %v472 = vpop.xlane.xlu0 %471
      %473 = vadd.xlane.f32.xlu0 %v470
      %v474 = vpop.xlane.xlu0 %473
      %v475 = vcvt.f32.s32 %v472
      %v476 = vcvt.f32.s32 %v474
      %v477 = vshll.u32 %v476, 16
      %v478 = vadd.s32 %v477, %v475
      %v479 = vadd.s32 %v382, %v383
      %v480 = vand.u32 %v479, 65535
      %v481 = vshrl.u32 %v479, 16
      %v482 = vcvt.s32.f32 %v480
      %v483 = vcvt.s32.f32 %v481
      %484 = vadd.xlane.f32.xlu0 %v482
      %v485 = vpop.xlane.xlu0 %484
      %486 = vadd.xlane.f32.xlu0 %v483
      %v487 = vpop.xlane.xlu0 %486
      %v488 = vcvt.f32.s32 %v485
      %v489 = vcvt.f32.s32 %v487
      %v490 = vshll.u32 %v489, 16
      %v491 = vadd.s32 %v490, %v488
      %v492 = vadd.s32 %v384, %v385
      %v493 = vand.u32 %v492, 65535
      %v494 = vshrl.u32 %v492, 16
      %v495 = vcvt.s32.f32 %v493
      %v496 = vcvt.s32.f32 %v494
      %497 = vadd.xlane.f32.xlu0 %v495
      %v498 = vpop.xlane.xlu0 %497
      %499 = vadd.xlane.f32.xlu0 %v496
      %v500 = vpop.xlane.xlu0 %499
      %v501 = vcvt.f32.s32 %v498
      %v502 = vcvt.f32.s32 %v500
      %v503 = vshll.u32 %v502, 16
      %v504 = vadd.s32 %v503, %v501
      %v505 = vadd.s32 %v386, %v387
      %v506 = vand.u32 %v505, 65535
      %v507 = vshrl.u32 %v505, 16
      %v508 = vcvt.s32.f32 %v506
      %v509 = vcvt.s32.f32 %v507
      %510 = vadd.xlane.f32.xlu0 %v508
      %v511 = vpop.xlane.xlu0 %510
      %512 = vadd.xlane.f32.xlu0 %v509
      %v513 = vpop.xlane.xlu0 %512
      %v514 = vcvt.f32.s32 %v511
      %v515 = vcvt.f32.s32 %v513
      %v516 = vshll.u32 %v515, 16
      %v517 = vadd.s32 %v516, %v514
      %v518 = vadd.s32 %v388, %v389
      %v519 = vand.u32 %v518, 65535
      %v520 = vshrl.u32 %v518, 16
      %v521 = vcvt.s32.f32 %v519
      %v522 = vcvt.s32.f32 %v520
      %523 = vadd.xlane.f32.xlu0 %v521
      %v524 = vpop.xlane.xlu0 %523
      %525 = vadd.xlane.f32.xlu0 %v522
      %v526 = vpop.xlane.xlu0 %525
      %v527 = vcvt.f32.s32 %v524
      %v528 = vcvt.f32.s32 %v526
      %v529 = vshll.u32 %v528, 16
      %v530 = vadd.s32 %v529, %v527
      %v531 = vadd.s32 %v390, %v391
      %v532 = vand.u32 %v531, 65535
      %v533 = vshrl.u32 %v531, 16
      %v534 = vcvt.s32.f32 %v532
      %v535 = vcvt.s32.f32 %v533
      %536 = vadd.xlane.f32.xlu0 %v534
      %v537 = vpop.xlane.xlu0 %536
      %538 = vadd.xlane.f32.xlu0 %v535
      %v539 = vpop.xlane.xlu0 %538
      %v540 = vcvt.f32.s32 %v537
      %v541 = vcvt.f32.s32 %v539
      %v542 = vshll.u32 %v541, 16
      %v543 = vadd.s32 %v542, %v540
      %v544 = vadd.s32 %v392, %v393
      %v545 = vand.u32 %v544, 65535
      %v546 = vshrl.u32 %v544, 16
      %v547 = vcvt.s32.f32 %v545
      %v548 = vcvt.s32.f32 %v546
      %549 = vadd.xlane.f32.xlu0 %v547
      %v550 = vpop.xlane.xlu0 %549
      %551 = vadd.xlane.f32.xlu0 %v548
      %v552 = vpop.xlane.xlu0 %551
      %v553 = vcvt.f32.s32 %v550
      %v554 = vcvt.f32.s32 %v552
      %v555 = vshll.u32 %v554, 16
      %v556 = vadd.s32 %v555, %v553
      %v557 = vadd.s32 %v394, %v395
      %v558 = vand.u32 %v557, 65535
      %v559 = vshrl.u32 %v557, 16
      %v560 = vcvt.s32.f32 %v558
      %v561 = vcvt.s32.f32 %v559
      %562 = vadd.xlane.f32.xlu0 %v560
      %v563 = vpop.xlane.xlu0 %562
      %564 = vadd.xlane.f32.xlu0 %v561
      %v565 = vpop.xlane.xlu0 %564
      %v566 = vcvt.f32.s32 %v563
      %v567 = vcvt.f32.s32 %v565
      %v568 = vshll.u32 %v567, 16
      %v569 = vadd.s32 %v568, %v566
      %v570 = vadd.s32 %v396, %v397
      %v571 = vand.u32 %v570, 65535
      %v572 = vshrl.u32 %v570, 16
      %v573 = vcvt.s32.f32 %v571
      %v574 = vcvt.s32.f32 %v572
      %575 = vadd.xlane.f32.xlu0 %v573
      %v576 = vpop.xlane.xlu0 %575
      %577 = vadd.xlane.f32.xlu0 %v574
      %v578 = vpop.xlane.xlu0 %577
      %v579 = vcvt.f32.s32 %v576
      %v580 = vcvt.f32.s32 %v578
      %v581 = vshll.u32 %v580, 16
      %v582 = vadd.s32 %v581, %v579
      %v583 = vadd.s32 %v398, %v399
      %v584 = vand.u32 %v583, 65535
      %v585 = vshrl.u32 %v583, 16
      %v586 = vcvt.s32.f32 %v584
      %v587 = vcvt.s32.f32 %v585
      %588 = vadd.xlane.f32.xlu0 %v586
      %v589 = vpop.xlane.xlu0 %588
      %590 = vadd.xlane.f32.xlu0 %v587
      %v591 = vpop.xlane.xlu0 %590
      %v592 = vcvt.f32.s32 %v589
      %v593 = vcvt.f32.s32 %v591
      %v594 = vshll.u32 %v593, 16
      %v595 = vadd.s32 %v594, %v592
      %v596 = vadd.s32 %v400, %v401
      %v597 = vand.u32 %v596, 65535
      %v598 = vshrl.u32 %v596, 16
      %v599 = vcvt.s32.f32 %v597
      %v600 = vcvt.s32.f32 %v598
      %601 = vadd.xlane.f32.xlu0 %v599
      %v602 = vpop.xlane.xlu0 %601
      %603 = vadd.xlane.f32.xlu0 %v600
      %v604 = vpop.xlane.xlu0 %603
      %v605 = vcvt.f32.s32 %v602
      %v606 = vcvt.f32.s32 %v604
      %v607 = vshll.u32 %v606, 16
      %v608 = vadd.s32 %v607, %v605
      %v609 = vadd.s32 %v402, %v403
      %v610 = vand.u32 %v609, 65535
      %v611 = vshrl.u32 %v609, 16
      %v612 = vcvt.s32.f32 %v610
      %v613 = vcvt.s32.f32 %v611
      %614 = vadd.xlane.f32.xlu0 %v612
      %v615 = vpop.xlane.xlu0 %614
      %616 = vadd.xlane.f32.xlu0 %v613
      %v617 = vpop.xlane.xlu0 %616
      %v618 = vcvt.f32.s32 %v615
      %v619 = vcvt.f32.s32 %v617
      %v620 = vshll.u32 %v619, 16
      %v621 = vadd.s32 %v620, %v618
      %v622 = vadd.s32 %v404, %v405
      %v623 = vand.u32 %v622, 65535
      %v624 = vshrl.u32 %v622, 16
      %v625 = vcvt.s32.f32 %v623
      %v626 = vcvt.s32.f32 %v624
      %627 = vadd.xlane.f32.xlu0 %v625
      %v628 = vpop.xlane.xlu0 %627
      %629 = vadd.xlane.f32.xlu0 %v626
      %v630 = vpop.xlane.xlu0 %629
      %v631 = vcvt.f32.s32 %v628
      %v632 = vcvt.f32.s32 %v630
      %v633 = vshll.u32 %v632, 16
      %v634 = vadd.s32 %v633, %v631
      %v635 = vadd.s32 %v406, %v407
      %v636 = vand.u32 %v635, 65535
      %v637 = vshrl.u32 %v635, 16
      %v638 = vcvt.s32.f32 %v636
      %v639 = vcvt.s32.f32 %v637
      %640 = vadd.xlane.f32.xlu0 %v638
      %v641 = vpop.xlane.xlu0 %640
      %642 = vadd.xlane.f32.xlu0 %v639
      %v643 = vpop.xlane.xlu0 %642
      %v644 = vcvt.f32.s32 %v641
      %v645 = vcvt.f32.s32 %v643
      %v646 = vshll.u32 %v645, 16
      %v647 = vadd.s32 %v646, %v644
      %v648 = vadd.s32 %v408, %v409
      %v649 = vand.u32 %v648, 65535
      %v650 = vshrl.u32 %v648, 16
      %v651 = vcvt.s32.f32 %v649
      %v652 = vcvt.s32.f32 %v650
      %653 = vadd.xlane.f32.xlu0 %v651
      %v654 = vpop.xlane.xlu0 %653
      %655 = vadd.xlane.f32.xlu0 %v652
      %v656 = vpop.xlane.xlu0 %655
      %v657 = vcvt.f32.s32 %v654
      %v658 = vcvt.f32.s32 %v656
      %v659 = vshll.u32 %v658, 16
      %v660 = vadd.s32 %v659, %v657
      %v661 = vadd.s32 %v410, %v411
      %v662 = vand.u32 %v661, 65535
      %v663 = vshrl.u32 %v661, 16
      %v664 = vcvt.s32.f32 %v662
      %v665 = vcvt.s32.f32 %v663
      %666 = vadd.xlane.f32.xlu0 %v664
      %v667 = vpop.xlane.xlu0 %666
      %668 = vadd.xlane.f32.xlu0 %v665
      %v669 = vpop.xlane.xlu0 %668
      %v670 = vcvt.f32.s32 %v667
      %v671 = vcvt.f32.s32 %v669
      %v672 = vshll.u32 %v671, 16
      %v673 = vadd.s32 %v672, %v670
      %v674 = vadd.s32 %v412, %v413
      %v675 = vand.u32 %v674, 65535
      %v676 = vshrl.u32 %v674, 16
      %v677 = vcvt.s32.f32 %v675
      %v678 = vcvt.s32.f32 %v676
      %679 = vadd.xlane.f32.xlu0 %v677
      %v680 = vpop.xlane.xlu0 %679
      %681 = vadd.xlane.f32.xlu0 %v678
      %v682 = vpop.xlane.xlu0 %681
      %v683 = vcvt.f32.s32 %v680
      %v684 = vcvt.f32.s32 %v682
      %v685 = vshll.u32 %v684, 16
      %v686 = vadd.s32 %v685, %v683
      %v687 = vadd.s32 %v414, %v415
      %v688 = vand.u32 %v687, 65535
      %v689 = vshrl.u32 %v687, 16
      %v690 = vcvt.s32.f32 %v688
      %v691 = vcvt.s32.f32 %v689
      %692 = vadd.xlane.f32.xlu0 %v690
      %v693 = vpop.xlane.xlu0 %692
      %694 = vadd.xlane.f32.xlu0 %v691
      %v695 = vpop.xlane.xlu0 %694
      %v696 = vcvt.f32.s32 %v693
      %v697 = vcvt.f32.s32 %v695
      %v698 = vshll.u32 %v697, 16
      %v699 = vadd.s32 %v698, %v696
      %v700 = vadd.s32 %v416, %v417
      %v701 = vand.u32 %v700, 65535
      %v702 = vshrl.u32 %v700, 16
      %v703 = vcvt.s32.f32 %v701
      %v704 = vcvt.s32.f32 %v702
      %705 = vadd.xlane.f32.xlu0 %v703
      %v706 = vpop.xlane.xlu0 %705
      %707 = vadd.xlane.f32.xlu0 %v704
      %v708 = vpop.xlane.xlu0 %707
      %v709 = vcvt.f32.s32 %v706
      %v710 = vcvt.f32.s32 %v708
      %v711 = vshll.u32 %v710, 16
      %v712 = vadd.s32 %v711, %v709
      %v713 = vadd.s32 %v418, %v419
      %v714 = vand.u32 %v713, 65535
      %v715 = vshrl.u32 %v713, 16
      %v716 = vcvt.s32.f32 %v714
      %v717 = vcvt.s32.f32 %v715
      %718 = vadd.xlane.f32.xlu0 %v716
      %v719 = vpop.xlane.xlu0 %718
      %720 = vadd.xlane.f32.xlu0 %v717
      %v721 = vpop.xlane.xlu0 %720
      %v722 = vcvt.f32.s32 %v719
      %v723 = vcvt.f32.s32 %v721
      %v724 = vshll.u32 %v723, 16
      %v725 = vadd.s32 %v724, %v722
      %v726 = vadd.s32 %v420, %v421
      %v727 = vand.u32 %v726, 65535
      %v728 = vshrl.u32 %v726, 16
      %v729 = vcvt.s32.f32 %v727
      %v730 = vcvt.s32.f32 %v728
      %731 = vadd.xlane.f32.xlu0 %v729
      %v732 = vpop.xlane.xlu0 %731
      %733 = vadd.xlane.f32.xlu0 %v730
      %v734 = vpop.xlane.xlu0 %733
      %v735 = vcvt.f32.s32 %v732
      %v736 = vcvt.f32.s32 %v734
      %v737 = vshll.u32 %v736, 16
      %v738 = vadd.s32 %v737, %v735
      %v739 = vadd.s32 %v422, %v423
      %v740 = vand.u32 %v739, 65535
      %v741 = vshrl.u32 %v739, 16
      %v742 = vcvt.s32.f32 %v740
      %v743 = vcvt.s32.f32 %v741
      %744 = vadd.xlane.f32.xlu0 %v742
      %v745 = vpop.xlane.xlu0 %744
      %746 = vadd.xlane.f32.xlu0 %v743
      %v747 = vpop.xlane.xlu0 %746
      %v748 = vcvt.f32.s32 %v745
      %v749 = vcvt.f32.s32 %v747
      %v750 = vshll.u32 %v749, 16
      %v751 = vadd.s32 %v750, %v748
      %v752 = vadd.s32 %v424, %v425
      %v753 = vand.u32 %v752, 65535
      %v754 = vshrl.u32 %v752, 16
      %v755 = vcvt.s32.f32 %v753
      %v756 = vcvt.s32.f32 %v754
      %757 = vadd.xlane.f32.xlu0 %v755
      %v758 = vpop.xlane.xlu0 %757
      %759 = vadd.xlane.f32.xlu0 %v756
      %v760 = vpop.xlane.xlu0 %759
      %v761 = vcvt.f32.s32 %v758
      %v762 = vcvt.f32.s32 %v760
      %v763 = vshll.u32 %v762, 16
      %v764 = vadd.s32 %v763, %v761
      %v765 = vadd.s32 %v426, %v427
      %v766 = vand.u32 %v765, 65535
      %v767 = vshrl.u32 %v765, 16
      %v768 = vcvt.s32.f32 %v766
      %v769 = vcvt.s32.f32 %v767
      %770 = vadd.xlane.f32.xlu0 %v768
      %v771 = vpop.xlane.xlu0 %770
      %772 = vadd.xlane.f32.xlu0 %v769
      %v773 = vpop.xlane.xlu0 %772
      %v774 = vcvt.f32.s32 %v771
      %v775 = vcvt.f32.s32 %v773
      %v776 = vshll.u32 %v775, 16
      %v777 = vadd.s32 %v776, %v774
      %v778 = vadd.s32 %v428, %v429
      %v779 = vand.u32 %v778, 65535
      %v780 = vshrl.u32 %v778, 16
      %v781 = vcvt.s32.f32 %v779
      %v782 = vcvt.s32.f32 %v780
      %783 = vadd.xlane.f32.xlu0 %v781
      %v784 = vpop.xlane.xlu0 %783
      %785 = vadd.xlane.f32.xlu0 %v782
      %v786 = vpop.xlane.xlu0 %785
      %v787 = vcvt.f32.s32 %v784
      %v788 = vcvt.f32.s32 %v786
      %v789 = vshll.u32 %v788, 16
      %v790 = vadd.s32 %v789, %v787
      %v791 = vadd.s32 %v430, %v431
      %v792 = vand.u32 %v791, 65535
      %v793 = vshrl.u32 %v791, 16
      %v794 = vcvt.s32.f32 %v792
      %v795 = vcvt.s32.f32 %v793
      %796 = vadd.xlane.f32.xlu0 %v794
      %v797 = vpop.xlane.xlu0 %796
      %798 = vadd.xlane.f32.xlu0 %v795
      %v799 = vpop.xlane.xlu0 %798
      %v800 = vcvt.f32.s32 %v797
      %v801 = vcvt.f32.s32 %v799
      %v802 = vshll.u32 %v801, 16
      %v803 = vadd.s32 %v802, %v800
      %v804 = vadd.s32 %v432, %v433
      %v805 = vand.u32 %v804, 65535
      %v806 = vshrl.u32 %v804, 16
      %v807 = vcvt.s32.f32 %v805
      %v808 = vcvt.s32.f32 %v806
      %809 = vadd.xlane.f32.xlu0 %v807
      %v810 = vpop.xlane.xlu0 %809
      %811 = vadd.xlane.f32.xlu0 %v808
      %v812 = vpop.xlane.xlu0 %811
      %v813 = vcvt.f32.s32 %v810
      %v814 = vcvt.f32.s32 %v812
      %v815 = vshll.u32 %v814, 16
      %v816 = vadd.s32 %v815, %v813
      %v817 = vadd.s32 %v434, %v435
      %v818 = vand.u32 %v817, 65535
      %v819 = vshrl.u32 %v817, 16
      %v820 = vcvt.s32.f32 %v818
      %v821 = vcvt.s32.f32 %v819
      %822 = vadd.xlane.f32.xlu0 %v820
      %v823 = vpop.xlane.xlu0 %822
      %824 = vadd.xlane.f32.xlu0 %v821
      %v825 = vpop.xlane.xlu0 %824
      %v826 = vcvt.f32.s32 %v823
      %v827 = vcvt.f32.s32 %v825
      %v828 = vshll.u32 %v827, 16
      %v829 = vadd.s32 %v828, %v826
      %v830 = vadd.s32 %v436, %v437
      %v831 = vand.u32 %v830, 65535
      %v832 = vshrl.u32 %v830, 16
      %v833 = vcvt.s32.f32 %v831
      %v834 = vcvt.s32.f32 %v832
      %835 = vadd.xlane.f32.xlu0 %v833
      %v836 = vpop.xlane.xlu0 %835
      %837 = vadd.xlane.f32.xlu0 %v834
      %v838 = vpop.xlane.xlu0 %837
      %v839 = vcvt.f32.s32 %v836
      %v840 = vcvt.f32.s32 %v838
      %v841 = vshll.u32 %v840, 16
      %v842 = vadd.s32 %v841, %v839
      %v843 = vadd.s32 %v438, %v439
      %v844 = vand.u32 %v843, 65535
      %v845 = vshrl.u32 %v843, 16
      %v846 = vcvt.s32.f32 %v844
      %v847 = vcvt.s32.f32 %v845
      %848 = vadd.xlane.f32.xlu0 %v846
      %v849 = vpop.xlane.xlu0 %848
      %850 = vadd.xlane.f32.xlu0 %v847
      %v851 = vpop.xlane.xlu0 %850
      %v852 = vcvt.f32.s32 %v849
      %v853 = vcvt.f32.s32 %v851
      %v854 = vshll.u32 %v853, 16
      %v855 = vadd.s32 %v854, %v852
      %v856 = vstv 0
      %v857 = vadd.s32 %v206, %v856
      %v858 = vadd.s32 %v207, %v856
      %v859 = vadd.s32 %v208, %v856
      %v860 = vadd.s32 %v209, %v856
      %v861 = vadd.s32 %v210, %v856
      %v862 = vadd.s32 %v211, %v856
      %v863 = vadd.s32 %v212, %v856
      %v864 = vadd.s32 %v213, %v856
      %v865 = vadd.s32 %v214, %v856
      %v866 = vadd.s32 %v215, %v856
      %v867 = vadd.s32 %v216, %v856
      %v868 = vadd.s32 %v217, %v856
      %v869 = vadd.s32 %v218, %v856
      %v870 = vadd.s32 %v219, %v856
      %v871 = vadd.s32 %v220, %v856
      %v872 = vadd.s32 %v221, %v856
      %v873 = vadd.s32 %v222, %v856
      %v874 = vadd.s32 %v223, %v856
      %v875 = vadd.s32 %v224, %v856
      %v876 = vadd.s32 %v225, %v856
      %v877 = vadd.s32 %v226, %v856
      %v878 = vadd.s32 %v227, %v856
      %v879 = vadd.s32 %v228, %v856
      %v880 = vadd.s32 %v229, %v856
      %v881 = vadd.s32 %v230, %v856
      %v882 = vadd.s32 %v231, %v856
      %v883 = vadd.s32 %v232, %v856
      %v884 = vadd.s32 %v233, %v856
      %v885 = vadd.s32 %v234, %v856
      %v886 = vadd.s32 %v235, %v856
      %v887 = vadd.s32 %v236, %v856
      %v888 = vadd.s32 %v237, %v856
      %v889 = vlaneseq
      %v890 = vshrl.u32 %v889, 7
      %v891 = vsub.s32 0, %v890
      %v892 = vrot.slane %v366, %v891
      %v893 = vlaneseq
      %v894 = vshrl.u32 %v893, 7
      %v895 = vsub.s32 1, %v894
      %v896 = vrot.slane %v366, %v895
      %v897 = vlaneseq
      %v898 = vshrl.u32 %v897, 7
      %v899 = vsub.s32 2, %v898
      %v900 = vrot.slane %v366, %v899
      %v901 = vlaneseq
      %v902 = vshrl.u32 %v901, 7
      %v903 = vsub.s32 3, %v902
      %v904 = vrot.slane %v366, %v903
      %vm905 = vcmp.eq.s32.totalorder %v452, %v892
      %vm906 = vcmp.eq.s32.totalorder %v452, %v896
      %vm907 = vcmp.eq.s32.totalorder %v452, %v900
      %vm908 = vcmp.eq.s32.totalorder %v452, %v904
      %vm909 = vcmp.eq.s32.totalorder %v465, %v892
      %vm910 = vcmp.eq.s32.totalorder %v465, %v896
      %vm911 = vcmp.eq.s32.totalorder %v465, %v900
      %vm912 = vcmp.eq.s32.totalorder %v465, %v904
      %vm913 = vcmp.eq.s32.totalorder %v478, %v892
      %vm914 = vcmp.eq.s32.totalorder %v478, %v896
      %vm915 = vcmp.eq.s32.totalorder %v478, %v900
      %vm916 = vcmp.eq.s32.totalorder %v478, %v904
      %vm917 = vcmp.eq.s32.totalorder %v491, %v892
      %vm918 = vcmp.eq.s32.totalorder %v491, %v896
      %vm919 = vcmp.eq.s32.totalorder %v491, %v900
      %vm920 = vcmp.eq.s32.totalorder %v491, %v904
      %vm921 = vcmp.eq.s32.totalorder %v504, %v892
      %vm922 = vcmp.eq.s32.totalorder %v504, %v896
      %vm923 = vcmp.eq.s32.totalorder %v504, %v900
      %vm924 = vcmp.eq.s32.totalorder %v504, %v904
      %vm925 = vcmp.eq.s32.totalorder %v517, %v892
      %vm926 = vcmp.eq.s32.totalorder %v517, %v896
      %vm927 = vcmp.eq.s32.totalorder %v517, %v900
      %vm928 = vcmp.eq.s32.totalorder %v517, %v904
      %vm929 = vcmp.eq.s32.totalorder %v530, %v892
      %vm930 = vcmp.eq.s32.totalorder %v530, %v896
      %vm931 = vcmp.eq.s32.totalorder %v530, %v900
      %vm932 = vcmp.eq.s32.totalorder %v530, %v904
      %vm933 = vcmp.eq.s32.totalorder %v543, %v892
      %vm934 = vcmp.eq.s32.totalorder %v543, %v896
      %vm935 = vcmp.eq.s32.totalorder %v543, %v900
      %vm936 = vcmp.eq.s32.totalorder %v543, %v904
      %vm937 = vcmp.eq.s32.totalorder %v556, %v892
      %vm938 = vcmp.eq.s32.totalorder %v556, %v896
      %vm939 = vcmp.eq.s32.totalorder %v556, %v900
      %vm940 = vcmp.eq.s32.totalorder %v556, %v904
      %vm941 = vcmp.eq.s32.totalorder %v569, %v892
      %vm942 = vcmp.eq.s32.totalorder %v569, %v896
      %vm943 = vcmp.eq.s32.totalorder %v569, %v900
      %vm944 = vcmp.eq.s32.totalorder %v569, %v904
      %vm945 = vcmp.eq.s32.totalorder %v582, %v892
      %vm946 = vcmp.eq.s32.totalorder %v582, %v896
      %vm947 = vcmp.eq.s32.totalorder %v582, %v900
      %vm948 = vcmp.eq.s32.totalorder %v582, %v904
      %vm949 = vcmp.eq.s32.totalorder %v595, %v892
      %vm950 = vcmp.eq.s32.totalorder %v595, %v896
      %vm951 = vcmp.eq.s32.totalorder %v595, %v900
      %vm952 = vcmp.eq.s32.totalorder %v595, %v904
      %vm953 = vcmp.eq.s32.totalorder %v608, %v892
      %vm954 = vcmp.eq.s32.totalorder %v608, %v896
      %vm955 = vcmp.eq.s32.totalorder %v608, %v900
      %vm956 = vcmp.eq.s32.totalorder %v608, %v904
      %vm957 = vcmp.eq.s32.totalorder %v621, %v892
      %vm958 = vcmp.eq.s32.totalorder %v621, %v896
      %vm959 = vcmp.eq.s32.totalorder %v621, %v900
      %vm960 = vcmp.eq.s32.totalorder %v621, %v904
      %vm961 = vcmp.eq.s32.totalorder %v634, %v892
      %vm962 = vcmp.eq.s32.totalorder %v634, %v896
      %vm963 = vcmp.eq.s32.totalorder %v634, %v900
      %vm964 = vcmp.eq.s32.totalorder %v634, %v904
      %vm965 = vcmp.eq.s32.totalorder %v647, %v892
      %vm966 = vcmp.eq.s32.totalorder %v647, %v896
      %vm967 = vcmp.eq.s32.totalorder %v647, %v900
      %vm968 = vcmp.eq.s32.totalorder %v647, %v904
      %vm969 = vcmp.eq.s32.totalorder %v660, %v892
      %vm970 = vcmp.eq.s32.totalorder %v660, %v896
      %vm971 = vcmp.eq.s32.totalorder %v660, %v900
      %vm972 = vcmp.eq.s32.totalorder %v660, %v904
      %vm973 = vcmp.eq.s32.totalorder %v673, %v892
      %vm974 = vcmp.eq.s32.totalorder %v673, %v896
      %vm975 = vcmp.eq.s32.totalorder %v673, %v900
      %vm976 = vcmp.eq.s32.totalorder %v673, %v904
      %vm977 = vcmp.eq.s32.totalorder %v686, %v892
      %vm978 = vcmp.eq.s32.totalorder %v686, %v896
      %vm979 = vcmp.eq.s32.totalorder %v686, %v900
      %vm980 = vcmp.eq.s32.totalorder %v686, %v904
      %vm981 = vcmp.eq.s32.totalorder %v699, %v892
      %vm982 = vcmp.eq.s32.totalorder %v699, %v896
      %vm983 = vcmp.eq.s32.totalorder %v699, %v900
      %vm984 = vcmp.eq.s32.totalorder %v699, %v904
      %vm985 = vcmp.eq.s32.totalorder %v712, %v892
      %vm986 = vcmp.eq.s32.totalorder %v712, %v896
      %vm987 = vcmp.eq.s32.totalorder %v712, %v900
      %vm988 = vcmp.eq.s32.totalorder %v712, %v904
      %vm989 = vcmp.eq.s32.totalorder %v725, %v892
      %vm990 = vcmp.eq.s32.totalorder %v725, %v896
      %vm991 = vcmp.eq.s32.totalorder %v725, %v900
      %vm992 = vcmp.eq.s32.totalorder %v725, %v904
      %vm993 = vcmp.eq.s32.totalorder %v738, %v892
      %vm994 = vcmp.eq.s32.totalorder %v738, %v896
      %vm995 = vcmp.eq.s32.totalorder %v738, %v900
      %vm996 = vcmp.eq.s32.totalorder %v738, %v904
      %vm997 = vcmp.eq.s32.totalorder %v751, %v892
      %vm998 = vcmp.eq.s32.totalorder %v751, %v896
      %vm999 = vcmp.eq.s32.totalorder %v751, %v900
      %vm1000 = vcmp.eq.s32.totalorder %v751, %v904
      %vm1001 = vcmp.eq.s32.totalorder %v764, %v892
      %vm1002 = vcmp.eq.s32.totalorder %v764, %v896
      %vm1003 = vcmp.eq.s32.totalorder %v764, %v900
      %vm1004 = vcmp.eq.s32.totalorder %v764, %v904
      %vm1005 = vcmp.eq.s32.totalorder %v777, %v892
      %vm1006 = vcmp.eq.s32.totalorder %v777, %v896
      %vm1007 = vcmp.eq.s32.totalorder %v777, %v900
      %vm1008 = vcmp.eq.s32.totalorder %v777, %v904
      %vm1009 = vcmp.eq.s32.totalorder %v790, %v892
      %vm1010 = vcmp.eq.s32.totalorder %v790, %v896
      %vm1011 = vcmp.eq.s32.totalorder %v790, %v900
      %vm1012 = vcmp.eq.s32.totalorder %v790, %v904
      %vm1013 = vcmp.eq.s32.totalorder %v803, %v892
      %vm1014 = vcmp.eq.s32.totalorder %v803, %v896
      %vm1015 = vcmp.eq.s32.totalorder %v803, %v900
      %vm1016 = vcmp.eq.s32.totalorder %v803, %v904
      %vm1017 = vcmp.eq.s32.totalorder %v816, %v892
      %vm1018 = vcmp.eq.s32.totalorder %v816, %v896
      %vm1019 = vcmp.eq.s32.totalorder %v816, %v900
      %vm1020 = vcmp.eq.s32.totalorder %v816, %v904
      %vm1021 = vcmp.eq.s32.totalorder %v829, %v892
      %vm1022 = vcmp.eq.s32.totalorder %v829, %v896
      %vm1023 = vcmp.eq.s32.totalorder %v829, %v900
      %vm1024 = vcmp.eq.s32.totalorder %v829, %v904
      %vm1025 = vcmp.eq.s32.totalorder %v842, %v892
      %vm1026 = vcmp.eq.s32.totalorder %v842, %v896
      %vm1027 = vcmp.eq.s32.totalorder %v842, %v900
      %vm1028 = vcmp.eq.s32.totalorder %v842, %v904
      %vm1029 = vcmp.eq.s32.totalorder %v855, %v892
      %vm1030 = vcmp.eq.s32.totalorder %v855, %v896
      %vm1031 = vcmp.eq.s32.totalorder %v855, %v900
      %vm1032 = vcmp.eq.s32.totalorder %v855, %v904
      %vm1033 = vcmp.lt.s32.totalorder %v857, %v201
      %vm1034 = vcmp.lt.s32.totalorder %v857, %v202
      %vm1035 = vcmp.lt.s32.totalorder %v857, %v203
      %vm1036 = vcmp.lt.s32.totalorder %v857, %v204
      %vm1037 = vcmp.lt.s32.totalorder %v858, %v201
      %vm1038 = vcmp.lt.s32.totalorder %v858, %v202
      %vm1039 = vcmp.lt.s32.totalorder %v858, %v203
      %vm1040 = vcmp.lt.s32.totalorder %v858, %v204
      %vm1041 = vcmp.lt.s32.totalorder %v859, %v201
      %vm1042 = vcmp.lt.s32.totalorder %v859, %v202
      %vm1043 = vcmp.lt.s32.totalorder %v859, %v203
      %vm1044 = vcmp.lt.s32.totalorder %v859, %v204
      %vm1045 = vcmp.lt.s32.totalorder %v860, %v201
      %vm1046 = vcmp.lt.s32.totalorder %v860, %v202
      %vm1047 = vcmp.lt.s32.totalorder %v860, %v203
      %vm1048 = vcmp.lt.s32.totalorder %v860, %v204
      %vm1049 = vcmp.lt.s32.totalorder %v861, %v201
      %vm1050 = vcmp.lt.s32.totalorder %v861, %v202
      %vm1051 = vcmp.lt.s32.totalorder %v861, %v203
      %vm1052 = vcmp.lt.s32.totalorder %v861, %v204
      %vm1053 = vcmp.lt.s32.totalorder %v862, %v201
      %vm1054 = vcmp.lt.s32.totalorder %v862, %v202
      %vm1055 = vcmp.lt.s32.totalorder %v862, %v203
      %vm1056 = vcmp.lt.s32.totalorder %v862, %v204
      %vm1057 = vcmp.lt.s32.totalorder %v863, %v201
      %vm1058 = vcmp.lt.s32.totalorder %v863, %v202
      %vm1059 = vcmp.lt.s32.totalorder %v863, %v203
      %vm1060 = vcmp.lt.s32.totalorder %v863, %v204
      %vm1061 = vcmp.lt.s32.totalorder %v864, %v201
      %vm1062 = vcmp.lt.s32.totalorder %v864, %v202
      %vm1063 = vcmp.lt.s32.totalorder %v864, %v203
      %vm1064 = vcmp.lt.s32.totalorder %v864, %v204
      %vm1065 = vcmp.lt.s32.totalorder %v865, %v201
      %vm1066 = vcmp.lt.s32.totalorder %v865, %v202
      %vm1067 = vcmp.lt.s32.totalorder %v865, %v203
      %vm1068 = vcmp.lt.s32.totalorder %v865, %v204
      %vm1069 = vcmp.lt.s32.totalorder %v866, %v201
      %vm1070 = vcmp.lt.s32.totalorder %v866, %v202
      %vm1071 = vcmp.lt.s32.totalorder %v866, %v203
      %vm1072 = vcmp.lt.s32.totalorder %v866, %v204
      %vm1073 = vcmp.lt.s32.totalorder %v867, %v201
      %vm1074 = vcmp.lt.s32.totalorder %v867, %v202
      %vm1075 = vcmp.lt.s32.totalorder %v867, %v203
      %vm1076 = vcmp.lt.s32.totalorder %v867, %v204
      %vm1077 = vcmp.lt.s32.totalorder %v868, %v201
      %vm1078 = vcmp.lt.s32.totalorder %v868, %v202
      %vm1079 = vcmp.lt.s32.totalorder %v868, %v203
      %vm1080 = vcmp.lt.s32.totalorder %v868, %v204
      %vm1081 = vcmp.lt.s32.totalorder %v869, %v201
      %vm1082 = vcmp.lt.s32.totalorder %v869, %v202
      %vm1083 = vcmp.lt.s32.totalorder %v869, %v203
      %vm1084 = vcmp.lt.s32.totalorder %v869, %v204
      %vm1085 = vcmp.lt.s32.totalorder %v870, %v201
      %vm1086 = vcmp.lt.s32.totalorder %v870, %v202
      %vm1087 = vcmp.lt.s32.totalorder %v870, %v203
      %vm1088 = vcmp.lt.s32.totalorder %v870, %v204
      %vm1089 = vcmp.lt.s32.totalorder %v871, %v201
      %vm1090 = vcmp.lt.s32.totalorder %v871, %v202
      %vm1091 = vcmp.lt.s32.totalorder %v871, %v203
      %vm1092 = vcmp.lt.s32.totalorder %v871, %v204
      %vm1093 = vcmp.lt.s32.totalorder %v872, %v201
      %vm1094 = vcmp.lt.s32.totalorder %v872, %v202
      %vm1095 = vcmp.lt.s32.totalorder %v872, %v203
      %vm1096 = vcmp.lt.s32.totalorder %v872, %v204
      %vm1097 = vcmp.lt.s32.totalorder %v873, %v201
      %vm1098 = vcmp.lt.s32.totalorder %v873, %v202
      %vm1099 = vcmp.lt.s32.totalorder %v873, %v203
      %vm1100 = vcmp.lt.s32.totalorder %v873, %v204
      %vm1101 = vcmp.lt.s32.totalorder %v874, %v201
      %vm1102 = vcmp.lt.s32.totalorder %v874, %v202
      %vm1103 = vcmp.lt.s32.totalorder %v874, %v203
      %vm1104 = vcmp.lt.s32.totalorder %v874, %v204
      %vm1105 = vcmp.lt.s32.totalorder %v875, %v201
      %vm1106 = vcmp.lt.s32.totalorder %v875, %v202
      %vm1107 = vcmp.lt.s32.totalorder %v875, %v203
      %vm1108 = vcmp.lt.s32.totalorder %v875, %v204
      %vm1109 = vcmp.lt.s32.totalorder %v876, %v201
      %vm1110 = vcmp.lt.s32.totalorder %v876, %v202
      %vm1111 = vcmp.lt.s32.totalorder %v876, %v203
      %vm1112 = vcmp.lt.s32.totalorder %v876, %v204
      %vm1113 = vcmp.lt.s32.totalorder %v877, %v201
      %vm1114 = vcmp.lt.s32.totalorder %v877, %v202
      %vm1115 = vcmp.lt.s32.totalorder %v877, %v203
      %vm1116 = vcmp.lt.s32.totalorder %v877, %v204
      %vm1117 = vcmp.lt.s32.totalorder %v878, %v201
      %vm1118 = vcmp.lt.s32.totalorder %v878, %v202
      %vm1119 = vcmp.lt.s32.totalorder %v878, %v203
      %vm1120 = vcmp.lt.s32.totalorder %v878, %v204
      %vm1121 = vcmp.lt.s32.totalorder %v879, %v201
      %vm1122 = vcmp.lt.s32.totalorder %v879, %v202
      %vm1123 = vcmp.lt.s32.totalorder %v879, %v203
      %vm1124 = vcmp.lt.s32.totalorder %v879, %v204
      %vm1125 = vcmp.lt.s32.totalorder %v880, %v201
      %vm1126 = vcmp.lt.s32.totalorder %v880, %v202
      %vm1127 = vcmp.lt.s32.totalorder %v880, %v203
      %vm1128 = vcmp.lt.s32.totalorder %v880, %v204
      %vm1129 = vcmp.lt.s32.totalorder %v881, %v201
      %vm1130 = vcmp.lt.s32.totalorder %v881, %v202
      %vm1131 = vcmp.lt.s32.totalorder %v881, %v203
      %vm1132 = vcmp.lt.s32.totalorder %v881, %v204
      %vm1133 = vcmp.lt.s32.totalorder %v882, %v201
      %vm1134 = vcmp.lt.s32.totalorder %v882, %v202
      %vm1135 = vcmp.lt.s32.totalorder %v882, %v203
      %vm1136 = vcmp.lt.s32.totalorder %v882, %v204
      %vm1137 = vcmp.lt.s32.totalorder %v883, %v201
      %vm1138 = vcmp.lt.s32.totalorder %v883, %v202
      %vm1139 = vcmp.lt.s32.totalorder %v883, %v203
      %vm1140 = vcmp.lt.s32.totalorder %v883, %v204
      %vm1141 = vcmp.lt.s32.totalorder %v884, %v201
      %vm1142 = vcmp.lt.s32.totalorder %v884, %v202
      %vm1143 = vcmp.lt.s32.totalorder %v884, %v203
      %vm1144 = vcmp.lt.s32.totalorder %v884, %v204
      %vm1145 = vcmp.lt.s32.totalorder %v885, %v201
      %vm1146 = vcmp.lt.s32.totalorder %v885, %v202
      %vm1147 = vcmp.lt.s32.totalorder %v885, %v203
      %vm1148 = vcmp.lt.s32.totalorder %v885, %v204
      %vm1149 = vcmp.lt.s32.totalorder %v886, %v201
      %vm1150 = vcmp.lt.s32.totalorder %v886, %v202
      %vm1151 = vcmp.lt.s32.totalorder %v886, %v203
      %vm1152 = vcmp.lt.s32.totalorder %v886, %v204
      %vm1153 = vcmp.lt.s32.totalorder %v887, %v201
      %vm1154 = vcmp.lt.s32.totalorder %v887, %v202
      %vm1155 = vcmp.lt.s32.totalorder %v887, %v203
      %vm1156 = vcmp.lt.s32.totalorder %v887, %v204
      %vm1157 = vcmp.lt.s32.totalorder %v888, %v201
      %vm1158 = vcmp.lt.s32.totalorder %v888, %v202
      %vm1159 = vcmp.lt.s32.totalorder %v888, %v203
      %vm1160 = vcmp.lt.s32.totalorder %v888, %v204
      %vm1161 = vmand %vm905, %vm1033
      %vm1162 = vmand %vm906, %vm1034
      %vm1163 = vmand %vm907, %vm1035
      %vm1164 = vmand %vm908, %vm1036
      %vm1165 = vmand %vm909, %vm1037
      %vm1166 = vmand %vm910, %vm1038
      %vm1167 = vmand %vm911, %vm1039
      %vm1168 = vmand %vm912, %vm1040
      %vm1169 = vmand %vm913, %vm1041
      %vm1170 = vmand %vm914, %vm1042
      %vm1171 = vmand %vm915, %vm1043
      %vm1172 = vmand %vm916, %vm1044
      %vm1173 = vmand %vm917, %vm1045
      %vm1174 = vmand %vm918, %vm1046
      %vm1175 = vmand %vm919, %vm1047
      %vm1176 = vmand %vm920, %vm1048
      %vm1177 = vmand %vm921, %vm1049
      %vm1178 = vmand %vm922, %vm1050
      %vm1179 = vmand %vm923, %vm1051
      %vm1180 = vmand %vm924, %vm1052
      %vm1181 = vmand %vm925, %vm1053
      %vm1182 = vmand %vm926, %vm1054
      %vm1183 = vmand %vm927, %vm1055
      %vm1184 = vmand %vm928, %vm1056
      %vm1185 = vmand %vm929, %vm1057
      %vm1186 = vmand %vm930, %vm1058
      %vm1187 = vmand %vm931, %vm1059
      %vm1188 = vmand %vm932, %vm1060
      %vm1189 = vmand %vm933, %vm1061
      %vm1190 = vmand %vm934, %vm1062
      %vm1191 = vmand %vm935, %vm1063
      %vm1192 = vmand %vm936, %vm1064
      %vm1193 = vmand %vm937, %vm1065
      %vm1194 = vmand %vm938, %vm1066
      %vm1195 = vmand %vm939, %vm1067
      %vm1196 = vmand %vm940, %vm1068
      %vm1197 = vmand %vm941, %vm1069
      %vm1198 = vmand %vm942, %vm1070
      %vm1199 = vmand %vm943, %vm1071
      %vm1200 = vmand %vm944, %vm1072
      %vm1201 = vmand %vm945, %vm1073
      %vm1202 = vmand %vm946, %vm1074
      %vm1203 = vmand %vm947, %vm1075
      %vm1204 = vmand %vm948, %vm1076
      %vm1205 = vmand %vm949, %vm1077
      %vm1206 = vmand %vm950, %vm1078
      %vm1207 = vmand %vm951, %vm1079
      %vm1208 = vmand %vm952, %vm1080
      %vm1209 = vmand %vm953, %vm1081
      %vm1210 = vmand %vm954, %vm1082
      %vm1211 = vmand %vm955, %vm1083
      %vm1212 = vmand %vm956, %vm1084
      %vm1213 = vmand %vm957, %vm1085
      %vm1214 = vmand %vm958, %vm1086
      %vm1215 = vmand %vm959, %vm1087
      %vm1216 = vmand %vm960, %vm1088
      %vm1217 = vmand %vm961, %vm1089
      %vm1218 = vmand %vm962, %vm1090
      %vm1219 = vmand %vm963, %vm1091
      %vm1220 = vmand %vm964, %vm1092
      %vm1221 = vmand %vm965, %vm1093
      %vm1222 = vmand %vm966, %vm1094
      %vm1223 = vmand %vm967, %vm1095
      %vm1224 = vmand %vm968, %vm1096
      %vm1225 = vmand %vm969, %vm1097
      %vm1226 = vmand %vm970, %vm1098
      %vm1227 = vmand %vm971, %vm1099
      %vm1228 = vmand %vm972, %vm1100
      %vm1229 = vmand %vm973, %vm1101
      %vm1230 = vmand %vm974, %vm1102
      %vm1231 = vmand %vm975, %vm1103
      %vm1232 = vmand %vm976, %vm1104
      %vm1233 = vmand %vm977, %vm1105
      %vm1234 = vmand %vm978, %vm1106
      %vm1235 = vmand %vm979, %vm1107
      %vm1236 = vmand %vm980, %vm1108
      %vm1237 = vmand %vm981, %vm1109
      %vm1238 = vmand %vm982, %vm1110
      %vm1239 = vmand %vm983, %vm1111
      %vm1240 = vmand %vm984, %vm1112
      %vm1241 = vmand %vm985, %vm1113
      %vm1242 = vmand %vm986, %vm1114
      %vm1243 = vmand %vm987, %vm1115
      %vm1244 = vmand %vm988, %vm1116
      %vm1245 = vmand %vm989, %vm1117
      %vm1246 = vmand %vm990, %vm1118
      %vm1247 = vmand %vm991, %vm1119
      %vm1248 = vmand %vm992, %vm1120
      %vm1249 = vmand %vm993, %vm1121
      %vm1250 = vmand %vm994, %vm1122
      %vm1251 = vmand %vm995, %vm1123
      %vm1252 = vmand %vm996, %vm1124
      %vm1253 = vmand %vm997, %vm1125
      %vm1254 = vmand %vm998, %vm1126
      %vm1255 = vmand %vm999, %vm1127
      %vm1256 = vmand %vm1000, %vm1128
      %vm1257 = vmand %vm1001, %vm1129
      %vm1258 = vmand %vm1002, %vm1130
      %vm1259 = vmand %vm1003, %vm1131
      %vm1260 = vmand %vm1004, %vm1132
      %vm1261 = vmand %vm1005, %vm1133
      %vm1262 = vmand %vm1006, %vm1134
      %vm1263 = vmand %vm1007, %vm1135
      %vm1264 = vmand %vm1008, %vm1136
      %vm1265 = vmand %vm1009, %vm1137
      %vm1266 = vmand %vm1010, %vm1138
      %vm1267 = vmand %vm1011, %vm1139
      %vm1268 = vmand %vm1012, %vm1140
      %vm1269 = vmand %vm1013, %vm1141
      %vm1270 = vmand %vm1014, %vm1142
      %vm1271 = vmand %vm1015, %vm1143
      %vm1272 = vmand %vm1016, %vm1144
      %vm1273 = vmand %vm1017, %vm1145
      %vm1274 = vmand %vm1018, %vm1146
      %vm1275 = vmand %vm1019, %vm1147
      %vm1276 = vmand %vm1020, %vm1148
      %vm1277 = vmand %vm1021, %vm1149
      %vm1278 = vmand %vm1022, %vm1150
      %vm1279 = vmand %vm1023, %vm1151
      %vm1280 = vmand %vm1024, %vm1152
      %vm1281 = vmand %vm1025, %vm1153
      %vm1282 = vmand %vm1026, %vm1154
      %vm1283 = vmand %vm1027, %vm1155
      %vm1284 = vmand %vm1028, %vm1156
      %vm1285 = vmand %vm1029, %vm1157
      %vm1286 = vmand %vm1030, %vm1158
      %vm1287 = vmand %vm1031, %vm1159
      %vm1288 = vmand %vm1032, %vm1160
      %v1289 = vsel %vm1161, 1, 0
      %v1290 = vsel %vm1162, 1, 0
      %v1291 = vsel %vm1163, 1, 0
      %v1292 = vsel %vm1164, 1, 0
      %v1293 = vsel %vm1165, 1, 0
      %v1294 = vsel %vm1166, 1, 0
      %v1295 = vsel %vm1167, 1, 0
      %v1296 = vsel %vm1168, 1, 0
      %v1297 = vsel %vm1169, 1, 0
      %v1298 = vsel %vm1170, 1, 0
      %v1299 = vsel %vm1171, 1, 0
      %v1300 = vsel %vm1172, 1, 0
      %v1301 = vsel %vm1173, 1, 0
      %v1302 = vsel %vm1174, 1, 0
      %v1303 = vsel %vm1175, 1, 0
      %v1304 = vsel %vm1176, 1, 0
      %v1305 = vsel %vm1177, 1, 0
      %v1306 = vsel %vm1178, 1, 0
      %v1307 = vsel %vm1179, 1, 0
      %v1308 = vsel %vm1180, 1, 0
      %v1309 = vsel %vm1181, 1, 0
      %v1310 = vsel %vm1182, 1, 0
      %v1311 = vsel %vm1183, 1, 0
      %v1312 = vsel %vm1184, 1, 0
      %v1313 = vsel %vm1185, 1, 0
      %v1314 = vsel %vm1186, 1, 0
      %v1315 = vsel %vm1187, 1, 0
      %v1316 = vsel %vm1188, 1, 0
      %v1317 = vsel %vm1189, 1, 0
      %v1318 = vsel %vm1190, 1, 0
      %v1319 = vsel %vm1191, 1, 0
      %v1320 = vsel %vm1192, 1, 0
      %v1321 = vsel %vm1193, 1, 0
      %v1322 = vsel %vm1194, 1, 0
      %v1323 = vsel %vm1195, 1, 0
      %v1324 = vsel %vm1196, 1, 0
      %v1325 = vsel %vm1197, 1, 0
      %v1326 = vsel %vm1198, 1, 0
      %v1327 = vsel %vm1199, 1, 0
      %v1328 = vsel %vm1200, 1, 0
      %v1329 = vsel %vm1201, 1, 0
      %v1330 = vsel %vm1202, 1, 0
      %v1331 = vsel %vm1203, 1, 0
      %v1332 = vsel %vm1204, 1, 0
      %v1333 = vsel %vm1205, 1, 0
      %v1334 = vsel %vm1206, 1, 0
      %v1335 = vsel %vm1207, 1, 0
      %v1336 = vsel %vm1208, 1, 0
      %v1337 = vsel %vm1209, 1, 0
      %v1338 = vsel %vm1210, 1, 0
      %v1339 = vsel %vm1211, 1, 0
      %v1340 = vsel %vm1212, 1, 0
      %v1341 = vsel %vm1213, 1, 0
      %v1342 = vsel %vm1214, 1, 0
      %v1343 = vsel %vm1215, 1, 0
      %v1344 = vsel %vm1216, 1, 0
      %v1345 = vsel %vm1217, 1, 0
      %v1346 = vsel %vm1218, 1, 0
      %v1347 = vsel %vm1219, 1, 0
      %v1348 = vsel %vm1220, 1, 0
      %v1349 = vsel %vm1221, 1, 0
      %v1350 = vsel %vm1222, 1, 0
      %v1351 = vsel %vm1223, 1, 0
      %v1352 = vsel %vm1224, 1, 0
      %v1353 = vsel %vm1225, 1, 0
      %v1354 = vsel %vm1226, 1, 0
      %v1355 = vsel %vm1227, 1, 0
      %v1356 = vsel %vm1228, 1, 0
      %v1357 = vsel %vm1229, 1, 0
      %v1358 = vsel %vm1230, 1, 0
      %v1359 = vsel %vm1231, 1, 0
      %v1360 = vsel %vm1232, 1, 0
      %v1361 = vsel %vm1233, 1, 0
      %v1362 = vsel %vm1234, 1, 0
      %v1363 = vsel %vm1235, 1, 0
      %v1364 = vsel %vm1236, 1, 0
      %v1365 = vsel %vm1237, 1, 0
      %v1366 = vsel %vm1238, 1, 0
      %v1367 = vsel %vm1239, 1, 0
      %v1368 = vsel %vm1240, 1, 0
      %v1369 = vsel %vm1241, 1, 0
      %v1370 = vsel %vm1242, 1, 0
      %v1371 = vsel %vm1243, 1, 0
      %v1372 = vsel %vm1244, 1, 0
      %v1373 = vsel %vm1245, 1, 0
      %v1374 = vsel %vm1246, 1, 0
      %v1375 = vsel %vm1247, 1, 0
      %v1376 = vsel %vm1248, 1, 0
      %v1377 = vsel %vm1249, 1, 0
      %v1378 = vsel %vm1250, 1, 0
      %v1379 = vsel %vm1251, 1, 0
      %v1380 = vsel %vm1252, 1, 0
      %v1381 = vsel %vm1253, 1, 0
      %v1382 = vsel %vm1254, 1, 0
      %v1383 = vsel %vm1255, 1, 0
      %v1384 = vsel %vm1256, 1, 0
      %v1385 = vsel %vm1257, 1, 0
      %v1386 = vsel %vm1258, 1, 0
      %v1387 = vsel %vm1259, 1, 0
      %v1388 = vsel %vm1260, 1, 0
      %v1389 = vsel %vm1261, 1, 0
      %v1390 = vsel %vm1262, 1, 0
      %v1391 = vsel %vm1263, 1, 0
      %v1392 = vsel %vm1264, 1, 0
      %v1393 = vsel %vm1265, 1, 0
      %v1394 = vsel %vm1266, 1, 0
      %v1395 = vsel %vm1267, 1, 0
      %v1396 = vsel %vm1268, 1, 0
      %v1397 = vsel %vm1269, 1, 0
      %v1398 = vsel %vm1270, 1, 0
      %v1399 = vsel %vm1271, 1, 0
      %v1400 = vsel %vm1272, 1, 0
      %v1401 = vsel %vm1273, 1, 0
      %v1402 = vsel %vm1274, 1, 0
      %v1403 = vsel %vm1275, 1, 0
      %v1404 = vsel %vm1276, 1, 0
      %v1405 = vsel %vm1277, 1, 0
      %v1406 = vsel %vm1278, 1, 0
      %v1407 = vsel %vm1279, 1, 0
      %v1408 = vsel %vm1280, 1, 0
      %v1409 = vsel %vm1281, 1, 0
      %v1410 = vsel %vm1282, 1, 0
      %v1411 = vsel %vm1283, 1, 0
      %v1412 = vsel %vm1284, 1, 0
      %v1413 = vsel %vm1285, 1, 0
      %v1414 = vsel %vm1286, 1, 0
      %v1415 = vsel %vm1287, 1, 0
      %v1416 = vsel %vm1288, 1, 0
      %v1417 = vcvt.s32.f32 %v1289
      %v1418 = vcvt.s32.f32 %v1290
      %v1419 = vcvt.s32.f32 %v1291
      %v1420 = vcvt.s32.f32 %v1292
      %v1421 = vcvt.s32.f32 %v1293
      %v1422 = vcvt.s32.f32 %v1294
      %v1423 = vcvt.s32.f32 %v1295
      %v1424 = vcvt.s32.f32 %v1296
      %v1425 = vcvt.s32.f32 %v1297
      %v1426 = vcvt.s32.f32 %v1298
      %v1427 = vcvt.s32.f32 %v1299
      %v1428 = vcvt.s32.f32 %v1300
      %v1429 = vcvt.s32.f32 %v1301
      %v1430 = vcvt.s32.f32 %v1302
      %v1431 = vcvt.s32.f32 %v1303
      %v1432 = vcvt.s32.f32 %v1304
      %v1433 = vcvt.s32.f32 %v1305
      %v1434 = vcvt.s32.f32 %v1306
      %v1435 = vcvt.s32.f32 %v1307
      %v1436 = vcvt.s32.f32 %v1308
      %v1437 = vcvt.s32.f32 %v1309
      %v1438 = vcvt.s32.f32 %v1310
      %v1439 = vcvt.s32.f32 %v1311
      %v1440 = vcvt.s32.f32 %v1312
      %v1441 = vcvt.s32.f32 %v1313
      %v1442 = vcvt.s32.f32 %v1314
      %v1443 = vcvt.s32.f32 %v1315
      %v1444 = vcvt.s32.f32 %v1316
      %v1445 = vcvt.s32.f32 %v1317
      %v1446 = vcvt.s32.f32 %v1318
      %v1447 = vcvt.s32.f32 %v1319
      %v1448 = vcvt.s32.f32 %v1320
      %v1449 = vcvt.s32.f32 %v1321
      %v1450 = vcvt.s32.f32 %v1322
      %v1451 = vcvt.s32.f32 %v1323
      %v1452 = vcvt.s32.f32 %v1324
      %v1453 = vcvt.s32.f32 %v1325
      %v1454 = vcvt.s32.f32 %v1326
      %v1455 = vcvt.s32.f32 %v1327
      %v1456 = vcvt.s32.f32 %v1328
      %v1457 = vcvt.s32.f32 %v1329
      %v1458 = vcvt.s32.f32 %v1330
      %v1459 = vcvt.s32.f32 %v1331
      %v1460 = vcvt.s32.f32 %v1332
      %v1461 = vcvt.s32.f32 %v1333
      %v1462 = vcvt.s32.f32 %v1334
      %v1463 = vcvt.s32.f32 %v1335
      %v1464 = vcvt.s32.f32 %v1336
      %v1465 = vcvt.s32.f32 %v1337
      %v1466 = vcvt.s32.f32 %v1338
      %v1467 = vcvt.s32.f32 %v1339
      %v1468 = vcvt.s32.f32 %v1340
      %v1469 = vcvt.s32.f32 %v1341
      %v1470 = vcvt.s32.f32 %v1342
      %v1471 = vcvt.s32.f32 %v1343
      %v1472 = vcvt.s32.f32 %v1344
      %v1473 = vcvt.s32.f32 %v1345
      %v1474 = vcvt.s32.f32 %v1346
      %v1475 = vcvt.s32.f32 %v1347
      %v1476 = vcvt.s32.f32 %v1348
      %v1477 = vcvt.s32.f32 %v1349
      %v1478 = vcvt.s32.f32 %v1350
      %v1479 = vcvt.s32.f32 %v1351
      %v1480 = vcvt.s32.f32 %v1352
      %v1481 = vcvt.s32.f32 %v1353
      %v1482 = vcvt.s32.f32 %v1354
      %v1483 = vcvt.s32.f32 %v1355
      %v1484 = vcvt.s32.f32 %v1356
      %v1485 = vcvt.s32.f32 %v1357
      %v1486 = vcvt.s32.f32 %v1358
      %v1487 = vcvt.s32.f32 %v1359
      %v1488 = vcvt.s32.f32 %v1360
      %v1489 = vcvt.s32.f32 %v1361
      %v1490 = vcvt.s32.f32 %v1362
      %v1491 = vcvt.s32.f32 %v1363
      %v1492 = vcvt.s32.f32 %v1364
      %v1493 = vcvt.s32.f32 %v1365
      %v1494 = vcvt.s32.f32 %v1366
      %v1495 = vcvt.s32.f32 %v1367
      %v1496 = vcvt.s32.f32 %v1368
      %v1497 = vcvt.s32.f32 %v1369
      %v1498 = vcvt.s32.f32 %v1370
      %v1499 = vcvt.s32.f32 %v1371
      %v1500 = vcvt.s32.f32 %v1372
      %v1501 = vcvt.s32.f32 %v1373
      %v1502 = vcvt.s32.f32 %v1374
      %v1503 = vcvt.s32.f32 %v1375
      %v1504 = vcvt.s32.f32 %v1376
      %v1505 = vcvt.s32.f32 %v1377
      %v1506 = vcvt.s32.f32 %v1378
      %v1507 = vcvt.s32.f32 %v1379
      %v1508 = vcvt.s32.f32 %v1380
      %v1509 = vcvt.s32.f32 %v1381
      %v1510 = vcvt.s32.f32 %v1382
      %v1511 = vcvt.s32.f32 %v1383
      %v1512 = vcvt.s32.f32 %v1384
      %v1513 = vcvt.s32.f32 %v1385
      %v1514 = vcvt.s32.f32 %v1386
      %v1515 = vcvt.s32.f32 %v1387
      %v1516 = vcvt.s32.f32 %v1388
      %v1517 = vcvt.s32.f32 %v1389
      %v1518 = vcvt.s32.f32 %v1390
      %v1519 = vcvt.s32.f32 %v1391
      %v1520 = vcvt.s32.f32 %v1392
      %v1521 = vcvt.s32.f32 %v1393
      %v1522 = vcvt.s32.f32 %v1394
      %v1523 = vcvt.s32.f32 %v1395
      %v1524 = vcvt.s32.f32 %v1396
      %v1525 = vcvt.s32.f32 %v1397
      %v1526 = vcvt.s32.f32 %v1398
      %v1527 = vcvt.s32.f32 %v1399
      %v1528 = vcvt.s32.f32 %v1400
      %v1529 = vcvt.s32.f32 %v1401
      %v1530 = vcvt.s32.f32 %v1402
      %v1531 = vcvt.s32.f32 %v1403
      %v1532 = vcvt.s32.f32 %v1404
      %v1533 = vcvt.s32.f32 %v1405
      %v1534 = vcvt.s32.f32 %v1406
      %v1535 = vcvt.s32.f32 %v1407
      %v1536 = vcvt.s32.f32 %v1408
      %v1537 = vcvt.s32.f32 %v1409
      %v1538 = vcvt.s32.f32 %v1410
      %v1539 = vcvt.s32.f32 %v1411
      %v1540 = vcvt.s32.f32 %v1412
      %v1541 = vcvt.s32.f32 %v1413
      %v1542 = vcvt.s32.f32 %v1414
      %v1543 = vcvt.s32.f32 %v1415
      %v1544 = vcvt.s32.f32 %v1416
      %s1545 = scalar_lea.vmem %s187, 2
      %v1546 = vld [vmem:[%s1545] sm:$0x3]
      %v1547 = vlaneseq
      %v1548 = vshrl.u32 %v1547, 7
      %v1549 = vsub.s32 0, %v1548
      %v1550 = vrot.slane %v1546, %v1549
      %v1551 = vlaneseq
      %v1552 = vshrl.u32 %v1551, 7
      %v1553 = vsub.s32 1, %v1552
      %v1554 = vrot.slane %v1546, %v1553
      %v1555 = vsel %vm238, %v1550, 0
      %v1556 = vsel %vm239, %v1554, 0
      %v1557 = vsel %vm240, %v1550, 0
      %v1558 = vsel %vm241, %v1554, 0
      %v1559 = vsel %vm242, %v1550, 0
      %v1560 = vsel %vm243, %v1554, 0
      %v1561 = vsel %vm244, %v1550, 0
      %v1562 = vsel %vm245, %v1554, 0
      %v1563 = vsel %vm246, %v1550, 0
      %v1564 = vsel %vm247, %v1554, 0
      %v1565 = vsel %vm248, %v1550, 0
      %v1566 = vsel %vm249, %v1554, 0
      %v1567 = vsel %vm250, %v1550, 0
      %v1568 = vsel %vm251, %v1554, 0
      %v1569 = vsel %vm252, %v1550, 0
      %v1570 = vsel %vm253, %v1554, 0
      %v1571 = vsel %vm254, %v1550, 0
      %v1572 = vsel %vm255, %v1554, 0
      %v1573 = vsel %vm256, %v1550, 0
      %v1574 = vsel %vm257, %v1554, 0
      %v1575 = vsel %vm258, %v1550, 0
      %v1576 = vsel %vm259, %v1554, 0
      %v1577 = vsel %vm260, %v1550, 0
      %v1578 = vsel %vm261, %v1554, 0
      %v1579 = vsel %vm262, %v1550, 0
      %v1580 = vsel %vm263, %v1554, 0
      %v1581 = vsel %vm264, %v1550, 0
      %v1582 = vsel %vm265, %v1554, 0
      %v1583 = vsel %vm266, %v1550, 0
      %v1584 = vsel %vm267, %v1554, 0
      %v1585 = vsel %vm268, %v1550, 0
      %v1586 = vsel %vm269, %v1554, 0
      %v1587 = vsel %vm270, %v1550, 0
      %v1588 = vsel %vm271, %v1554, 0
      %v1589 = vsel %vm272, %v1550, 0
      %v1590 = vsel %vm273, %v1554, 0
      %v1591 = vsel %vm274, %v1550, 0
      %v1592 = vsel %vm275, %v1554, 0
      %v1593 = vsel %vm276, %v1550, 0
      %v1594 = vsel %vm277, %v1554, 0
      %v1595 = vsel %vm278, %v1550, 0
      %v1596 = vsel %vm279, %v1554, 0
      %v1597 = vsel %vm280, %v1550, 0
      %v1598 = vsel %vm281, %v1554, 0
      %v1599 = vsel %vm282, %v1550, 0
      %v1600 = vsel %vm283, %v1554, 0
      %v1601 = vsel %vm284, %v1550, 0
      %v1602 = vsel %vm285, %v1554, 0
      %v1603 = vsel %vm286, %v1550, 0
      %v1604 = vsel %vm287, %v1554, 0
      %v1605 = vsel %vm288, %v1550, 0
      %v1606 = vsel %vm289, %v1554, 0
      %v1607 = vsel %vm290, %v1550, 0
      %v1608 = vsel %vm291, %v1554, 0
      %v1609 = vsel %vm292, %v1550, 0
      %v1610 = vsel %vm293, %v1554, 0
      %v1611 = vsel %vm294, %v1550, 0
      %v1612 = vsel %vm295, %v1554, 0
      %v1613 = vsel %vm296, %v1550, 0
      %v1614 = vsel %vm297, %v1554, 0
      %v1615 = vsel %vm298, %v1550, 0
      %v1616 = vsel %vm299, %v1554, 0
      %v1617 = vsel %vm300, %v1550, 0
      %v1618 = vsel %vm301, %v1554, 0
      %v1619 = vadd.s32 %v1555, %v1556
      %v1620 = vand.u32 %v1619, 65535
      %v1621 = vshrl.u32 %v1619, 16
      %v1622 = vcvt.s32.f32 %v1620
      %v1623 = vcvt.s32.f32 %v1621
      %1624 = vadd.xlane.f32.xlu0 %v1622
      %v1625 = vpop.xlane.xlu0 %1624
      %1626 = vadd.xlane.f32.xlu0 %v1623
      %v1627 = vpop.xlane.xlu0 %1626
      %v1628 = vcvt.f32.s32 %v1625
      %v1629 = vcvt.f32.s32 %v1627
      %v1630 = vshll.u32 %v1629, 16
      %v1631 = vadd.s32 %v1630, %v1628
      %v1632 = vadd.s32 %v1557, %v1558
      %v1633 = vand.u32 %v1632, 65535
      %v1634 = vshrl.u32 %v1632, 16
      %v1635 = vcvt.s32.f32 %v1633
      %v1636 = vcvt.s32.f32 %v1634
      %1637 = vadd.xlane.f32.xlu0 %v1635
      %v1638 = vpop.xlane.xlu0 %1637
      %1639 = vadd.xlane.f32.xlu0 %v1636
      %v1640 = vpop.xlane.xlu0 %1639
      %v1641 = vcvt.f32.s32 %v1638
      %v1642 = vcvt.f32.s32 %v1640
      %v1643 = vshll.u32 %v1642, 16
      %v1644 = vadd.s32 %v1643, %v1641
      %v1645 = vadd.s32 %v1559, %v1560
      %v1646 = vand.u32 %v1645, 65535
      %v1647 = vshrl.u32 %v1645, 16
      %v1648 = vcvt.s32.f32 %v1646
      %v1649 = vcvt.s32.f32 %v1647
      %1650 = vadd.xlane.f32.xlu0 %v1648
      %v1651 = vpop.xlane.xlu0 %1650
      %1652 = vadd.xlane.f32.xlu0 %v1649
      %v1653 = vpop.xlane.xlu0 %1652
      %v1654 = vcvt.f32.s32 %v1651
      %v1655 = vcvt.f32.s32 %v1653
      %v1656 = vshll.u32 %v1655, 16
      %v1657 = vadd.s32 %v1656, %v1654
      %v1658 = vadd.s32 %v1561, %v1562
      %v1659 = vand.u32 %v1658, 65535
      %v1660 = vshrl.u32 %v1658, 16
      %v1661 = vcvt.s32.f32 %v1659
      %v1662 = vcvt.s32.f32 %v1660
      %1663 = vadd.xlane.f32.xlu0 %v1661
      %v1664 = vpop.xlane.xlu0 %1663
      %1665 = vadd.xlane.f32.xlu0 %v1662
      %v1666 = vpop.xlane.xlu0 %1665
      %v1667 = vcvt.f32.s32 %v1664
      %v1668 = vcvt.f32.s32 %v1666
      %v1669 = vshll.u32 %v1668, 16
      %v1670 = vadd.s32 %v1669, %v1667
      %v1671 = vadd.s32 %v1563, %v1564
      %v1672 = vand.u32 %v1671, 65535
      %v1673 = vshrl.u32 %v1671, 16
      %v1674 = vcvt.s32.f32 %v1672
      %v1675 = vcvt.s32.f32 %v1673
      %1676 = vadd.xlane.f32.xlu0 %v1674
      %v1677 = vpop.xlane.xlu0 %1676
      %1678 = vadd.xlane.f32.xlu0 %v1675
      %v1679 = vpop.xlane.xlu0 %1678
      %v1680 = vcvt.f32.s32 %v1677
      %v1681 = vcvt.f32.s32 %v1679
      %v1682 = vshll.u32 %v1681, 16
      %v1683 = vadd.s32 %v1682, %v1680
      %v1684 = vadd.s32 %v1565, %v1566
      %v1685 = vand.u32 %v1684, 65535
      %v1686 = vshrl.u32 %v1684, 16
      %v1687 = vcvt.s32.f32 %v1685
      %v1688 = vcvt.s32.f32 %v1686
      %1689 = vadd.xlane.f32.xlu0 %v1687
      %v1690 = vpop.xlane.xlu0 %1689
      %1691 = vadd.xlane.f32.xlu0 %v1688
      %v1692 = vpop.xlane.xlu0 %1691
      %v1693 = vcvt.f32.s32 %v1690
      %v1694 = vcvt.f32.s32 %v1692
      %v1695 = vshll.u32 %v1694, 16
      %v1696 = vadd.s32 %v1695, %v1693
      %v1697 = vadd.s32 %v1567, %v1568
      %v1698 = vand.u32 %v1697, 65535
      %v1699 = vshrl.u32 %v1697, 16
      %v1700 = vcvt.s32.f32 %v1698
      %v1701 = vcvt.s32.f32 %v1699
      %1702 = vadd.xlane.f32.xlu0 %v1700
      %v1703 = vpop.xlane.xlu0 %1702
      %1704 = vadd.xlane.f32.xlu0 %v1701
      %v1705 = vpop.xlane.xlu0 %1704
      %v1706 = vcvt.f32.s32 %v1703
      %v1707 = vcvt.f32.s32 %v1705
      %v1708 = vshll.u32 %v1707, 16
      %v1709 = vadd.s32 %v1708, %v1706
      %v1710 = vadd.s32 %v1569, %v1570
      %v1711 = vand.u32 %v1710, 65535
      %v1712 = vshrl.u32 %v1710, 16
      %v1713 = vcvt.s32.f32 %v1711
      %v1714 = vcvt.s32.f32 %v1712
      %1715 = vadd.xlane.f32.xlu0 %v1713
      %v1716 = vpop.xlane.xlu0 %1715
      %1717 = vadd.xlane.f32.xlu0 %v1714
      %v1718 = vpop.xlane.xlu0 %1717
      %v1719 = vcvt.f32.s32 %v1716
      %v1720 = vcvt.f32.s32 %v1718
      %v1721 = vshll.u32 %v1720, 16
      %v1722 = vadd.s32 %v1721, %v1719
      %v1723 = vadd.s32 %v1571, %v1572
      %v1724 = vand.u32 %v1723, 65535
      %v1725 = vshrl.u32 %v1723, 16
      %v1726 = vcvt.s32.f32 %v1724
      %v1727 = vcvt.s32.f32 %v1725
      %1728 = vadd.xlane.f32.xlu0 %v1726
      %v1729 = vpop.xlane.xlu0 %1728
      %1730 = vadd.xlane.f32.xlu0 %v1727
      %v1731 = vpop.xlane.xlu0 %1730
      %v1732 = vcvt.f32.s32 %v1729
      %v1733 = vcvt.f32.s32 %v1731
      %v1734 = vshll.u32 %v1733, 16
      %v1735 = vadd.s32 %v1734, %v1732
      %v1736 = vadd.s32 %v1573, %v1574
      %v1737 = vand.u32 %v1736, 65535
      %v1738 = vshrl.u32 %v1736, 16
      %v1739 = vcvt.s32.f32 %v1737
      %v1740 = vcvt.s32.f32 %v1738
      %1741 = vadd.xlane.f32.xlu0 %v1739
      %v1742 = vpop.xlane.xlu0 %1741
      %1743 = vadd.xlane.f32.xlu0 %v1740
      %v1744 = vpop.xlane.xlu0 %1743
      %v1745 = vcvt.f32.s32 %v1742
      %v1746 = vcvt.f32.s32 %v1744
      %v1747 = vshll.u32 %v1746, 16
      %v1748 = vadd.s32 %v1747, %v1745
      %v1749 = vadd.s32 %v1575, %v1576
      %v1750 = vand.u32 %v1749, 65535
      %v1751 = vshrl.u32 %v1749, 16
      %v1752 = vcvt.s32.f32 %v1750
      %v1753 = vcvt.s32.f32 %v1751
      %1754 = vadd.xlane.f32.xlu0 %v1752
      %v1755 = vpop.xlane.xlu0 %1754
      %1756 = vadd.xlane.f32.xlu0 %v1753
      %v1757 = vpop.xlane.xlu0 %1756
      %v1758 = vcvt.f32.s32 %v1755
      %v1759 = vcvt.f32.s32 %v1757
      %v1760 = vshll.u32 %v1759, 16
      %v1761 = vadd.s32 %v1760, %v1758
      %v1762 = vadd.s32 %v1577, %v1578
      %v1763 = vand.u32 %v1762, 65535
      %v1764 = vshrl.u32 %v1762, 16
      %v1765 = vcvt.s32.f32 %v1763
      %v1766 = vcvt.s32.f32 %v1764
      %1767 = vadd.xlane.f32.xlu0 %v1765
      %v1768 = vpop.xlane.xlu0 %1767
      %1769 = vadd.xlane.f32.xlu0 %v1766
      %v1770 = vpop.xlane.xlu0 %1769
      %v1771 = vcvt.f32.s32 %v1768
      %v1772 = vcvt.f32.s32 %v1770
      %v1773 = vshll.u32 %v1772, 16
      %v1774 = vadd.s32 %v1773, %v1771
      %v1775 = vadd.s32 %v1579, %v1580
      %v1776 = vand.u32 %v1775, 65535
      %v1777 = vshrl.u32 %v1775, 16
      %v1778 = vcvt.s32.f32 %v1776
      %v1779 = vcvt.s32.f32 %v1777
      %1780 = vadd.xlane.f32.xlu0 %v1778
      %v1781 = vpop.xlane.xlu0 %1780
      %1782 = vadd.xlane.f32.xlu0 %v1779
      %v1783 = vpop.xlane.xlu0 %1782
      %v1784 = vcvt.f32.s32 %v1781
      %v1785 = vcvt.f32.s32 %v1783
      %v1786 = vshll.u32 %v1785, 16
      %v1787 = vadd.s32 %v1786, %v1784
      %v1788 = vadd.s32 %v1581, %v1582
      %v1789 = vand.u32 %v1788, 65535
      %v1790 = vshrl.u32 %v1788, 16
      %v1791 = vcvt.s32.f32 %v1789
      %v1792 = vcvt.s32.f32 %v1790
      %1793 = vadd.xlane.f32.xlu0 %v1791
      %v1794 = vpop.xlane.xlu0 %1793
      %1795 = vadd.xlane.f32.xlu0 %v1792
      %v1796 = vpop.xlane.xlu0 %1795
      %v1797 = vcvt.f32.s32 %v1794
      %v1798 = vcvt.f32.s32 %v1796
      %v1799 = vshll.u32 %v1798, 16
      %v1800 = vadd.s32 %v1799, %v1797
      %v1801 = vadd.s32 %v1583, %v1584
      %v1802 = vand.u32 %v1801, 65535
      %v1803 = vshrl.u32 %v1801, 16
      %v1804 = vcvt.s32.f32 %v1802
      %v1805 = vcvt.s32.f32 %v1803
      %1806 = vadd.xlane.f32.xlu0 %v1804
      %v1807 = vpop.xlane.xlu0 %1806
      %1808 = vadd.xlane.f32.xlu0 %v1805
      %v1809 = vpop.xlane.xlu0 %1808
      %v1810 = vcvt.f32.s32 %v1807
      %v1811 = vcvt.f32.s32 %v1809
      %v1812 = vshll.u32 %v1811, 16
      %v1813 = vadd.s32 %v1812, %v1810
      %v1814 = vadd.s32 %v1585, %v1586
      %v1815 = vand.u32 %v1814, 65535
      %v1816 = vshrl.u32 %v1814, 16
      %v1817 = vcvt.s32.f32 %v1815
      %v1818 = vcvt.s32.f32 %v1816
      %1819 = vadd.xlane.f32.xlu0 %v1817
      %v1820 = vpop.xlane.xlu0 %1819
      %1821 = vadd.xlane.f32.xlu0 %v1818
      %v1822 = vpop.xlane.xlu0 %1821
      %v1823 = vcvt.f32.s32 %v1820
      %v1824 = vcvt.f32.s32 %v1822
      %v1825 = vshll.u32 %v1824, 16
      %v1826 = vadd.s32 %v1825, %v1823
      %v1827 = vadd.s32 %v1587, %v1588
      %v1828 = vand.u32 %v1827, 65535
      %v1829 = vshrl.u32 %v1827, 16
      %v1830 = vcvt.s32.f32 %v1828
      %v1831 = vcvt.s32.f32 %v1829
      %1832 = vadd.xlane.f32.xlu0 %v1830
      %v1833 = vpop.xlane.xlu0 %1832
      %1834 = vadd.xlane.f32.xlu0 %v1831
      %v1835 = vpop.xlane.xlu0 %1834
      %v1836 = vcvt.f32.s32 %v1833
      %v1837 = vcvt.f32.s32 %v1835
      %v1838 = vshll.u32 %v1837, 16
      %v1839 = vadd.s32 %v1838, %v1836
      %v1840 = vadd.s32 %v1589, %v1590
      %v1841 = vand.u32 %v1840, 65535
      %v1842 = vshrl.u32 %v1840, 16
      %v1843 = vcvt.s32.f32 %v1841
      %v1844 = vcvt.s32.f32 %v1842
      %1845 = vadd.xlane.f32.xlu0 %v1843
      %v1846 = vpop.xlane.xlu0 %1845
      %1847 = vadd.xlane.f32.xlu0 %v1844
      %v1848 = vpop.xlane.xlu0 %1847
      %v1849 = vcvt.f32.s32 %v1846
      %v1850 = vcvt.f32.s32 %v1848
      %v1851 = vshll.u32 %v1850, 16
      %v1852 = vadd.s32 %v1851, %v1849
      %v1853 = vadd.s32 %v1591, %v1592
      %v1854 = vand.u32 %v1853, 65535
      %v1855 = vshrl.u32 %v1853, 16
      %v1856 = vcvt.s32.f32 %v1854
      %v1857 = vcvt.s32.f32 %v1855
      %1858 = vadd.xlane.f32.xlu0 %v1856
      %v1859 = vpop.xlane.xlu0 %1858
      %1860 = vadd.xlane.f32.xlu0 %v1857
      %v1861 = vpop.xlane.xlu0 %1860
      %v1862 = vcvt.f32.s32 %v1859
      %v1863 = vcvt.f32.s32 %v1861
      %v1864 = vshll.u32 %v1863, 16
      %v1865 = vadd.s32 %v1864, %v1862
      %v1866 = vadd.s32 %v1593, %v1594
      %v1867 = vand.u32 %v1866, 65535
      %v1868 = vshrl.u32 %v1866, 16
      %v1869 = vcvt.s32.f32 %v1867
      %v1870 = vcvt.s32.f32 %v1868
      %1871 = vadd.xlane.f32.xlu0 %v1869
      %v1872 = vpop.xlane.xlu0 %1871
      %1873 = vadd.xlane.f32.xlu0 %v1870
      %v1874 = vpop.xlane.xlu0 %1873
      %v1875 = vcvt.f32.s32 %v1872
      %v1876 = vcvt.f32.s32 %v1874
      %v1877 = vshll.u32 %v1876, 16
      %v1878 = vadd.s32 %v1877, %v1875
      %v1879 = vadd.s32 %v1595, %v1596
      %v1880 = vand.u32 %v1879, 65535
      %v1881 = vshrl.u32 %v1879, 16
      %v1882 = vcvt.s32.f32 %v1880
      %v1883 = vcvt.s32.f32 %v1881
      %1884 = vadd.xlane.f32.xlu0 %v1882
      %v1885 = vpop.xlane.xlu0 %1884
      %1886 = vadd.xlane.f32.xlu0 %v1883
      %v1887 = vpop.xlane.xlu0 %1886
      %v1888 = vcvt.f32.s32 %v1885
      %v1889 = vcvt.f32.s32 %v1887
      %v1890 = vshll.u32 %v1889, 16
      %v1891 = vadd.s32 %v1890, %v1888
      %v1892 = vadd.s32 %v1597, %v1598
      %v1893 = vand.u32 %v1892, 65535
      %v1894 = vshrl.u32 %v1892, 16
      %v1895 = vcvt.s32.f32 %v1893
      %v1896 = vcvt.s32.f32 %v1894
      %1897 = vadd.xlane.f32.xlu0 %v1895
      %v1898 = vpop.xlane.xlu0 %1897
      %1899 = vadd.xlane.f32.xlu0 %v1896
      %v1900 = vpop.xlane.xlu0 %1899
      %v1901 = vcvt.f32.s32 %v1898
      %v1902 = vcvt.f32.s32 %v1900
      %v1903 = vshll.u32 %v1902, 16
      %v1904 = vadd.s32 %v1903, %v1901
      %v1905 = vadd.s32 %v1599, %v1600
      %v1906 = vand.u32 %v1905, 65535
      %v1907 = vshrl.u32 %v1905, 16
      %v1908 = vcvt.s32.f32 %v1906
      %v1909 = vcvt.s32.f32 %v1907
      %1910 = vadd.xlane.f32.xlu0 %v1908
      %v1911 = vpop.xlane.xlu0 %1910
      %1912 = vadd.xlane.f32.xlu0 %v1909
      %v1913 = vpop.xlane.xlu0 %1912
      %v1914 = vcvt.f32.s32 %v1911
      %v1915 = vcvt.f32.s32 %v1913
      %v1916 = vshll.u32 %v1915, 16
      %v1917 = vadd.s32 %v1916, %v1914
      %v1918 = vadd.s32 %v1601, %v1602
      %v1919 = vand.u32 %v1918, 65535
      %v1920 = vshrl.u32 %v1918, 16
      %v1921 = vcvt.s32.f32 %v1919
      %v1922 = vcvt.s32.f32 %v1920
      %1923 = vadd.xlane.f32.xlu0 %v1921
      %v1924 = vpop.xlane.xlu0 %1923
      %1925 = vadd.xlane.f32.xlu0 %v1922
      %v1926 = vpop.xlane.xlu0 %1925
      %v1927 = vcvt.f32.s32 %v1924
      %v1928 = vcvt.f32.s32 %v1926
      %v1929 = vshll.u32 %v1928, 16
      %v1930 = vadd.s32 %v1929, %v1927
      %v1931 = vadd.s32 %v1603, %v1604
      %v1932 = vand.u32 %v1931, 65535
      %v1933 = vshrl.u32 %v1931, 16
      %v1934 = vcvt.s32.f32 %v1932
      %v1935 = vcvt.s32.f32 %v1933
      %1936 = vadd.xlane.f32.xlu0 %v1934
      %v1937 = vpop.xlane.xlu0 %1936
      %1938 = vadd.xlane.f32.xlu0 %v1935
      %v1939 = vpop.xlane.xlu0 %1938
      %v1940 = vcvt.f32.s32 %v1937
      %v1941 = vcvt.f32.s32 %v1939
      %v1942 = vshll.u32 %v1941, 16
      %v1943 = vadd.s32 %v1942, %v1940
      %v1944 = vadd.s32 %v1605, %v1606
      %v1945 = vand.u32 %v1944, 65535
      %v1946 = vshrl.u32 %v1944, 16
      %v1947 = vcvt.s32.f32 %v1945
      %v1948 = vcvt.s32.f32 %v1946
      %1949 = vadd.xlane.f32.xlu0 %v1947
      %v1950 = vpop.xlane.xlu0 %1949
      %1951 = vadd.xlane.f32.xlu0 %v1948
      %v1952 = vpop.xlane.xlu0 %1951
      %v1953 = vcvt.f32.s32 %v1950
      %v1954 = vcvt.f32.s32 %v1952
      %v1955 = vshll.u32 %v1954, 16
      %v1956 = vadd.s32 %v1955, %v1953
      %v1957 = vadd.s32 %v1607, %v1608
      %v1958 = vand.u32 %v1957, 65535
      %v1959 = vshrl.u32 %v1957, 16
      %v1960 = vcvt.s32.f32 %v1958
      %v1961 = vcvt.s32.f32 %v1959
      %1962 = vadd.xlane.f32.xlu0 %v1960
      %v1963 = vpop.xlane.xlu0 %1962
      %1964 = vadd.xlane.f32.xlu0 %v1961
      %v1965 = vpop.xlane.xlu0 %1964
      %v1966 = vcvt.f32.s32 %v1963
      %v1967 = vcvt.f32.s32 %v1965
      %v1968 = vshll.u32 %v1967, 16
      %v1969 = vadd.s32 %v1968, %v1966
      %v1970 = vadd.s32 %v1609, %v1610
      %v1971 = vand.u32 %v1970, 65535
      %v1972 = vshrl.u32 %v1970, 16
      %v1973 = vcvt.s32.f32 %v1971
      %v1974 = vcvt.s32.f32 %v1972
      %1975 = vadd.xlane.f32.xlu0 %v1973
      %v1976 = vpop.xlane.xlu0 %1975
      %1977 = vadd.xlane.f32.xlu0 %v1974
      %v1978 = vpop.xlane.xlu0 %1977
      %v1979 = vcvt.f32.s32 %v1976
      %v1980 = vcvt.f32.s32 %v1978
      %v1981 = vshll.u32 %v1980, 16
      %v1982 = vadd.s32 %v1981, %v1979
      %v1983 = vadd.s32 %v1611, %v1612
      %v1984 = vand.u32 %v1983, 65535
      %v1985 = vshrl.u32 %v1983, 16
      %v1986 = vcvt.s32.f32 %v1984
      %v1987 = vcvt.s32.f32 %v1985
      %1988 = vadd.xlane.f32.xlu0 %v1986
      %v1989 = vpop.xlane.xlu0 %1988
      %1990 = vadd.xlane.f32.xlu0 %v1987
      %v1991 = vpop.xlane.xlu0 %1990
      %v1992 = vcvt.f32.s32 %v1989
      %v1993 = vcvt.f32.s32 %v1991
      %v1994 = vshll.u32 %v1993, 16
      %v1995 = vadd.s32 %v1994, %v1992
      %v1996 = vadd.s32 %v1613, %v1614
      %v1997 = vand.u32 %v1996, 65535
      %v1998 = vshrl.u32 %v1996, 16
      %v1999 = vcvt.s32.f32 %v1997
      %v2000 = vcvt.s32.f32 %v1998
      %2001 = vadd.xlane.f32.xlu0 %v1999
      %v2002 = vpop.xlane.xlu0 %2001
      %2003 = vadd.xlane.f32.xlu0 %v2000
      %v2004 = vpop.xlane.xlu0 %2003
      %v2005 = vcvt.f32.s32 %v2002
      %v2006 = vcvt.f32.s32 %v2004
      %v2007 = vshll.u32 %v2006, 16
      %v2008 = vadd.s32 %v2007, %v2005
      %v2009 = vadd.s32 %v1615, %v1616
      %v2010 = vand.u32 %v2009, 65535
      %v2011 = vshrl.u32 %v2009, 16
      %v2012 = vcvt.s32.f32 %v2010
      %v2013 = vcvt.s32.f32 %v2011
      %2014 = vadd.xlane.f32.xlu0 %v2012
      %v2015 = vpop.xlane.xlu0 %2014
      %2016 = vadd.xlane.f32.xlu0 %v2013
      %v2017 = vpop.xlane.xlu0 %2016
      %v2018 = vcvt.f32.s32 %v2015
      %v2019 = vcvt.f32.s32 %v2017
      %v2020 = vshll.u32 %v2019, 16
      %v2021 = vadd.s32 %v2020, %v2018
      %v2022 = vadd.s32 %v1617, %v1618
      %v2023 = vand.u32 %v2022, 65535
      %v2024 = vshrl.u32 %v2022, 16
      %v2025 = vcvt.s32.f32 %v2023
      %v2026 = vcvt.s32.f32 %v2024
      %2027 = vadd.xlane.f32.xlu0 %v2025
      %v2028 = vpop.xlane.xlu0 %2027
      %2029 = vadd.xlane.f32.xlu0 %v2026
      %v2030 = vpop.xlane.xlu0 %2029
      %v2031 = vcvt.f32.s32 %v2028
      %v2032 = vcvt.f32.s32 %v2030
      %v2033 = vshll.u32 %v2032, 16
      %v2034 = vadd.s32 %v2033, %v2031
      %v2035 = vstv 256
      %v2036 = vadd.s32 %v206, %v2035
      %v2037 = vadd.s32 %v207, %v2035
      %v2038 = vadd.s32 %v208, %v2035
      %v2039 = vadd.s32 %v209, %v2035
      %v2040 = vadd.s32 %v210, %v2035
      %v2041 = vadd.s32 %v211, %v2035
      %v2042 = vadd.s32 %v212, %v2035
      %v2043 = vadd.s32 %v213, %v2035
      %v2044 = vadd.s32 %v214, %v2035
      %v2045 = vadd.s32 %v215, %v2035
      %v2046 = vadd.s32 %v216, %v2035
      %v2047 = vadd.s32 %v217, %v2035
      %v2048 = vadd.s32 %v218, %v2035
      %v2049 = vadd.s32 %v219, %v2035
      %v2050 = vadd.s32 %v220, %v2035
      %v2051 = vadd.s32 %v221, %v2035
      %v2052 = vadd.s32 %v222, %v2035
      %v2053 = vadd.s32 %v223, %v2035
      %v2054 = vadd.s32 %v224, %v2035
      %v2055 = vadd.s32 %v225, %v2035
      %v2056 = vadd.s32 %v226, %v2035
      %v2057 = vadd.s32 %v227, %v2035
      %v2058 = vadd.s32 %v228, %v2035
      %v2059 = vadd.s32 %v229, %v2035
      %v2060 = vadd.s32 %v230, %v2035
      %v2061 = vadd.s32 %v231, %v2035
      %v2062 = vadd.s32 %v232, %v2035
      %v2063 = vadd.s32 %v233, %v2035
      %v2064 = vadd.s32 %v234, %v2035
      %v2065 = vadd.s32 %v235, %v2035
      %v2066 = vadd.s32 %v236, %v2035
      %v2067 = vadd.s32 %v237, %v2035
      %vm2068 = vcmp.eq.s32.totalorder %v1631, %v892
      %vm2069 = vcmp.eq.s32.totalorder %v1631, %v896
      %vm2070 = vcmp.eq.s32.totalorder %v1631, %v900
      %vm2071 = vcmp.eq.s32.totalorder %v1631, %v904
      %vm2072 = vcmp.eq.s32.totalorder %v1644, %v892
      %vm2073 = vcmp.eq.s32.totalorder %v1644, %v896
      %vm2074 = vcmp.eq.s32.totalorder %v1644, %v900
      %vm2075 = vcmp.eq.s32.totalorder %v1644, %v904
      %vm2076 = vcmp.eq.s32.totalorder %v1657, %v892
      %vm2077 = vcmp.eq.s32.totalorder %v1657, %v896
      %vm2078 = vcmp.eq.s32.totalorder %v1657, %v900
      %vm2079 = vcmp.eq.s32.totalorder %v1657, %v904
      %vm2080 = vcmp.eq.s32.totalorder %v1670, %v892
      %vm2081 = vcmp.eq.s32.totalorder %v1670, %v896
      %vm2082 = vcmp.eq.s32.totalorder %v1670, %v900
      %vm2083 = vcmp.eq.s32.totalorder %v1670, %v904
      %vm2084 = vcmp.eq.s32.totalorder %v1683, %v892
      %vm2085 = vcmp.eq.s32.totalorder %v1683, %v896
      %vm2086 = vcmp.eq.s32.totalorder %v1683, %v900
      %vm2087 = vcmp.eq.s32.totalorder %v1683, %v904
      %vm2088 = vcmp.eq.s32.totalorder %v1696, %v892
      %vm2089 = vcmp.eq.s32.totalorder %v1696, %v896
      %vm2090 = vcmp.eq.s32.totalorder %v1696, %v900
      %vm2091 = vcmp.eq.s32.totalorder %v1696, %v904
      %vm2092 = vcmp.eq.s32.totalorder %v1709, %v892
      %vm2093 = vcmp.eq.s32.totalorder %v1709, %v896
      %vm2094 = vcmp.eq.s32.totalorder %v1709, %v900
      %vm2095 = vcmp.eq.s32.totalorder %v1709, %v904
      %vm2096 = vcmp.eq.s32.totalorder %v1722, %v892
      %vm2097 = vcmp.eq.s32.totalorder %v1722, %v896
      %vm2098 = vcmp.eq.s32.totalorder %v1722, %v900
      %vm2099 = vcmp.eq.s32.totalorder %v1722, %v904
      %vm2100 = vcmp.eq.s32.totalorder %v1735, %v892
      %vm2101 = vcmp.eq.s32.totalorder %v1735, %v896
      %vm2102 = vcmp.eq.s32.totalorder %v1735, %v900
      %vm2103 = vcmp.eq.s32.totalorder %v1735, %v904
      %vm2104 = vcmp.eq.s32.totalorder %v1748, %v892
      %vm2105 = vcmp.eq.s32.totalorder %v1748, %v896
      %vm2106 = vcmp.eq.s32.totalorder %v1748, %v900
      %vm2107 = vcmp.eq.s32.totalorder %v1748, %v904
      %vm2108 = vcmp.eq.s32.totalorder %v1761, %v892
      %vm2109 = vcmp.eq.s32.totalorder %v1761, %v896
      %vm2110 = vcmp.eq.s32.totalorder %v1761, %v900
      %vm2111 = vcmp.eq.s32.totalorder %v1761, %v904
      %vm2112 = vcmp.eq.s32.totalorder %v1774, %v892
      %vm2113 = vcmp.eq.s32.totalorder %v1774, %v896
      %vm2114 = vcmp.eq.s32.totalorder %v1774, %v900
      %vm2115 = vcmp.eq.s32.totalorder %v1774, %v904
      %vm2116 = vcmp.eq.s32.totalorder %v1787, %v892
      %vm2117 = vcmp.eq.s32.totalorder %v1787, %v896
      %vm2118 = vcmp.eq.s32.totalorder %v1787, %v900
      %vm2119 = vcmp.eq.s32.totalorder %v1787, %v904
      %vm2120 = vcmp.eq.s32.totalorder %v1800, %v892
      %vm2121 = vcmp.eq.s32.totalorder %v1800, %v896
      %vm2122 = vcmp.eq.s32.totalorder %v1800, %v900
      %vm2123 = vcmp.eq.s32.totalorder %v1800, %v904
      %vm2124 = vcmp.eq.s32.totalorder %v1813, %v892
      %vm2125 = vcmp.eq.s32.totalorder %v1813, %v896
      %vm2126 = vcmp.eq.s32.totalorder %v1813, %v900
      %vm2127 = vcmp.eq.s32.totalorder %v1813, %v904
      %vm2128 = vcmp.eq.s32.totalorder %v1826, %v892
      %vm2129 = vcmp.eq.s32.totalorder %v1826, %v896
      %vm2130 = vcmp.eq.s32.totalorder %v1826, %v900
      %vm2131 = vcmp.eq.s32.totalorder %v1826, %v904
      %vm2132 = vcmp.eq.s32.totalorder %v1839, %v892
      %vm2133 = vcmp.eq.s32.totalorder %v1839, %v896
      %vm2134 = vcmp.eq.s32.totalorder %v1839, %v900
      %vm2135 = vcmp.eq.s32.totalorder %v1839, %v904
      %vm2136 = vcmp.eq.s32.totalorder %v1852, %v892
      %vm2137 = vcmp.eq.s32.totalorder %v1852, %v896
      %vm2138 = vcmp.eq.s32.totalorder %v1852, %v900
      %vm2139 = vcmp.eq.s32.totalorder %v1852, %v904
      %vm2140 = vcmp.eq.s32.totalorder %v1865, %v892
      %vm2141 = vcmp.eq.s32.totalorder %v1865, %v896
      %vm2142 = vcmp.eq.s32.totalorder %v1865, %v900
      %vm2143 = vcmp.eq.s32.totalorder %v1865, %v904
      %vm2144 = vcmp.eq.s32.totalorder %v1878, %v892
      %vm2145 = vcmp.eq.s32.totalorder %v1878, %v896
      %vm2146 = vcmp.eq.s32.totalorder %v1878, %v900
      %vm2147 = vcmp.eq.s32.totalorder %v1878, %v904
      %vm2148 = vcmp.eq.s32.totalorder %v1891, %v892
      %vm2149 = vcmp.eq.s32.totalorder %v1891, %v896
      %vm2150 = vcmp.eq.s32.totalorder %v1891, %v900
      %vm2151 = vcmp.eq.s32.totalorder %v1891, %v904
      %vm2152 = vcmp.eq.s32.totalorder %v1904, %v892
      %vm2153 = vcmp.eq.s32.totalorder %v1904, %v896
      %vm2154 = vcmp.eq.s32.totalorder %v1904, %v900
      %vm2155 = vcmp.eq.s32.totalorder %v1904, %v904
      %vm2156 = vcmp.eq.s32.totalorder %v1917, %v892
      %vm2157 = vcmp.eq.s32.totalorder %v1917, %v896
      %vm2158 = vcmp.eq.s32.totalorder %v1917, %v900
      %vm2159 = vcmp.eq.s32.totalorder %v1917, %v904
      %vm2160 = vcmp.eq.s32.totalorder %v1930, %v892
      %vm2161 = vcmp.eq.s32.totalorder %v1930, %v896
      %vm2162 = vcmp.eq.s32.totalorder %v1930, %v900
      %vm2163 = vcmp.eq.s32.totalorder %v1930, %v904
      %vm2164 = vcmp.eq.s32.totalorder %v1943, %v892
      %vm2165 = vcmp.eq.s32.totalorder %v1943, %v896
      %vm2166 = vcmp.eq.s32.totalorder %v1943, %v900
      %vm2167 = vcmp.eq.s32.totalorder %v1943, %v904
      %vm2168 = vcmp.eq.s32.totalorder %v1956, %v892
      %vm2169 = vcmp.eq.s32.totalorder %v1956, %v896
      %vm2170 = vcmp.eq.s32.totalorder %v1956, %v900
      %vm2171 = vcmp.eq.s32.totalorder %v1956, %v904
      %vm2172 = vcmp.eq.s32.totalorder %v1969, %v892
      %vm2173 = vcmp.eq.s32.totalorder %v1969, %v896
      %vm2174 = vcmp.eq.s32.totalorder %v1969, %v900
      %vm2175 = vcmp.eq.s32.totalorder %v1969, %v904
      %vm2176 = vcmp.eq.s32.totalorder %v1982, %v892
      %vm2177 = vcmp.eq.s32.totalorder %v1982, %v896
      %vm2178 = vcmp.eq.s32.totalorder %v1982, %v900
      %vm2179 = vcmp.eq.s32.totalorder %v1982, %v904
      %vm2180 = vcmp.eq.s32.totalorder %v1995, %v892
      %vm2181 = vcmp.eq.s32.totalorder %v1995, %v896
      %vm2182 = vcmp.eq.s32.totalorder %v1995, %v900
      %vm2183 = vcmp.eq.s32.totalorder %v1995, %v904
      %vm2184 = vcmp.eq.s32.totalorder %v2008, %v892
      %vm2185 = vcmp.eq.s32.totalorder %v2008, %v896
      %vm2186 = vcmp.eq.s32.totalorder %v2008, %v900
      %vm2187 = vcmp.eq.s32.totalorder %v2008, %v904
      %vm2188 = vcmp.eq.s32.totalorder %v2021, %v892
      %vm2189 = vcmp.eq.s32.totalorder %v2021, %v896
      %vm2190 = vcmp.eq.s32.totalorder %v2021, %v900
      %vm2191 = vcmp.eq.s32.totalorder %v2021, %v904
      %vm2192 = vcmp.eq.s32.totalorder %v2034, %v892
      %vm2193 = vcmp.eq.s32.totalorder %v2034, %v896
      %vm2194 = vcmp.eq.s32.totalorder %v2034, %v900
      %vm2195 = vcmp.eq.s32.totalorder %v2034, %v904
      %vm2196 = vcmp.lt.s32.totalorder %v2036, %v201
      %vm2197 = vcmp.lt.s32.totalorder %v2036, %v202
      %vm2198 = vcmp.lt.s32.totalorder %v2036, %v203
      %vm2199 = vcmp.lt.s32.totalorder %v2036, %v204
      %vm2200 = vcmp.lt.s32.totalorder %v2037, %v201
      %vm2201 = vcmp.lt.s32.totalorder %v2037, %v202
      %vm2202 = vcmp.lt.s32.totalorder %v2037, %v203
      %vm2203 = vcmp.lt.s32.totalorder %v2037, %v204
      %vm2204 = vcmp.lt.s32.totalorder %v2038, %v201
      %vm2205 = vcmp.lt.s32.totalorder %v2038, %v202
      %vm2206 = vcmp.lt.s32.totalorder %v2038, %v203
      %vm2207 = vcmp.lt.s32.totalorder %v2038, %v204
      %vm2208 = vcmp.lt.s32.totalorder %v2039, %v201
      %vm2209 = vcmp.lt.s32.totalorder %v2039, %v202
      %vm2210 = vcmp.lt.s32.totalorder %v2039, %v203
      %vm2211 = vcmp.lt.s32.totalorder %v2039, %v204
      %vm2212 = vcmp.lt.s32.totalorder %v2040, %v201
      %vm2213 = vcmp.lt.s32.totalorder %v2040, %v202
      %vm2214 = vcmp.lt.s32.totalorder %v2040, %v203
      %vm2215 = vcmp.lt.s32.totalorder %v2040, %v204
      %vm2216 = vcmp.lt.s32.totalorder %v2041, %v201
      %vm2217 = vcmp.lt.s32.totalorder %v2041, %v202
      %vm2218 = vcmp.lt.s32.totalorder %v2041, %v203
      %vm2219 = vcmp.lt.s32.totalorder %v2041, %v204
      %vm2220 = vcmp.lt.s32.totalorder %v2042, %v201
      %vm2221 = vcmp.lt.s32.totalorder %v2042, %v202
      %vm2222 = vcmp.lt.s32.totalorder %v2042, %v203
      %vm2223 = vcmp.lt.s32.totalorder %v2042, %v204
      %vm2224 = vcmp.lt.s32.totalorder %v2043, %v201
      %vm2225 = vcmp.lt.s32.totalorder %v2043, %v202
      %vm2226 = vcmp.lt.s32.totalorder %v2043, %v203
      %vm2227 = vcmp.lt.s32.totalorder %v2043, %v204
      %vm2228 = vcmp.lt.s32.totalorder %v2044, %v201
      %vm2229 = vcmp.lt.s32.totalorder %v2044, %v202
      %vm2230 = vcmp.lt.s32.totalorder %v2044, %v203
      %vm2231 = vcmp.lt.s32.totalorder %v2044, %v204
      %vm2232 = vcmp.lt.s32.totalorder %v2045, %v201
      %vm2233 = vcmp.lt.s32.totalorder %v2045, %v202
      %vm2234 = vcmp.lt.s32.totalorder %v2045, %v203
      %vm2235 = vcmp.lt.s32.totalorder %v2045, %v204
      %vm2236 = vcmp.lt.s32.totalorder %v2046, %v201
      %vm2237 = vcmp.lt.s32.totalorder %v2046, %v202
      %vm2238 = vcmp.lt.s32.totalorder %v2046, %v203
      %vm2239 = vcmp.lt.s32.totalorder %v2046, %v204
      %vm2240 = vcmp.lt.s32.totalorder %v2047, %v201
      %vm2241 = vcmp.lt.s32.totalorder %v2047, %v202
      %vm2242 = vcmp.lt.s32.totalorder %v2047, %v203
      %vm2243 = vcmp.lt.s32.totalorder %v2047, %v204
      %vm2244 = vcmp.lt.s32.totalorder %v2048, %v201
      %vm2245 = vcmp.lt.s32.totalorder %v2048, %v202
      %vm2246 = vcmp.lt.s32.totalorder %v2048, %v203
      %vm2247 = vcmp.lt.s32.totalorder %v2048, %v204
      %vm2248 = vcmp.lt.s32.totalorder %v2049, %v201
      %vm2249 = vcmp.lt.s32.totalorder %v2049, %v202
      %vm2250 = vcmp.lt.s32.totalorder %v2049, %v203
      %vm2251 = vcmp.lt.s32.totalorder %v2049, %v204
      %vm2252 = vcmp.lt.s32.totalorder %v2050, %v201
      %vm2253 = vcmp.lt.s32.totalorder %v2050, %v202
      %vm2254 = vcmp.lt.s32.totalorder %v2050, %v203
      %vm2255 = vcmp.lt.s32.totalorder %v2050, %v204
      %vm2256 = vcmp.lt.s32.totalorder %v2051, %v201
      %vm2257 = vcmp.lt.s32.totalorder %v2051, %v202
      %vm2258 = vcmp.lt.s32.totalorder %v2051, %v203
      %vm2259 = vcmp.lt.s32.totalorder %v2051, %v204
      %vm2260 = vcmp.lt.s32.totalorder %v2052, %v201
      %vm2261 = vcmp.lt.s32.totalorder %v2052, %v202
      %vm2262 = vcmp.lt.s32.totalorder %v2052, %v203
      %vm2263 = vcmp.lt.s32.totalorder %v2052, %v204
      %vm2264 = vcmp.lt.s32.totalorder %v2053, %v201
      %vm2265 = vcmp.lt.s32.totalorder %v2053, %v202
      %vm2266 = vcmp.lt.s32.totalorder %v2053, %v203
      %vm2267 = vcmp.lt.s32.totalorder %v2053, %v204
      %vm2268 = vcmp.lt.s32.totalorder %v2054, %v201
      %vm2269 = vcmp.lt.s32.totalorder %v2054, %v202
      %vm2270 = vcmp.lt.s32.totalorder %v2054, %v203
      %vm2271 = vcmp.lt.s32.totalorder %v2054, %v204
      %vm2272 = vcmp.lt.s32.totalorder %v2055, %v201
      %vm2273 = vcmp.lt.s32.totalorder %v2055, %v202
      %vm2274 = vcmp.lt.s32.totalorder %v2055, %v203
      %vm2275 = vcmp.lt.s32.totalorder %v2055, %v204
      %vm2276 = vcmp.lt.s32.totalorder %v2056, %v201
      %vm2277 = vcmp.lt.s32.totalorder %v2056, %v202
      %vm2278 = vcmp.lt.s32.totalorder %v2056, %v203
      %vm2279 = vcmp.lt.s32.totalorder %v2056, %v204
      %vm2280 = vcmp.lt.s32.totalorder %v2057, %v201
      %vm2281 = vcmp.lt.s32.totalorder %v2057, %v202
      %vm2282 = vcmp.lt.s32.totalorder %v2057, %v203
      %vm2283 = vcmp.lt.s32.totalorder %v2057, %v204
      %vm2284 = vcmp.lt.s32.totalorder %v2058, %v201
      %vm2285 = vcmp.lt.s32.totalorder %v2058, %v202
      %vm2286 = vcmp.lt.s32.totalorder %v2058, %v203
      %vm2287 = vcmp.lt.s32.totalorder %v2058, %v204
      %vm2288 = vcmp.lt.s32.totalorder %v2059, %v201
      %vm2289 = vcmp.lt.s32.totalorder %v2059, %v202
      %vm2290 = vcmp.lt.s32.totalorder %v2059, %v203
      %vm2291 = vcmp.lt.s32.totalorder %v2059, %v204
      %vm2292 = vcmp.lt.s32.totalorder %v2060, %v201
      %vm2293 = vcmp.lt.s32.totalorder %v2060, %v202
      %vm2294 = vcmp.lt.s32.totalorder %v2060, %v203
      %vm2295 = vcmp.lt.s32.totalorder %v2060, %v204
      %vm2296 = vcmp.lt.s32.totalorder %v2061, %v201
      %vm2297 = vcmp.lt.s32.totalorder %v2061, %v202
      %vm2298 = vcmp.lt.s32.totalorder %v2061, %v203
      %vm2299 = vcmp.lt.s32.totalorder %v2061, %v204
      %vm2300 = vcmp.lt.s32.totalorder %v2062, %v201
      %vm2301 = vcmp.lt.s32.totalorder %v2062, %v202
      %vm2302 = vcmp.lt.s32.totalorder %v2062, %v203
      %vm2303 = vcmp.lt.s32.totalorder %v2062, %v204
      %vm2304 = vcmp.lt.s32.totalorder %v2063, %v201
      %vm2305 = vcmp.lt.s32.totalorder %v2063, %v202
      %vm2306 = vcmp.lt.s32.totalorder %v2063, %v203
      %vm2307 = vcmp.lt.s32.totalorder %v2063, %v204
      %vm2308 = vcmp.lt.s32.totalorder %v2064, %v201
      %vm2309 = vcmp.lt.s32.totalorder %v2064, %v202
      %vm2310 = vcmp.lt.s32.totalorder %v2064, %v203
      %vm2311 = vcmp.lt.s32.totalorder %v2064, %v204
      %vm2312 = vcmp.lt.s32.totalorder %v2065, %v201
      %vm2313 = vcmp.lt.s32.totalorder %v2065, %v202
      %vm2314 = vcmp.lt.s32.totalorder %v2065, %v203
      %vm2315 = vcmp.lt.s32.totalorder %v2065, %v204
      %vm2316 = vcmp.lt.s32.totalorder %v2066, %v201
      %vm2317 = vcmp.lt.s32.totalorder %v2066, %v202
      %vm2318 = vcmp.lt.s32.totalorder %v2066, %v203
      %vm2319 = vcmp.lt.s32.totalorder %v2066, %v204
      %vm2320 = vcmp.lt.s32.totalorder %v2067, %v201
      %vm2321 = vcmp.lt.s32.totalorder %v2067, %v202
      %vm2322 = vcmp.lt.s32.totalorder %v2067, %v203
      %vm2323 = vcmp.lt.s32.totalorder %v2067, %v204
      %vm2324 = vmand %vm2068, %vm2196
      %vm2325 = vmand %vm2069, %vm2197
      %vm2326 = vmand %vm2070, %vm2198
      %vm2327 = vmand %vm2071, %vm2199
      %vm2328 = vmand %vm2072, %vm2200
      %vm2329 = vmand %vm2073, %vm2201
      %vm2330 = vmand %vm2074, %vm2202
      %vm2331 = vmand %vm2075, %vm2203
      %vm2332 = vmand %vm2076, %vm2204
      %vm2333 = vmand %vm2077, %vm2205
      %vm2334 = vmand %vm2078, %vm2206
      %vm2335 = vmand %vm2079, %vm2207
      %vm2336 = vmand %vm2080, %vm2208
      %vm2337 = vmand %vm2081, %vm2209
      %vm2338 = vmand %vm2082, %vm2210
      %vm2339 = vmand %vm2083, %vm2211
      %vm2340 = vmand %vm2084, %vm2212
      %vm2341 = vmand %vm2085, %vm2213
      %vm2342 = vmand %vm2086, %vm2214
      %vm2343 = vmand %vm2087, %vm2215
      %vm2344 = vmand %vm2088, %vm2216
      %vm2345 = vmand %vm2089, %vm2217
      %vm2346 = vmand %vm2090, %vm2218
      %vm2347 = vmand %vm2091, %vm2219
      %vm2348 = vmand %vm2092, %vm2220
      %vm2349 = vmand %vm2093, %vm2221
      %vm2350 = vmand %vm2094, %vm2222
      %vm2351 = vmand %vm2095, %vm2223
      %vm2352 = vmand %vm2096, %vm2224
      %vm2353 = vmand %vm2097, %vm2225
      %vm2354 = vmand %vm2098, %vm2226
      %vm2355 = vmand %vm2099, %vm2227
      %vm2356 = vmand %vm2100, %vm2228
      %vm2357 = vmand %vm2101, %vm2229
      %vm2358 = vmand %vm2102, %vm2230
      %vm2359 = vmand %vm2103, %vm2231
      %vm2360 = vmand %vm2104, %vm2232
      %vm2361 = vmand %vm2105, %vm2233
      %vm2362 = vmand %vm2106, %vm2234
      %vm2363 = vmand %vm2107, %vm2235
      %vm2364 = vmand %vm2108, %vm2236
      %vm2365 = vmand %vm2109, %vm2237
      %vm2366 = vmand %vm2110, %vm2238
      %vm2367 = vmand %vm2111, %vm2239
      %vm2368 = vmand %vm2112, %vm2240
      %vm2369 = vmand %vm2113, %vm2241
      %vm2370 = vmand %vm2114, %vm2242
      %vm2371 = vmand %vm2115, %vm2243
      %vm2372 = vmand %vm2116, %vm2244
      %vm2373 = vmand %vm2117, %vm2245
      %vm2374 = vmand %vm2118, %vm2246
      %vm2375 = vmand %vm2119, %vm2247
      %vm2376 = vmand %vm2120, %vm2248
      %vm2377 = vmand %vm2121, %vm2249
      %vm2378 = vmand %vm2122, %vm2250
      %vm2379 = vmand %vm2123, %vm2251
      %vm2380 = vmand %vm2124, %vm2252
      %vm2381 = vmand %vm2125, %vm2253
      %vm2382 = vmand %vm2126, %vm2254
      %vm2383 = vmand %vm2127, %vm2255
      %vm2384 = vmand %vm2128, %vm2256
      %vm2385 = vmand %vm2129, %vm2257
      %vm2386 = vmand %vm2130, %vm2258
      %vm2387 = vmand %vm2131, %vm2259
      %vm2388 = vmand %vm2132, %vm2260
      %vm2389 = vmand %vm2133, %vm2261
      %vm2390 = vmand %vm2134, %vm2262
      %vm2391 = vmand %vm2135, %vm2263
      %vm2392 = vmand %vm2136, %vm2264
      %vm2393 = vmand %vm2137, %vm2265
      %vm2394 = vmand %vm2138, %vm2266
      %vm2395 = vmand %vm2139, %vm2267
      %vm2396 = vmand %vm2140, %vm2268
      %vm2397 = vmand %vm2141, %vm2269
      %vm2398 = vmand %vm2142, %vm2270
      %vm2399 = vmand %vm2143, %vm2271
      %vm2400 = vmand %vm2144, %vm2272
      %vm2401 = vmand %vm2145, %vm2273
      %vm2402 = vmand %vm2146, %vm2274
      %vm2403 = vmand %vm2147, %vm2275
      %vm2404 = vmand %vm2148, %vm2276
      %vm2405 = vmand %vm2149, %vm2277
      %vm2406 = vmand %vm2150, %vm2278
      %vm2407 = vmand %vm2151, %vm2279
      %vm2408 = vmand %vm2152, %vm2280
      %vm2409 = vmand %vm2153, %vm2281
      %vm2410 = vmand %vm2154, %vm2282
      %vm2411 = vmand %vm2155, %vm2283
      %vm2412 = vmand %vm2156, %vm2284
      %vm2413 = vmand %vm2157, %vm2285
      %vm2414 = vmand %vm2158, %vm2286
      %vm2415 = vmand %vm2159, %vm2287
      %vm2416 = vmand %vm2160, %vm2288
      %vm2417 = vmand %vm2161, %vm2289
      %vm2418 = vmand %vm2162, %vm2290
      %vm2419 = vmand %vm2163, %vm2291
      %vm2420 = vmand %vm2164, %vm2292
      %vm2421 = vmand %vm2165, %vm2293
      %vm2422 = vmand %vm2166, %vm2294
      %vm2423 = vmand %vm2167, %vm2295
      %vm2424 = vmand %vm2168, %vm2296
      %vm2425 = vmand %vm2169, %vm2297
      %vm2426 = vmand %vm2170, %vm2298
      %vm2427 = vmand %vm2171, %vm2299
      %vm2428 = vmand %vm2172, %vm2300
      %vm2429 = vmand %vm2173, %vm2301
      %vm2430 = vmand %vm2174, %vm2302
      %vm2431 = vmand %vm2175, %vm2303
      %vm2432 = vmand %vm2176, %vm2304
      %vm2433 = vmand %vm2177, %vm2305
      %vm2434 = vmand %vm2178, %vm2306
      %vm2435 = vmand %vm2179, %vm2307
      %vm2436 = vmand %vm2180, %vm2308
      %vm2437 = vmand %vm2181, %vm2309
      %vm2438 = vmand %vm2182, %vm2310
      %vm2439 = vmand %vm2183, %vm2311
      %vm2440 = vmand %vm2184, %vm2312
      %vm2441 = vmand %vm2185, %vm2313
      %vm2442 = vmand %vm2186, %vm2314
      %vm2443 = vmand %vm2187, %vm2315
      %vm2444 = vmand %vm2188, %vm2316
      %vm2445 = vmand %vm2189, %vm2317
      %vm2446 = vmand %vm2190, %vm2318
      %vm2447 = vmand %vm2191, %vm2319
      %vm2448 = vmand %vm2192, %vm2320
      %vm2449 = vmand %vm2193, %vm2321
      %vm2450 = vmand %vm2194, %vm2322
      %vm2451 = vmand %vm2195, %vm2323
      %v2452 = vsel %vm2324, 1, 0
      %v2453 = vsel %vm2325, 1, 0
      %v2454 = vsel %vm2326, 1, 0
      %v2455 = vsel %vm2327, 1, 0
      %v2456 = vsel %vm2328, 1, 0
      %v2457 = vsel %vm2329, 1, 0
      %v2458 = vsel %vm2330, 1, 0
      %v2459 = vsel %vm2331, 1, 0
      %v2460 = vsel %vm2332, 1, 0
      %v2461 = vsel %vm2333, 1, 0
      %v2462 = vsel %vm2334, 1, 0
      %v2463 = vsel %vm2335, 1, 0
      %v2464 = vsel %vm2336, 1, 0
      %v2465 = vsel %vm2337, 1, 0
      %v2466 = vsel %vm2338, 1, 0
      %v2467 = vsel %vm2339, 1, 0
      %v2468 = vsel %vm2340, 1, 0
      %v2469 = vsel %vm2341, 1, 0
      %v2470 = vsel %vm2342, 1, 0
      %v2471 = vsel %vm2343, 1, 0
      %v2472 = vsel %vm2344, 1, 0
      %v2473 = vsel %vm2345, 1, 0
      %v2474 = vsel %vm2346, 1, 0
      %v2475 = vsel %vm2347, 1, 0
      %v2476 = vsel %vm2348, 1, 0
      %v2477 = vsel %vm2349, 1, 0
      %v2478 = vsel %vm2350, 1, 0
      %v2479 = vsel %vm2351, 1, 0
      %v2480 = vsel %vm2352, 1, 0
      %v2481 = vsel %vm2353, 1, 0
      %v2482 = vsel %vm2354, 1, 0
      %v2483 = vsel %vm2355, 1, 0
      %v2484 = vsel %vm2356, 1, 0
      %v2485 = vsel %vm2357, 1, 0
      %v2486 = vsel %vm2358, 1, 0
      %v2487 = vsel %vm2359, 1, 0
      %v2488 = vsel %vm2360, 1, 0
      %v2489 = vsel %vm2361, 1, 0
      %v2490 = vsel %vm2362, 1, 0
      %v2491 = vsel %vm2363, 1, 0
      %v2492 = vsel %vm2364, 1, 0
      %v2493 = vsel %vm2365, 1, 0
      %v2494 = vsel %vm2366, 1, 0
      %v2495 = vsel %vm2367, 1, 0
      %v2496 = vsel %vm2368, 1, 0
      %v2497 = vsel %vm2369, 1, 0
      %v2498 = vsel %vm2370, 1, 0
      %v2499 = vsel %vm2371, 1, 0
      %v2500 = vsel %vm2372, 1, 0
      %v2501 = vsel %vm2373, 1, 0
      %v2502 = vsel %vm2374, 1, 0
      %v2503 = vsel %vm2375, 1, 0
      %v2504 = vsel %vm2376, 1, 0
      %v2505 = vsel %vm2377, 1, 0
      %v2506 = vsel %vm2378, 1, 0
      %v2507 = vsel %vm2379, 1, 0
      %v2508 = vsel %vm2380, 1, 0
      %v2509 = vsel %vm2381, 1, 0
      %v2510 = vsel %vm2382, 1, 0
      %v2511 = vsel %vm2383, 1, 0
      %v2512 = vsel %vm2384, 1, 0
      %v2513 = vsel %vm2385, 1, 0
      %v2514 = vsel %vm2386, 1, 0
      %v2515 = vsel %vm2387, 1, 0
      %v2516 = vsel %vm2388, 1, 0
      %v2517 = vsel %vm2389, 1, 0
      %v2518 = vsel %vm2390, 1, 0
      %v2519 = vsel %vm2391, 1, 0
      %v2520 = vsel %vm2392, 1, 0
      %v2521 = vsel %vm2393, 1, 0
      %v2522 = vsel %vm2394, 1, 0
      %v2523 = vsel %vm2395, 1, 0
      %v2524 = vsel %vm2396, 1, 0
      %v2525 = vsel %vm2397, 1, 0
      %v2526 = vsel %vm2398, 1, 0
      %v2527 = vsel %vm2399, 1, 0
      %v2528 = vsel %vm2400, 1, 0
      %v2529 = vsel %vm2401, 1, 0
      %v2530 = vsel %vm2402, 1, 0
      %v2531 = vsel %vm2403, 1, 0
      %v2532 = vsel %vm2404, 1, 0
      %v2533 = vsel %vm2405, 1, 0
      %v2534 = vsel %vm2406, 1, 0
      %v2535 = vsel %vm2407, 1, 0
      %v2536 = vsel %vm2408, 1, 0
      %v2537 = vsel %vm2409, 1, 0
      %v2538 = vsel %vm2410, 1, 0
      %v2539 = vsel %vm2411, 1, 0
      %v2540 = vsel %vm2412, 1, 0
      %v2541 = vsel %vm2413, 1, 0
      %v2542 = vsel %vm2414, 1, 0
      %v2543 = vsel %vm2415, 1, 0
      %v2544 = vsel %vm2416, 1, 0
      %v2545 = vsel %vm2417, 1, 0
      %v2546 = vsel %vm2418, 1, 0
      %v2547 = vsel %vm2419, 1, 0
      %v2548 = vsel %vm2420, 1, 0
      %v2549 = vsel %vm2421, 1, 0
      %v2550 = vsel %vm2422, 1, 0
      %v2551 = vsel %vm2423, 1, 0
      %v2552 = vsel %vm2424, 1, 0
      %v2553 = vsel %vm2425, 1, 0
      %v2554 = vsel %vm2426, 1, 0
      %v2555 = vsel %vm2427, 1, 0
      %v2556 = vsel %vm2428, 1, 0
      %v2557 = vsel %vm2429, 1, 0
      %v2558 = vsel %vm2430, 1, 0
      %v2559 = vsel %vm2431, 1, 0
      %v2560 = vsel %vm2432, 1, 0
      %v2561 = vsel %vm2433, 1, 0
      %v2562 = vsel %vm2434, 1, 0
      %v2563 = vsel %vm2435, 1, 0
      %v2564 = vsel %vm2436, 1, 0
      %v2565 = vsel %vm2437, 1, 0
      %v2566 = vsel %vm2438, 1, 0
      %v2567 = vsel %vm2439, 1, 0
      %v2568 = vsel %vm2440, 1, 0
      %v2569 = vsel %vm2441, 1, 0
      %v2570 = vsel %vm2442, 1, 0
      %v2571 = vsel %vm2443, 1, 0
      %v2572 = vsel %vm2444, 1, 0
      %v2573 = vsel %vm2445, 1, 0
      %v2574 = vsel %vm2446, 1, 0
      %v2575 = vsel %vm2447, 1, 0
      %v2576 = vsel %vm2448, 1, 0
      %v2577 = vsel %vm2449, 1, 0
      %v2578 = vsel %vm2450, 1, 0
      %v2579 = vsel %vm2451, 1, 0
      %v2580 = vcvt.s32.f32 %v2452
      %v2581 = vcvt.s32.f32 %v2453
      %v2582 = vcvt.s32.f32 %v2454
      %v2583 = vcvt.s32.f32 %v2455
      %v2584 = vcvt.s32.f32 %v2456
      %v2585 = vcvt.s32.f32 %v2457
      %v2586 = vcvt.s32.f32 %v2458
      %v2587 = vcvt.s32.f32 %v2459
      %v2588 = vcvt.s32.f32 %v2460
      %v2589 = vcvt.s32.f32 %v2461
      %v2590 = vcvt.s32.f32 %v2462
      %v2591 = vcvt.s32.f32 %v2463
      %v2592 = vcvt.s32.f32 %v2464
      %v2593 = vcvt.s32.f32 %v2465
      %v2594 = vcvt.s32.f32 %v2466
      %v2595 = vcvt.s32.f32 %v2467
      %v2596 = vcvt.s32.f32 %v2468
      %v2597 = vcvt.s32.f32 %v2469
      %v2598 = vcvt.s32.f32 %v2470
      %v2599 = vcvt.s32.f32 %v2471
      %v2600 = vcvt.s32.f32 %v2472
      %v2601 = vcvt.s32.f32 %v2473
      %v2602 = vcvt.s32.f32 %v2474
      %v2603 = vcvt.s32.f32 %v2475
      %v2604 = vcvt.s32.f32 %v2476
      %v2605 = vcvt.s32.f32 %v2477
      %v2606 = vcvt.s32.f32 %v2478
      %v2607 = vcvt.s32.f32 %v2479
      %v2608 = vcvt.s32.f32 %v2480
      %v2609 = vcvt.s32.f32 %v2481
      %v2610 = vcvt.s32.f32 %v2482
      %v2611 = vcvt.s32.f32 %v2483
      %v2612 = vcvt.s32.f32 %v2484
      %v2613 = vcvt.s32.f32 %v2485
      %v2614 = vcvt.s32.f32 %v2486
      %v2615 = vcvt.s32.f32 %v2487
      %v2616 = vcvt.s32.f32 %v2488
      %v2617 = vcvt.s32.f32 %v2489
      %v2618 = vcvt.s32.f32 %v2490
      %v2619 = vcvt.s32.f32 %v2491
      %v2620 = vcvt.s32.f32 %v2492
      %v2621 = vcvt.s32.f32 %v2493
      %v2622 = vcvt.s32.f32 %v2494
      %v2623 = vcvt.s32.f32 %v2495
      %v2624 = vcvt.s32.f32 %v2496
      %v2625 = vcvt.s32.f32 %v2497
      %v2626 = vcvt.s32.f32 %v2498
      %v2627 = vcvt.s32.f32 %v2499
      %v2628 = vcvt.s32.f32 %v2500
      %v2629 = vcvt.s32.f32 %v2501
      %v2630 = vcvt.s32.f32 %v2502
      %v2631 = vcvt.s32.f32 %v2503
      %v2632 = vcvt.s32.f32 %v2504
      %v2633 = vcvt.s32.f32 %v2505
      %v2634 = vcvt.s32.f32 %v2506
      %v2635 = vcvt.s32.f32 %v2507
      %v2636 = vcvt.s32.f32 %v2508
      %v2637 = vcvt.s32.f32 %v2509
      %v2638 = vcvt.s32.f32 %v2510
      %v2639 = vcvt.s32.f32 %v2511
      %v2640 = vcvt.s32.f32 %v2512
      %v2641 = vcvt.s32.f32 %v2513
      %v2642 = vcvt.s32.f32 %v2514
      %v2643 = vcvt.s32.f32 %v2515
      %v2644 = vcvt.s32.f32 %v2516
      %v2645 = vcvt.s32.f32 %v2517
      %v2646 = vcvt.s32.f32 %v2518
      %v2647 = vcvt.s32.f32 %v2519
      %v2648 = vcvt.s32.f32 %v2520
      %v2649 = vcvt.s32.f32 %v2521
      %v2650 = vcvt.s32.f32 %v2522
      %v2651 = vcvt.s32.f32 %v2523
      %v2652 = vcvt.s32.f32 %v2524
      %v2653 = vcvt.s32.f32 %v2525
      %v2654 = vcvt.s32.f32 %v2526
      %v2655 = vcvt.s32.f32 %v2527
      %v2656 = vcvt.s32.f32 %v2528
      %v2657 = vcvt.s32.f32 %v2529
      %v2658 = vcvt.s32.f32 %v2530
      %v2659 = vcvt.s32.f32 %v2531
      %v2660 = vcvt.s32.f32 %v2532
      %v2661 = vcvt.s32.f32 %v2533
      %v2662 = vcvt.s32.f32 %v2534
      %v2663 = vcvt.s32.f32 %v2535
      %v2664 = vcvt.s32.f32 %v2536
      %v2665 = vcvt.s32.f32 %v2537
      %v2666 = vcvt.s32.f32 %v2538
      %v2667 = vcvt.s32.f32 %v2539
      %v2668 = vcvt.s32.f32 %v2540
      %v2669 = vcvt.s32.f32 %v2541
      %v2670 = vcvt.s32.f32 %v2542
      %v2671 = vcvt.s32.f32 %v2543
      %v2672 = vcvt.s32.f32 %v2544
      %v2673 = vcvt.s32.f32 %v2545
      %v2674 = vcvt.s32.f32 %v2546
      %v2675 = vcvt.s32.f32 %v2547
      %v2676 = vcvt.s32.f32 %v2548
      %v2677 = vcvt.s32.f32 %v2549
      %v2678 = vcvt.s32.f32 %v2550
      %v2679 = vcvt.s32.f32 %v2551
      %v2680 = vcvt.s32.f32 %v2552
      %v2681 = vcvt.s32.f32 %v2553
      %v2682 = vcvt.s32.f32 %v2554
      %v2683 = vcvt.s32.f32 %v2555
      %v2684 = vcvt.s32.f32 %v2556
      %v2685 = vcvt.s32.f32 %v2557
      %v2686 = vcvt.s32.f32 %v2558
      %v2687 = vcvt.s32.f32 %v2559
      %v2688 = vcvt.s32.f32 %v2560
      %v2689 = vcvt.s32.f32 %v2561
      %v2690 = vcvt.s32.f32 %v2562
      %v2691 = vcvt.s32.f32 %v2563
      %v2692 = vcvt.s32.f32 %v2564
      %v2693 = vcvt.s32.f32 %v2565
      %v2694 = vcvt.s32.f32 %v2566
      %v2695 = vcvt.s32.f32 %v2567
      %v2696 = vcvt.s32.f32 %v2568
      %v2697 = vcvt.s32.f32 %v2569
      %v2698 = vcvt.s32.f32 %v2570
      %v2699 = vcvt.s32.f32 %v2571
      %v2700 = vcvt.s32.f32 %v2572
      %v2701 = vcvt.s32.f32 %v2573
      %v2702 = vcvt.s32.f32 %v2574
      %v2703 = vcvt.s32.f32 %v2575
      %v2704 = vcvt.s32.f32 %v2576
      %v2705 = vcvt.s32.f32 %v2577
      %v2706 = vcvt.s32.f32 %v2578
      %v2707 = vcvt.s32.f32 %v2579
      %2708 = vmatprep.subr.mxu0 %v2641
      %2709 = vmatpush1.msra.mxu0 %v2640
      %2710 = vmatprep.subr.mxu0 %v2637
      %2711 = vmatpush1.msra.mxu0 %v2636
      %2712 = vmatprep.subr.mxu0 %v2633
      %2713 = vmatpush1.msra.mxu0 %v2632
      %2714 = vmatprep.subr.mxu0 %v2629
      %2715 = vmatpush1.msra.mxu0 %v2628
      %2716 = vmatprep.subr.mxu0 %v2625
      %2717 = vmatpush1.msra.mxu0 %v2624
      %2718 = vmatprep.subr.mxu0 %v2621
      %2719 = vmatpush1.msra.mxu0 %v2620
      %2720 = vmatprep.subr.mxu0 %v2617
      %2721 = vmatpush1.msra.mxu0 %v2616
      %2722 = vmatprep.subr.mxu0 %v2613
      %2723 = vmatpush1.msra.mxu0 %v2612
      %2724 = vmatprep.subr.mxu0 %v2609
      %2725 = vmatpush1.msra.mxu0 %v2608
      %2726 = vmatprep.subr.mxu0 %v2605
      %2727 = vmatpush1.msra.mxu0 %v2604
      %2728 = vmatprep.subr.mxu0 %v2601
      %2729 = vmatpush1.msra.mxu0 %v2600
      %2730 = vmatprep.subr.mxu0 %v2597
      %2731 = vmatpush1.msra.mxu0 %v2596
      %2732 = vmatprep.subr.mxu0 %v2593
      %2733 = vmatpush1.msra.mxu0 %v2592
      %2734 = vmatprep.subr.mxu0 %v2589
      %2735 = vmatpush1.msra.mxu0 %v2588
      %2736 = vmatprep.subr.mxu0 %v2585
      %2737 = vmatpush1.msra.mxu0 %v2584
      %2738 = vmatprep.subr.mxu0 %v2581
      %2739 = vmatpush1.msra.mxu0 %v2580
      %2740 = vmatprep.subr.mxu0 %v2705
      %2741 = vmatpush2.msra.mxu0 %v2704
      %2742 = vmatprep.subr.mxu0 %v2701
      %2743 = vmatpush2.msra.mxu0 %v2700
      %2744 = vmatprep.subr.mxu0 %v2697
      %2745 = vmatpush2.msra.mxu0 %v2696
      %2746 = vmatprep.subr.mxu0 %v2693
      %2747 = vmatpush2.msra.mxu0 %v2692
      %2748 = vmatprep.subr.mxu0 %v2689
      %2749 = vmatpush2.msra.mxu0 %v2688
      %2750 = vmatprep.subr.mxu0 %v2685
      %2751 = vmatpush2.msra.mxu0 %v2684
      %2752 = vmatprep.subr.mxu0 %v2681
      %2753 = vmatpush2.msra.mxu0 %v2680
      %2754 = vmatprep.subr.mxu0 %v2677
      %2755 = vmatpush2.msra.mxu0 %v2676
      %2756 = vmatprep.subr.mxu0 %v2673
      %2757 = vmatpush2.msra.mxu0 %v2672
      %2758 = vmatprep.subr.mxu0 %v2669
      %2759 = vmatpush2.msra.mxu0 %v2668
      %2760 = vmatprep.subr.mxu0 %v2665
      %2761 = vmatpush2.msra.mxu0 %v2664
      %2762 = vmatprep.subr.mxu0 %v2661
      %2763 = vmatpush2.msra.mxu0 %v2660
      %2764 = vmatprep.subr.mxu0 %v2657
      %2765 = vmatpush2.msra.mxu0 %v2656
      %2766 = vmatprep.subr.mxu0 %v2653
      %2767 = vmatpush2.msra.mxu0 %v2652
      %2768 = vmatprep.subr.mxu0 %v2649
      %2769 = vmatpush2.msra.mxu0 %v2648
      %2770 = vmatprep.subr.mxu0 %v2645
      %2771 = vmatpush2.msra.mxu0 %v2644
      %2772 = vmatprep.mubr.f32.mxu0 1.0
      %2773 = vmatmul.mubr.f32.gmra.mxu0 1.0
      %v2774 = vpop.f32.mrf.mxu0
      %v2775 = vadd.f32 0.0, %v2774
      %v2776 = vpop.f32.mrf.mxu0
      %v2777 = vadd.f32 0.0, %v2776
      %2778 = vdwg.mxu0
      %2779 = vmatprep.subr.mxu0 %v2643
      %2780 = vmatpush1.msra.mxu0 %v2642
      %2781 = vmatprep.subr.mxu0 %v2639
      %2782 = vmatpush1.msra.mxu0 %v2638
      %2783 = vmatprep.subr.mxu0 %v2635
      %2784 = vmatpush1.msra.mxu0 %v2634
      %2785 = vmatprep.subr.mxu0 %v2631
      %2786 = vmatpush1.msra.mxu0 %v2630
      %2787 = vmatprep.subr.mxu0 %v2627
      %2788 = vmatpush1.msra.mxu0 %v2626
      %2789 = vmatprep.subr.mxu0 %v2623
      %2790 = vmatpush1.msra.mxu0 %v2622
      %2791 = vmatprep.subr.mxu0 %v2619
      %2792 = vmatpush1.msra.mxu0 %v2618
      %2793 = vmatprep.subr.mxu0 %v2615
      %2794 = vmatpush1.msra.mxu0 %v2614
      %2795 = vmatprep.subr.mxu0 %v2611
      %2796 = vmatpush1.msra.mxu0 %v2610
      %2797 = vmatprep.subr.mxu0 %v2607
      %2798 = vmatpush1.msra.mxu0 %v2606
      %2799 = vmatprep.subr.mxu0 %v2603
      %2800 = vmatpush1.msra.mxu0 %v2602
      %2801 = vmatprep.subr.mxu0 %v2599
      %2802 = vmatpush1.msra.mxu0 %v2598
      %2803 = vmatprep.subr.mxu0 %v2595
      %2804 = vmatpush1.msra.mxu0 %v2594
      %2805 = vmatprep.subr.mxu0 %v2591
      %2806 = vmatpush1.msra.mxu0 %v2590
      %2807 = vmatprep.subr.mxu0 %v2587
      %2808 = vmatpush1.msra.mxu0 %v2586
      %2809 = vmatprep.subr.mxu0 %v2583
      %2810 = vmatpush1.msra.mxu0 %v2582
      %2811 = vmatprep.subr.mxu0 %v2707
      %2812 = vmatpush2.msra.mxu0 %v2706
      %2813 = vmatprep.subr.mxu0 %v2703
      %2814 = vmatpush2.msra.mxu0 %v2702
      %2815 = vmatprep.subr.mxu0 %v2699
      %2816 = vmatpush2.msra.mxu0 %v2698
      %2817 = vmatprep.subr.mxu0 %v2695
      %2818 = vmatpush2.msra.mxu0 %v2694
      %2819 = vmatprep.subr.mxu0 %v2691
      %2820 = vmatpush2.msra.mxu0 %v2690
      %2821 = vmatprep.subr.mxu0 %v2687
      %2822 = vmatpush2.msra.mxu0 %v2686
      %2823 = vmatprep.subr.mxu0 %v2683
      %2824 = vmatpush2.msra.mxu0 %v2682
      %2825 = vmatprep.subr.mxu0 %v2679
      %2826 = vmatpush2.msra.mxu0 %v2678
      %2827 = vmatprep.subr.mxu0 %v2675
      %2828 = vmatpush2.msra.mxu0 %v2674
      %2829 = vmatprep.subr.mxu0 %v2671
      %2830 = vmatpush2.msra.mxu0 %v2670
      %2831 = vmatprep.subr.mxu0 %v2667
      %2832 = vmatpush2.msra.mxu0 %v2666
      %2833 = vmatprep.subr.mxu0 %v2663
      %2834 = vmatpush2.msra.mxu0 %v2662
      %2835 = vmatprep.subr.mxu0 %v2659
      %2836 = vmatpush2.msra.mxu0 %v2658
      %2837 = vmatprep.subr.mxu0 %v2655
      %2838 = vmatpush2.msra.mxu0 %v2654
      %2839 = vmatprep.subr.mxu0 %v2651
      %2840 = vmatpush2.msra.mxu0 %v2650
      %2841 = vmatprep.subr.mxu0 %v2647
      %2842 = vmatpush2.msra.mxu0 %v2646
      %2843 = vmatprep.mubr.f32.mxu0 1.0
      %2844 = vmatmul.mubr.f32.gmra.mxu0 1.0
      %v2845 = vpop.f32.mrf.mxu0
      %v2846 = vadd.f32 0.0, %v2845
      %v2847 = vpop.f32.mrf.mxu0
      %v2848 = vadd.f32 0.0, %v2847
      %2849 = vdwg.mxu0
      %2850 = vmatprep.subr.mxu0 %v1478
      %2851 = vmatpush1.msra.mxu0 %v1477
      %2852 = vmatprep.subr.mxu0 %v1474
      %2853 = vmatpush1.msra.mxu0 %v1473
      %2854 = vmatprep.subr.mxu0 %v1470
      %2855 = vmatpush1.msra.mxu0 %v1469
      %2856 = vmatprep.subr.mxu0 %v1466
      %2857 = vmatpush1.msra.mxu0 %v1465
      %2858 = vmatprep.subr.mxu0 %v1462
      %2859 = vmatpush1.msra.mxu0 %v1461
      %2860 = vmatprep.subr.mxu0 %v1458
      %2861 = vmatpush1.msra.mxu0 %v1457
      %2862 = vmatprep.subr.mxu0 %v1454
      %2863 = vmatpush1.msra.mxu0 %v1453
      %2864 = vmatprep.subr.mxu0 %v1450
      %2865 = vmatpush1.msra.mxu0 %v1449
      %2866 = vmatprep.subr.mxu0 %v1446
      %2867 = vmatpush1.msra.mxu0 %v1445
      %2868 = vmatprep.subr.mxu0 %v1442
      %2869 = vmatpush1.msra.mxu0 %v1441
      %2870 = vmatprep.subr.mxu0 %v1438
      %2871 = vmatpush1.msra.mxu0 %v1437
      %2872 = vmatprep.subr.mxu0 %v1434
      %2873 = vmatpush1.msra.mxu0 %v1433
      %2874 = vmatprep.subr.mxu0 %v1430
      %2875 = vmatpush1.msra.mxu0 %v1429
      %2876 = vmatprep.subr.mxu0 %v1426
      %2877 = vmatpush1.msra.mxu0 %v1425
      %2878 = vmatprep.subr.mxu0 %v1422
      %2879 = vmatpush1.msra.mxu0 %v1421
      %2880 = vmatprep.subr.mxu0 %v1418
      %2881 = vmatpush1.msra.mxu0 %v1417
      %2882 = vmatprep.subr.mxu0 %v1542
      %2883 = vmatpush2.msra.mxu0 %v1541
      %2884 = vmatprep.subr.mxu0 %v1538
      %2885 = vmatpush2.msra.mxu0 %v1537
      %2886 = vmatprep.subr.mxu0 %v1534
      %2887 = vmatpush2.msra.mxu0 %v1533
      %2888 = vmatprep.subr.mxu0 %v1530
      %2889 = vmatpush2.msra.mxu0 %v1529
      %2890 = vmatprep.subr.mxu0 %v1526
      %2891 = vmatpush2.msra.mxu0 %v1525
      %2892 = vmatprep.subr.mxu0 %v1522
      %2893 = vmatpush2.msra.mxu0 %v1521
      %2894 = vmatprep.subr.mxu0 %v1518
      %2895 = vmatpush2.msra.mxu0 %v1517
      %2896 = vmatprep.subr.mxu0 %v1514
      %2897 = vmatpush2.msra.mxu0 %v1513
      %2898 = vmatprep.subr.mxu0 %v1510
      %2899 = vmatpush2.msra.mxu0 %v1509
      %2900 = vmatprep.subr.mxu0 %v1506
      %2901 = vmatpush2.msra.mxu0 %v1505
      %2902 = vmatprep.subr.mxu0 %v1502
      %2903 = vmatpush2.msra.mxu0 %v1501
      %2904 = vmatprep.subr.mxu0 %v1498
      %2905 = vmatpush2.msra.mxu0 %v1497
      %2906 = vmatprep.subr.mxu0 %v1494
      %2907 = vmatpush2.msra.mxu0 %v1493
      %2908 = vmatprep.subr.mxu0 %v1490
      %2909 = vmatpush2.msra.mxu0 %v1489
      %2910 = vmatprep.subr.mxu0 %v1486
      %2911 = vmatpush2.msra.mxu0 %v1485
      %2912 = vmatprep.subr.mxu0 %v1482
      %2913 = vmatpush2.msra.mxu0 %v1481
      %2914 = vmatprep.mubr.f32.mxu0 1.0
      %2915 = vmatmul.mubr.f32.gmra.mxu0 1.0
      %v2916 = vpop.f32.mrf.mxu0
      %v2917 = vadd.f32 %v2775, %v2916
      %v2918 = vpop.f32.mrf.mxu0
      %v2919 = vadd.f32 %v2777, %v2918
      %2920 = vdwg.mxu0
      %2921 = vmatprep.subr.mxu0 %v1480
      %2922 = vmatpush1.msra.mxu0 %v1479
      %2923 = vmatprep.subr.mxu0 %v1476
      %2924 = vmatpush1.msra.mxu0 %v1475
      %2925 = vmatprep.subr.mxu0 %v1472
      %2926 = vmatpush1.msra.mxu0 %v1471
      %2927 = vmatprep.subr.mxu0 %v1468
      %2928 = vmatpush1.msra.mxu0 %v1467
      %2929 = vmatprep.subr.mxu0 %v1464
      %2930 = vmatpush1.msra.mxu0 %v1463
      %2931 = vmatprep.subr.mxu0 %v1460
      %2932 = vmatpush1.msra.mxu0 %v1459
      %2933 = vmatprep.subr.mxu0 %v1456
      %2934 = vmatpush1.msra.mxu0 %v1455
      %2935 = vmatprep.subr.mxu0 %v1452
      %2936 = vmatpush1.msra.mxu0 %v1451
      %2937 = vmatprep.subr.mxu0 %v1448
      %2938 = vmatpush1.msra.mxu0 %v1447
      %2939 = vmatprep.subr.mxu0 %v1444
      %2940 = vmatpush1.msra.mxu0 %v1443
      %2941 = vmatprep.subr.mxu0 %v1440
      %2942 = vmatpush1.msra.mxu0 %v1439
      %2943 = vmatprep.subr.mxu0 %v1436
      %2944 = vmatpush1.msra.mxu0 %v1435
      %2945 = vmatprep.subr.mxu0 %v1432
      %2946 = vmatpush1.msra.mxu0 %v1431
      %2947 = vmatprep.subr.mxu0 %v1428
      %2948 = vmatpush1.msra.mxu0 %v1427
      %2949 = vmatprep.subr.mxu0 %v1424
      %2950 = vmatpush1.msra.mxu0 %v1423
      %2951 = vmatprep.subr.mxu0 %v1420
      %2952 = vmatpush1.msra.mxu0 %v1419
      %2953 = vmatprep.subr.mxu0 %v1544
      %2954 = vmatpush2.msra.mxu0 %v1543
      %2955 = vmatprep.subr.mxu0 %v1540
      %2956 = vmatpush2.msra.mxu0 %v1539
      %2957 = vmatprep.subr.mxu0 %v1536
      %2958 = vmatpush2.msra.mxu0 %v1535
      %2959 = vmatprep.subr.mxu0 %v1532
      %2960 = vmatpush2.msra.mxu0 %v1531
      %2961 = vmatprep.subr.mxu0 %v1528
      %2962 = vmatpush2.msra.mxu0 %v1527
      %2963 = vmatprep.subr.mxu0 %v1524
      %2964 = vmatpush2.msra.mxu0 %v1523
      %2965 = vmatprep.subr.mxu0 %v1520
      %2966 = vmatpush2.msra.mxu0 %v1519
      %2967 = vmatprep.subr.mxu0 %v1516
      %2968 = vmatpush2.msra.mxu0 %v1515
      %2969 = vmatprep.subr.mxu0 %v1512
      %2970 = vmatpush2.msra.mxu0 %v1511
      %2971 = vmatprep.subr.mxu0 %v1508
      %2972 = vmatpush2.msra.mxu0 %v1507
      %2973 = vmatprep.subr.mxu0 %v1504
      %2974 = vmatpush2.msra.mxu0 %v1503
      %2975 = vmatprep.subr.mxu0 %v1500
      %2976 = vmatpush2.msra.mxu0 %v1499
      %2977 = vmatprep.subr.mxu0 %v1496
      %2978 = vmatpush2.msra.mxu0 %v1495
      %2979 = vmatprep.subr.mxu0 %v1492
      %2980 = vmatpush2.msra.mxu0 %v1491
      %2981 = vmatprep.subr.mxu0 %v1488
      %2982 = vmatpush2.msra.mxu0 %v1487
      %2983 = vmatprep.subr.mxu0 %v1484
      %2984 = vmatpush2.msra.mxu0 %v1483
      %2985 = vmatprep.mubr.f32.mxu0 1.0
      %2986 = vmatmul.mubr.f32.gmra.mxu0 1.0
      %v2987 = vpop.f32.mrf.mxu0
      %v2988 = vadd.f32 %v2846, %v2987
      %v2989 = vpop.f32.mrf.mxu0
      %v2990 = vadd.f32 %v2848, %v2989
      %2991 = vdwg.mxu0
      %vm2992 = vcmp.ge.s32.totalorder %v366, 0
      %vm2993 = vcmp.eq.f32.partialorder %v2917, 0.0
      %vm2994 = vcmp.eq.f32.partialorder %v2919, 0.0
      %vm2995 = vcmp.eq.f32.partialorder %v2988, 0.0
      %vm2996 = vcmp.eq.f32.partialorder %v2990, 0.0
      %v2997 = vsel %vm2993, 1, 0
      %v2998 = vsel %vm2994, 1, 0
      %v2999 = vsel %vm2995, 1, 0
      %v3000 = vsel %vm2996, 1, 0
      %v3001 = vcombine.low %v2997, %v2998
      %v3002 = vcombine.low %v2999, %v3000
      %v3004 = vunpack.c.l.s4 1966171168
      %v3005 = vunpack.c.0.s8 %v3004
      %v3006 = vlaneseq
      %v3007 = vshrl.u32 %v3006, 7
      %v3008 = vsub.s32 %v3005, %v3007
      %v3009 = vrot.slane %v3001, %v3008
      %v3011 = vunpack.c.l.s4 1966171168
      %v3012 = vunpack.c.0.s8 %v3011
      %v3013 = vlaneseq
      %v3014 = vshrl.u32 %v3013, 7
      %v3015 = vsub.s32 %v3012, %v3014
      %v3016 = vrot.slane %v3002, %v3015
      %v3017 = vcombine.low %v3009, %v3016
      %v3019 = vunpack.c.l.s4 1966171168
      %v3020 = vunpack.c.0.s8 %v3019
      %v3021 = vlaneseq
      %v3022 = vshrl.u32 %v3021, 7
      %v3023 = vsub.s32 %v3020, %v3022
      %v3024 = vrot.slane %v3017, %v3023
      %vm3025 = vcmp.ne.s32.totalorder %v3024, 0
      %vm3026 = vmand %vm2992, %vm3025
      %v3027 = vsel %vm3026, 1, 0
      %v3028 = vcvt.s32.f32 %v3027
      %v3029 = vlaneseq
      %vm3030 = vcmp.ge.s32.totalorder %v3029, 0
      %vm3031 = vcmp.lt.s32.totalorder %v3029, 512
      %vm3032 = vmand %vm3030, %vm3031
      %3033 = vst.msk [vmem:[#allocation2] sm:$0xf] %vm3032, %v3028
      %v3035 = vlaneseq
      %v3036 = vshrl.u32 %v3035, 7
      %v3037 = vsub.s32 0, %v3036
      %v3038 = vrot.slane %v3028, %v3037
      %v3039 = vlaneseq
      %v3040 = vshrl.u32 %v3039, 7
      %v3041 = vsub.s32 1, %v3040
      %v3042 = vrot.slane %v3028, %v3041
      %v3043 = vlaneseq
      %v3044 = vshrl.u32 %v3043, 7
      %v3045 = vsub.s32 2, %v3044
      %v3046 = vrot.slane %v3028, %v3045
      %v3047 = vlaneseq
      %v3048 = vshrl.u32 %v3047, 7
      %v3049 = vsub.s32 3, %v3048
      %v3050 = vrot.slane %v3028, %v3049
      %vm3055 = vcmask 1040384
      %v3056 = vsel %vm3055, %v3038, 0.0
      %v3057 = vsel %vm3055, %v3042, 0.0
      %v3058 = vadd.f32 %v3056, %v3057
      %v3059 = vsel %vm3055, %v3046, 0.0
      %v3060 = vadd.f32 %v3058, %v3059
      %v3061 = vsel %vm3055, %v3050, 0.0
      %v3062 = vadd.f32 %v3060, %v3061
      %3063 = vadd.xlane.f32.xlu0 %v3062
      %v3064 = vpop.xlane.xlu0 %3063
      %v3065 = vmin.f32 %v3064, 64.0
      %v3066 = vcvt.s32.f32 %v201
      %v3067 = vld [vmem:[%s195] sm:$0x1]
      %v3068 = vmul.f32 %v3067, %v3065
      %v3069 = vfloor.f32 %v3068
      %v3070 = vsub.f32 %v3065, 1.0
      %v3071 = vmax.f32 %v3070, 0.0
      %v3072 = vmax.f32 %v3069, 0.0
      %v3073 = vmin.f32 %v3071, %v3072
      %vm3074 = vcmp.lt.f32.partialorder %v3066, %v3065
      %v3075 = vsel %vm3074, %v3066, %v3073
      %v3076 = vld [vmem:[#allocation2] sm:$0x3]
      %v3078 = vlaneseq
      %v3079 = vshrl.u32 %v3078, 7
      %v3080 = vsub.s32 0, %v3079
      %v3081 = vrot.slane %v3076, %v3080
      %v3082 = vlaneseq
      %v3083 = vshrl.u32 %v3082, 7
      %v3084 = vsub.s32 1, %v3083
      %v3085 = vrot.slane %v3076, %v3084
      %v3088 = vsel %vm238, %v3081, 0.0
      %v3089 = vsel %vm239, %v3085, 0.0
      %v3090 = vsel %vm240, %v3081, 0.0
      %v3091 = vsel %vm241, %v3085, 0.0
      %v3092 = vsel %vm242, %v3081, 0.0
      %v3093 = vsel %vm243, %v3085, 0.0
      %v3094 = vsel %vm244, %v3081, 0.0
      %v3095 = vsel %vm245, %v3085, 0.0
      %v3096 = vsel %vm246, %v3081, 0.0
      %v3097 = vsel %vm247, %v3085, 0.0
      %v3098 = vsel %vm248, %v3081, 0.0
      %v3099 = vsel %vm249, %v3085, 0.0
      %v3100 = vsel %vm250, %v3081, 0.0
      %v3101 = vsel %vm251, %v3085, 0.0
      %v3102 = vsel %vm252, %v3081, 0.0
      %v3103 = vsel %vm253, %v3085, 0.0
      %v3104 = vsel %vm254, %v3081, 0.0
      %v3105 = vsel %vm255, %v3085, 0.0
      %v3106 = vsel %vm256, %v3081, 0.0
      %v3107 = vsel %vm257, %v3085, 0.0
      %v3108 = vsel %vm258, %v3081, 0.0
      %v3109 = vsel %vm259, %v3085, 0.0
      %v3110 = vsel %vm260, %v3081, 0.0
      %v3111 = vsel %vm261, %v3085, 0.0
      %v3112 = vsel %vm262, %v3081, 0.0
      %v3113 = vsel %vm263, %v3085, 0.0
      %v3114 = vsel %vm264, %v3081, 0.0
      %v3115 = vsel %vm265, %v3085, 0.0
      %v3116 = vsel %vm266, %v3081, 0.0
      %v3117 = vsel %vm267, %v3085, 0.0
      %v3118 = vsel %vm268, %v3081, 0.0
      %v3119 = vsel %vm269, %v3085, 0.0
      %v3120 = vsel %vm270, %v3081, 0.0
      %v3121 = vsel %vm271, %v3085, 0.0
      %v3122 = vsel %vm272, %v3081, 0.0
      %v3123 = vsel %vm273, %v3085, 0.0
      %v3124 = vsel %vm274, %v3081, 0.0
      %v3125 = vsel %vm275, %v3085, 0.0
      %v3126 = vsel %vm276, %v3081, 0.0
      %v3127 = vsel %vm277, %v3085, 0.0
      %v3128 = vsel %vm278, %v3081, 0.0
      %v3129 = vsel %vm279, %v3085, 0.0
      %v3130 = vsel %vm280, %v3081, 0.0
      %v3131 = vsel %vm281, %v3085, 0.0
      %v3132 = vsel %vm282, %v3081, 0.0
      %v3133 = vsel %vm283, %v3085, 0.0
      %v3134 = vsel %vm284, %v3081, 0.0
      %v3135 = vsel %vm285, %v3085, 0.0
      %v3136 = vsel %vm286, %v3081, 0.0
      %v3137 = vsel %vm287, %v3085, 0.0
      %v3138 = vsel %vm288, %v3081, 0.0
      %v3139 = vsel %vm289, %v3085, 0.0
      %v3140 = vsel %vm290, %v3081, 0.0
      %v3141 = vsel %vm291, %v3085, 0.0
      %v3142 = vsel %vm292, %v3081, 0.0
      %v3143 = vsel %vm293, %v3085, 0.0
      %v3144 = vsel %vm294, %v3081, 0.0
      %v3145 = vsel %vm295, %v3085, 0.0
      %v3146 = vsel %vm296, %v3081, 0.0
      %v3147 = vsel %vm297, %v3085, 0.0
      %v3148 = vsel %vm298, %v3081, 0.0
      %v3149 = vsel %vm299, %v3085, 0.0
      %v3150 = vsel %vm300, %v3081, 0.0
      %v3151 = vsel %vm301, %v3085, 0.0
      %v3152 = vadd.f32 %v3088, %v3089
      %3153 = vadd.xlane.f32.xlu0 %v3152
      %v3154 = vpop.xlane.xlu0 %3153
      %v3155 = vadd.f32 %v3090, %v3091
      %3156 = vadd.xlane.f32.xlu0 %v3155
      %v3157 = vpop.xlane.xlu0 %3156
      %v3158 = vadd.f32 %v3092, %v3093
      %3159 = vadd.xlane.f32.xlu0 %v3158
      %v3160 = vpop.xlane.xlu0 %3159
      %v3161 = vadd.f32 %v3094, %v3095
      %3162 = vadd.xlane.f32.xlu0 %v3161
      %v3163 = vpop.xlane.xlu0 %3162
      %v3164 = vadd.f32 %v3096, %v3097
      %3165 = vadd.xlane.f32.xlu0 %v3164
      %v3166 = vpop.xlane.xlu0 %3165
      %v3167 = vadd.f32 %v3098, %v3099
      %3168 = vadd.xlane.f32.xlu0 %v3167
      %v3169 = vpop.xlane.xlu0 %3168
      %v3170 = vadd.f32 %v3100, %v3101
      %3171 = vadd.xlane.f32.xlu0 %v3170
      %v3172 = vpop.xlane.xlu0 %3171
      %v3173 = vadd.f32 %v3102, %v3103
      %3174 = vadd.xlane.f32.xlu0 %v3173
      %v3175 = vpop.xlane.xlu0 %3174
      %v3176 = vadd.f32 %v3104, %v3105
      %3177 = vadd.xlane.f32.xlu0 %v3176
      %v3178 = vpop.xlane.xlu0 %3177
      %v3179 = vadd.f32 %v3106, %v3107
      %3180 = vadd.xlane.f32.xlu0 %v3179
      %v3181 = vpop.xlane.xlu0 %3180
      %v3182 = vadd.f32 %v3108, %v3109
      %3183 = vadd.xlane.f32.xlu0 %v3182
      %v3184 = vpop.xlane.xlu0 %3183
      %v3185 = vadd.f32 %v3110, %v3111
      %3186 = vadd.xlane.f32.xlu0 %v3185
      %v3187 = vpop.xlane.xlu0 %3186
      %v3188 = vadd.f32 %v3112, %v3113
      %3189 = vadd.xlane.f32.xlu0 %v3188
      %v3190 = vpop.xlane.xlu0 %3189
      %v3191 = vadd.f32 %v3114, %v3115
      %3192 = vadd.xlane.f32.xlu0 %v3191
      %v3193 = vpop.xlane.xlu0 %3192
      %v3194 = vadd.f32 %v3116, %v3117
      %3195 = vadd.xlane.f32.xlu0 %v3194
      %v3196 = vpop.xlane.xlu0 %3195
      %v3197 = vadd.f32 %v3118, %v3119
      %3198 = vadd.xlane.f32.xlu0 %v3197
      %v3199 = vpop.xlane.xlu0 %3198
      %v3200 = vadd.f32 %v3120, %v3121
      %3201 = vadd.xlane.f32.xlu0 %v3200
      %v3202 = vpop.xlane.xlu0 %3201
      %v3203 = vadd.f32 %v3122, %v3123
      %3204 = vadd.xlane.f32.xlu0 %v3203
      %v3205 = vpop.xlane.xlu0 %3204
      %v3206 = vadd.f32 %v3124, %v3125
      %3207 = vadd.xlane.f32.xlu0 %v3206
      %v3208 = vpop.xlane.xlu0 %3207
      %v3209 = vadd.f32 %v3126, %v3127
      %3210 = vadd.xlane.f32.xlu0 %v3209
      %v3211 = vpop.xlane.xlu0 %3210
      %v3212 = vadd.f32 %v3128, %v3129
      %3213 = vadd.xlane.f32.xlu0 %v3212
      %v3214 = vpop.xlane.xlu0 %3213
      %v3215 = vadd.f32 %v3130, %v3131
      %3216 = vadd.xlane.f32.xlu0 %v3215
      %v3217 = vpop.xlane.xlu0 %3216
      %v3218 = vadd.f32 %v3132, %v3133
      %3219 = vadd.xlane.f32.xlu0 %v3218
      %v3220 = vpop.xlane.xlu0 %3219
      %v3221 = vadd.f32 %v3134, %v3135
      %3222 = vadd.xlane.f32.xlu0 %v3221
      %v3223 = vpop.xlane.xlu0 %3222
      %v3224 = vadd.f32 %v3136, %v3137
      %3225 = vadd.xlane.f32.xlu0 %v3224
      %v3226 = vpop.xlane.xlu0 %3225
      %v3227 = vadd.f32 %v3138, %v3139
      %3228 = vadd.xlane.f32.xlu0 %v3227
      %v3229 = vpop.xlane.xlu0 %3228
      %v3230 = vadd.f32 %v3140, %v3141
      %3231 = vadd.xlane.f32.xlu0 %v3230
      %v3232 = vpop.xlane.xlu0 %3231
      %v3233 = vadd.f32 %v3142, %v3143
      %3234 = vadd.xlane.f32.xlu0 %v3233
      %v3235 = vpop.xlane.xlu0 %3234
      %v3236 = vadd.f32 %v3144, %v3145
      %3237 = vadd.xlane.f32.xlu0 %v3236
      %v3238 = vpop.xlane.xlu0 %3237
      %v3239 = vadd.f32 %v3146, %v3147
      %3240 = vadd.xlane.f32.xlu0 %v3239
      %v3241 = vpop.xlane.xlu0 %3240
      %v3242 = vadd.f32 %v3148, %v3149
      %3243 = vadd.xlane.f32.xlu0 %v3242
      %v3244 = vpop.xlane.xlu0 %3243
      %v3245 = vadd.f32 %v3150, %v3151
      %3246 = vadd.xlane.f32.xlu0 %v3245
      %v3247 = vpop.xlane.xlu0 %3246
      %v3248 = vsel %vm302, %v3081, 0.0
      %v3249 = vsel %vm303, %v3085, 0.0
      %v3250 = vsel %vm304, %v3081, 0.0
      %v3251 = vsel %vm305, %v3085, 0.0
      %v3252 = vsel %vm306, %v3081, 0.0
      %v3253 = vsel %vm307, %v3085, 0.0
      %v3254 = vsel %vm308, %v3081, 0.0
      %v3255 = vsel %vm309, %v3085, 0.0
      %v3256 = vsel %vm310, %v3081, 0.0
      %v3257 = vsel %vm311, %v3085, 0.0
      %v3258 = vsel %vm312, %v3081, 0.0
      %v3259 = vsel %vm313, %v3085, 0.0
      %v3260 = vsel %vm314, %v3081, 0.0
      %v3261 = vsel %vm315, %v3085, 0.0
      %v3262 = vsel %vm316, %v3081, 0.0
      %v3263 = vsel %vm317, %v3085, 0.0
      %v3264 = vsel %vm318, %v3081, 0.0
      %v3265 = vsel %vm319, %v3085, 0.0
      %v3266 = vsel %vm320, %v3081, 0.0
      %v3267 = vsel %vm321, %v3085, 0.0
      %v3268 = vsel %vm322, %v3081, 0.0
      %v3269 = vsel %vm323, %v3085, 0.0
      %v3270 = vsel %vm324, %v3081, 0.0
      %v3271 = vsel %vm325, %v3085, 0.0
      %v3272 = vsel %vm326, %v3081, 0.0
      %v3273 = vsel %vm327, %v3085, 0.0
      %v3274 = vsel %vm328, %v3081, 0.0
      %v3275 = vsel %vm329, %v3085, 0.0
      %v3276 = vsel %vm330, %v3081, 0.0
      %v3277 = vsel %vm331, %v3085, 0.0
      %v3278 = vsel %vm332, %v3081, 0.0
      %v3279 = vsel %vm333, %v3085, 0.0
      %v3280 = vsel %vm334, %v3081, 0.0
      %v3281 = vsel %vm335, %v3085, 0.0
      %v3282 = vsel %vm336, %v3081, 0.0
      %v3283 = vsel %vm337, %v3085, 0.0
      %v3284 = vsel %vm338, %v3081, 0.0
      %v3285 = vsel %vm339, %v3085, 0.0
      %v3286 = vsel %vm340, %v3081, 0.0
      %v3287 = vsel %vm341, %v3085, 0.0
      %v3288 = vsel %vm342, %v3081, 0.0
      %v3289 = vsel %vm343, %v3085, 0.0
      %v3290 = vsel %vm344, %v3081, 0.0
      %v3291 = vsel %vm345, %v3085, 0.0
      %v3292 = vsel %vm346, %v3081, 0.0
      %v3293 = vsel %vm347, %v3085, 0.0
      %v3294 = vsel %vm348, %v3081, 0.0
      %v3295 = vsel %vm349, %v3085, 0.0
      %v3296 = vsel %vm350, %v3081, 0.0
      %v3297 = vsel %vm351, %v3085, 0.0
      %v3298 = vsel %vm352, %v3081, 0.0
      %v3299 = vsel %vm353, %v3085, 0.0
      %v3300 = vsel %vm354, %v3081, 0.0
      %v3301 = vsel %vm355, %v3085, 0.0
      %v3302 = vsel %vm356, %v3081, 0.0
      %v3303 = vsel %vm357, %v3085, 0.0
      %v3304 = vsel %vm358, %v3081, 0.0
      %v3305 = vsel %vm359, %v3085, 0.0
      %v3306 = vsel %vm360, %v3081, 0.0
      %v3307 = vsel %vm361, %v3085, 0.0
      %v3308 = vsel %vm362, %v3081, 0.0
      %v3309 = vsel %vm363, %v3085, 0.0
      %v3310 = vsel %vm364, %v3081, 0.0
      %v3311 = vsel %vm365, %v3085, 0.0
      %v3312 = vadd.f32 %v3248, %v3249
      %3313 = vadd.xlane.f32.xlu0 %v3312
      %v3314 = vpop.xlane.xlu0 %3313
      %v3315 = vadd.f32 %v3250, %v3251
      %3316 = vadd.xlane.f32.xlu0 %v3315
      %v3317 = vpop.xlane.xlu0 %3316
      %v3318 = vadd.f32 %v3252, %v3253
      %3319 = vadd.xlane.f32.xlu0 %v3318
      %v3320 = vpop.xlane.xlu0 %3319
      %v3321 = vadd.f32 %v3254, %v3255
      %3322 = vadd.xlane.f32.xlu0 %v3321
      %v3323 = vpop.xlane.xlu0 %3322
      %v3324 = vadd.f32 %v3256, %v3257
      %3325 = vadd.xlane.f32.xlu0 %v3324
      %v3326 = vpop.xlane.xlu0 %3325
      %v3327 = vadd.f32 %v3258, %v3259
      %3328 = vadd.xlane.f32.xlu0 %v3327
      %v3329 = vpop.xlane.xlu0 %3328
      %v3330 = vadd.f32 %v3260, %v3261
      %3331 = vadd.xlane.f32.xlu0 %v3330
      %v3332 = vpop.xlane.xlu0 %3331
      %v3333 = vadd.f32 %v3262, %v3263
      %3334 = vadd.xlane.f32.xlu0 %v3333
      %v3335 = vpop.xlane.xlu0 %3334
      %v3336 = vadd.f32 %v3264, %v3265
      %3337 = vadd.xlane.f32.xlu0 %v3336
      %v3338 = vpop.xlane.xlu0 %3337
      %v3339 = vadd.f32 %v3266, %v3267
      %3340 = vadd.xlane.f32.xlu0 %v3339
      %v3341 = vpop.xlane.xlu0 %3340
      %v3342 = vadd.f32 %v3268, %v3269
      %3343 = vadd.xlane.f32.xlu0 %v3342
      %v3344 = vpop.xlane.xlu0 %3343
      %v3345 = vadd.f32 %v3270, %v3271
      %3346 = vadd.xlane.f32.xlu0 %v3345
      %v3347 = vpop.xlane.xlu0 %3346
      %v3348 = vadd.f32 %v3272, %v3273
      %3349 = vadd.xlane.f32.xlu0 %v3348
      %v3350 = vpop.xlane.xlu0 %3349
      %v3351 = vadd.f32 %v3274, %v3275
      %3352 = vadd.xlane.f32.xlu0 %v3351
      %v3353 = vpop.xlane.xlu0 %3352
      %v3354 = vadd.f32 %v3276, %v3277
      %3355 = vadd.xlane.f32.xlu0 %v3354
      %v3356 = vpop.xlane.xlu0 %3355
      %v3357 = vadd.f32 %v3278, %v3279
      %3358 = vadd.xlane.f32.xlu0 %v3357
      %v3359 = vpop.xlane.xlu0 %3358
      %v3360 = vadd.f32 %v3280, %v3281
      %3361 = vadd.xlane.f32.xlu0 %v3360
      %v3362 = vpop.xlane.xlu0 %3361
      %v3363 = vadd.f32 %v3282, %v3283
      %3364 = vadd.xlane.f32.xlu0 %v3363
      %v3365 = vpop.xlane.xlu0 %3364
      %v3366 = vadd.f32 %v3284, %v3285
      %3367 = vadd.xlane.f32.xlu0 %v3366
      %v3368 = vpop.xlane.xlu0 %3367
      %v3369 = vadd.f32 %v3286, %v3287
      %3370 = vadd.xlane.f32.xlu0 %v3369
      %v3371 = vpop.xlane.xlu0 %3370
      %v3372 = vadd.f32 %v3288, %v3289
      %3373 = vadd.xlane.f32.xlu0 %v3372
      %v3374 = vpop.xlane.xlu0 %3373
      %v3375 = vadd.f32 %v3290, %v3291
      %3376 = vadd.xlane.f32.xlu0 %v3375
      %v3377 = vpop.xlane.xlu0 %3376
      %v3378 = vadd.f32 %v3292, %v3293
      %3379 = vadd.xlane.f32.xlu0 %v3378
      %v3380 = vpop.xlane.xlu0 %3379
      %v3381 = vadd.f32 %v3294, %v3295
      %3382 = vadd.xlane.f32.xlu0 %v3381
      %v3383 = vpop.xlane.xlu0 %3382
      %v3384 = vadd.f32 %v3296, %v3297
      %3385 = vadd.xlane.f32.xlu0 %v3384
      %v3386 = vpop.xlane.xlu0 %3385
      %v3387 = vadd.f32 %v3298, %v3299
      %3388 = vadd.xlane.f32.xlu0 %v3387
      %v3389 = vpop.xlane.xlu0 %3388
      %v3390 = vadd.f32 %v3300, %v3301
      %3391 = vadd.xlane.f32.xlu0 %v3390
      %v3392 = vpop.xlane.xlu0 %3391
      %v3393 = vadd.f32 %v3302, %v3303
      %3394 = vadd.xlane.f32.xlu0 %v3393
      %v3395 = vpop.xlane.xlu0 %3394
      %v3396 = vadd.f32 %v3304, %v3305
      %3397 = vadd.xlane.f32.xlu0 %v3396
      %v3398 = vpop.xlane.xlu0 %3397
      %v3399 = vadd.f32 %v3306, %v3307
      %3400 = vadd.xlane.f32.xlu0 %v3399
      %v3401 = vpop.xlane.xlu0 %3400
      %v3402 = vadd.f32 %v3308, %v3309
      %3403 = vadd.xlane.f32.xlu0 %v3402
      %v3404 = vpop.xlane.xlu0 %3403
      %v3405 = vadd.f32 %v3310, %v3311
      %3406 = vadd.xlane.f32.xlu0 %v3405
      %v3407 = vpop.xlane.xlu0 %3406
      %v3408 = vadd.f32 %v3314, 0.0
      %v3409 = vadd.f32 %v3317, 0.0
      %v3410 = vadd.f32 %v3320, 0.0
      %v3411 = vadd.f32 %v3323, 0.0
      %v3412 = vadd.f32 %v3326, 0.0
      %v3413 = vadd.f32 %v3329, 0.0
      %v3414 = vadd.f32 %v3332, 0.0
      %v3415 = vadd.f32 %v3335, 0.0
      %v3416 = vadd.f32 %v3338, 0.0
      %v3417 = vadd.f32 %v3341, 0.0
      %v3418 = vadd.f32 %v3344, 0.0
      %v3419 = vadd.f32 %v3347, 0.0
      %v3420 = vadd.f32 %v3350, 0.0
      %v3421 = vadd.f32 %v3353, 0.0
      %v3422 = vadd.f32 %v3356, 0.0
      %v3423 = vadd.f32 %v3359, 0.0
      %v3424 = vadd.f32 %v3362, 0.0
      %v3425 = vadd.f32 %v3365, 0.0
      %v3426 = vadd.f32 %v3368, 0.0
      %v3427 = vadd.f32 %v3371, 0.0
      %v3428 = vadd.f32 %v3374, 0.0
      %v3429 = vadd.f32 %v3377, 0.0
      %v3430 = vadd.f32 %v3380, 0.0
      %v3431 = vadd.f32 %v3383, 0.0
      %v3432 = vadd.f32 %v3386, 0.0
      %v3433 = vadd.f32 %v3389, 0.0
      %v3434 = vadd.f32 %v3392, 0.0
      %v3435 = vadd.f32 %v3395, 0.0
      %v3436 = vadd.f32 %v3398, 0.0
      %v3437 = vadd.f32 %v3401, 0.0
      %v3438 = vadd.f32 %v3404, 0.0
      %v3439 = vadd.f32 %v3407, 0.0
      %vm3440 = vcmp.gt.f32.partialorder %v3154, 0.5
      %vm3441 = vcmp.gt.f32.partialorder %v3157, 0.5
      %vm3442 = vcmp.gt.f32.partialorder %v3160, 0.5
      %vm3443 = vcmp.gt.f32.partialorder %v3163, 0.5
      %vm3444 = vcmp.gt.f32.partialorder %v3166, 0.5
      %vm3445 = vcmp.gt.f32.partialorder %v3169, 0.5
      %vm3446 = vcmp.gt.f32.partialorder %v3172, 0.5
      %vm3447 = vcmp.gt.f32.partialorder %v3175, 0.5
      %vm3448 = vcmp.gt.f32.partialorder %v3178, 0.5
      %vm3449 = vcmp.gt.f32.partialorder %v3181, 0.5
      %vm3450 = vcmp.gt.f32.partialorder %v3184, 0.5
      %vm3451 = vcmp.gt.f32.partialorder %v3187, 0.5
      %vm3452 = vcmp.gt.f32.partialorder %v3190, 0.5
      %vm3453 = vcmp.gt.f32.partialorder %v3193, 0.5
      %vm3454 = vcmp.gt.f32.partialorder %v3196, 0.5
      %vm3455 = vcmp.gt.f32.partialorder %v3199, 0.5
      %vm3456 = vcmp.gt.f32.partialorder %v3202, 0.5
      %vm3457 = vcmp.gt.f32.partialorder %v3205, 0.5
      %vm3458 = vcmp.gt.f32.partialorder %v3208, 0.5
      %vm3459 = vcmp.gt.f32.partialorder %v3211, 0.5
      %vm3460 = vcmp.gt.f32.partialorder %v3214, 0.5
      %vm3461 = vcmp.gt.f32.partialorder %v3217, 0.5
      %vm3462 = vcmp.gt.f32.partialorder %v3220, 0.5
      %vm3463 = vcmp.gt.f32.partialorder %v3223, 0.5
      %vm3464 = vcmp.gt.f32.partialorder %v3226, 0.5
      %vm3465 = vcmp.gt.f32.partialorder %v3229, 0.5
      %vm3466 = vcmp.gt.f32.partialorder %v3232, 0.5
      %vm3467 = vcmp.gt.f32.partialorder %v3235, 0.5
      %vm3468 = vcmp.gt.f32.partialorder %v3238, 0.5
      %vm3469 = vcmp.gt.f32.partialorder %v3241, 0.5
      %vm3470 = vcmp.gt.f32.partialorder %v3244, 0.5
      %vm3471 = vcmp.gt.f32.partialorder %v3247, 0.5
      %v3472 = vsel %vm3440, %v3408, -1.0
      %v3473 = vsel %vm3441, %v3409, -1.0
      %v3474 = vsel %vm3442, %v3410, -1.0
      %v3475 = vsel %vm3443, %v3411, -1.0
      %v3476 = vsel %vm3444, %v3412, -1.0
      %v3477 = vsel %vm3445, %v3413, -1.0
      %v3478 = vsel %vm3446, %v3414, -1.0
      %v3479 = vsel %vm3447, %v3415, -1.0
      %v3480 = vsel %vm3448, %v3416, -1.0
      %v3481 = vsel %vm3449, %v3417, -1.0
      %v3482 = vsel %vm3450, %v3418, -1.0
      %v3483 = vsel %vm3451, %v3419, -1.0
      %v3484 = vsel %vm3452, %v3420, -1.0
      %v3485 = vsel %vm3453, %v3421, -1.0
      %v3486 = vsel %vm3454, %v3422, -1.0
      %v3487 = vsel %vm3455, %v3423, -1.0
      %v3488 = vsel %vm3456, %v3424, -1.0
      %v3489 = vsel %vm3457, %v3425, -1.0
      %v3490 = vsel %vm3458, %v3426, -1.0
      %v3491 = vsel %vm3459, %v3427, -1.0
      %v3492 = vsel %vm3460, %v3428, -1.0
      %v3493 = vsel %vm3461, %v3429, -1.0
      %v3494 = vsel %vm3462, %v3430, -1.0
      %v3495 = vsel %vm3463, %v3431, -1.0
      %v3496 = vsel %vm3464, %v3432, -1.0
      %v3497 = vsel %vm3465, %v3433, -1.0
      %v3498 = vsel %vm3466, %v3434, -1.0
      %v3499 = vsel %vm3467, %v3435, -1.0
      %v3500 = vsel %vm3468, %v3436, -1.0
      %v3501 = vsel %vm3469, %v3437, -1.0
      %v3502 = vsel %vm3470, %v3438, -1.0
      %v3503 = vsel %vm3471, %v3439, -1.0
      %v3504 = vlaneseq
      %v3505 = vshrl.u32 %v3504, 7
      %v3506 = vsub.s32 0, %v3505
      %v3507 = vrot.slane %v3075, %v3506
      %vm3508 = vcmp.eq.f32.partialorder %v3472, %v3507
      %vm3509 = vcmp.eq.f32.partialorder %v3473, %v3507
      %vm3510 = vcmp.eq.f32.partialorder %v3474, %v3507
      %vm3511 = vcmp.eq.f32.partialorder %v3475, %v3507
      %vm3512 = vcmp.eq.f32.partialorder %v3476, %v3507
      %vm3513 = vcmp.eq.f32.partialorder %v3477, %v3507
      %vm3514 = vcmp.eq.f32.partialorder %v3478, %v3507
      %vm3515 = vcmp.eq.f32.partialorder %v3479, %v3507
      %vm3516 = vcmp.eq.f32.partialorder %v3480, %v3507
      %vm3517 = vcmp.eq.f32.partialorder %v3481, %v3507
      %vm3518 = vcmp.eq.f32.partialorder %v3482, %v3507
      %vm3519 = vcmp.eq.f32.partialorder %v3483, %v3507
      %vm3520 = vcmp.eq.f32.partialorder %v3484, %v3507
      %vm3521 = vcmp.eq.f32.partialorder %v3485, %v3507
      %vm3522 = vcmp.eq.f32.partialorder %v3486, %v3507
      %vm3523 = vcmp.eq.f32.partialorder %v3487, %v3507
      %vm3524 = vcmp.eq.f32.partialorder %v3488, %v3507
      %vm3525 = vcmp.eq.f32.partialorder %v3489, %v3507
      %vm3526 = vcmp.eq.f32.partialorder %v3490, %v3507
      %vm3527 = vcmp.eq.f32.partialorder %v3491, %v3507
      %vm3528 = vcmp.eq.f32.partialorder %v3492, %v3507
      %vm3529 = vcmp.eq.f32.partialorder %v3493, %v3507
      %vm3530 = vcmp.eq.f32.partialorder %v3494, %v3507
      %vm3531 = vcmp.eq.f32.partialorder %v3495, %v3507
      %vm3532 = vcmp.eq.f32.partialorder %v3496, %v3507
      %vm3533 = vcmp.eq.f32.partialorder %v3497, %v3507
      %vm3534 = vcmp.eq.f32.partialorder %v3498, %v3507
      %vm3535 = vcmp.eq.f32.partialorder %v3499, %v3507
      %vm3536 = vcmp.eq.f32.partialorder %v3500, %v3507
      %vm3537 = vcmp.eq.f32.partialorder %v3501, %v3507
      %vm3538 = vcmp.eq.f32.partialorder %v3502, %v3507
      %vm3539 = vcmp.eq.f32.partialorder %v3503, %v3507
      %v3540 = vsel %vm3508, 1, 0
      %v3541 = vsel %vm3509, 1, 0
      %v3542 = vsel %vm3510, 1, 0
      %v3543 = vsel %vm3511, 1, 0
      %v3544 = vsel %vm3512, 1, 0
      %v3545 = vsel %vm3513, 1, 0
      %v3546 = vsel %vm3514, 1, 0
      %v3547 = vsel %vm3515, 1, 0
      %v3548 = vsel %vm3516, 1, 0
      %v3549 = vsel %vm3517, 1, 0
      %v3550 = vsel %vm3518, 1, 0
      %v3551 = vsel %vm3519, 1, 0
      %v3552 = vsel %vm3520, 1, 0
      %v3553 = vsel %vm3521, 1, 0
      %v3554 = vsel %vm3522, 1, 0
      %v3555 = vsel %vm3523, 1, 0
      %v3556 = vsel %vm3524, 1, 0
      %v3557 = vsel %vm3525, 1, 0
      %v3558 = vsel %vm3526, 1, 0
      %v3559 = vsel %vm3527, 1, 0
      %v3560 = vsel %vm3528, 1, 0
      %v3561 = vsel %vm3529, 1, 0
      %v3562 = vsel %vm3530, 1, 0
      %v3563 = vsel %vm3531, 1, 0
      %v3564 = vsel %vm3532, 1, 0
      %v3565 = vsel %vm3533, 1, 0
      %v3566 = vsel %vm3534, 1, 0
      %v3567 = vsel %vm3535, 1, 0
      %v3568 = vsel %vm3536, 1, 0
      %v3569 = vsel %vm3537, 1, 0
      %v3570 = vsel %vm3538, 1, 0
      %v3571 = vsel %vm3539, 1, 0
      %v3572 = vcvt.s32.f32 %v3540
      %v3573 = vcvt.s32.f32 %v3541
      %v3574 = vcvt.s32.f32 %v3542
      %v3575 = vcvt.s32.f32 %v3543
      %v3576 = vcvt.s32.f32 %v3544
      %v3577 = vcvt.s32.f32 %v3545
      %v3578 = vcvt.s32.f32 %v3546
      %v3579 = vcvt.s32.f32 %v3547
      %v3580 = vcvt.s32.f32 %v3548
      %v3581 = vcvt.s32.f32 %v3549
      %v3582 = vcvt.s32.f32 %v3550
      %v3583 = vcvt.s32.f32 %v3551
      %v3584 = vcvt.s32.f32 %v3552
      %v3585 = vcvt.s32.f32 %v3553
      %v3586 = vcvt.s32.f32 %v3554
      %v3587 = vcvt.s32.f32 %v3555
      %v3588 = vcvt.s32.f32 %v3556
      %v3589 = vcvt.s32.f32 %v3557
      %v3590 = vcvt.s32.f32 %v3558
      %v3591 = vcvt.s32.f32 %v3559
      %v3592 = vcvt.s32.f32 %v3560
      %v3593 = vcvt.s32.f32 %v3561
      %v3594 = vcvt.s32.f32 %v3562
      %v3595 = vcvt.s32.f32 %v3563
      %v3596 = vcvt.s32.f32 %v3564
      %v3597 = vcvt.s32.f32 %v3565
      %v3598 = vcvt.s32.f32 %v3566
      %v3599 = vcvt.s32.f32 %v3567
      %v3600 = vcvt.s32.f32 %v3568
      %v3601 = vcvt.s32.f32 %v3569
      %v3602 = vcvt.s32.f32 %v3570
      %v3603 = vcvt.s32.f32 %v3571
      %v3604 = vld [vmem:[%s192] sm:$0x77]
      %v3605 = vsel %vm3055, %v3081, 0.0
      %v3606 = vsel %vm3055, %v3085, 0.0
      %v3607 = vadd.f32 %v3605, %v3606
      %3608 = vadd.xlane.f32.xlu0 %v3607
      %v3609 = vpop.xlane.xlu0 %3608
      %v3610 = vadd.f32 %v3609, 0.0
      %s3611 = scalar_lea.vmem [#allocation2], 2
      %v3612 = vld [vmem:[%s3611] sm:$0x3]
      %v3614 = vlaneseq
      %v3615 = vshrl.u32 %v3614, 7
      %v3616 = vsub.s32 0, %v3615
      %v3617 = vrot.slane %v3612, %v3616
      %v3618 = vlaneseq
      %v3619 = vshrl.u32 %v3618, 7
      %v3620 = vsub.s32 1, %v3619
      %v3621 = vrot.slane %v3612, %v3620
      %v3624 = vsel %vm238, %v3617, 0.0
      %v3625 = vsel %vm239, %v3621, 0.0
      %v3626 = vsel %vm240, %v3617, 0.0
      %v3627 = vsel %vm241, %v3621, 0.0
      %v3628 = vsel %vm242, %v3617, 0.0
      %v3629 = vsel %vm243, %v3621, 0.0
      %v3630 = vsel %vm244, %v3617, 0.0
      %v3631 = vsel %vm245, %v3621, 0.0
      %v3632 = vsel %vm246, %v3617, 0.0
      %v3633 = vsel %vm247, %v3621, 0.0
      %v3634 = vsel %vm248, %v3617, 0.0
      %v3635 = vsel %vm249, %v3621, 0.0
      %v3636 = vsel %vm250, %v3617, 0.0
      %v3637 = vsel %vm251, %v3621, 0.0
      %v3638 = vsel %vm252, %v3617, 0.0
      %v3639 = vsel %vm253, %v3621, 0.0
      %v3640 = vsel %vm254, %v3617, 0.0
      %v3641 = vsel %vm255, %v3621, 0.0
      %v3642 = vsel %vm256, %v3617, 0.0
      %v3643 = vsel %vm257, %v3621, 0.0
      %v3644 = vsel %vm258, %v3617, 0.0
      %v3645 = vsel %vm259, %v3621, 0.0
      %v3646 = vsel %vm260, %v3617, 0.0
      %v3647 = vsel %vm261, %v3621, 0.0
      %v3648 = vsel %vm262, %v3617, 0.0
      %v3649 = vsel %vm263, %v3621, 0.0
      %v3650 = vsel %vm264, %v3617, 0.0
      %v3651 = vsel %vm265, %v3621, 0.0
      %v3652 = vsel %vm266, %v3617, 0.0
      %v3653 = vsel %vm267, %v3621, 0.0
      %v3654 = vsel %vm268, %v3617, 0.0
      %v3655 = vsel %vm269, %v3621, 0.0
      %v3656 = vsel %vm270, %v3617, 0.0
      %v3657 = vsel %vm271, %v3621, 0.0
      %v3658 = vsel %vm272, %v3617, 0.0
      %v3659 = vsel %vm273, %v3621, 0.0
      %v3660 = vsel %vm274, %v3617, 0.0
      %v3661 = vsel %vm275, %v3621, 0.0
      %v3662 = vsel %vm276, %v3617, 0.0
      %v3663 = vsel %vm277, %v3621, 0.0
      %v3664 = vsel %vm278, %v3617, 0.0
      %v3665 = vsel %vm279, %v3621, 0.0
      %v3666 = vsel %vm280, %v3617, 0.0
      %v3667 = vsel %vm281, %v3621, 0.0
      %v3668 = vsel %vm282, %v3617, 0.0
      %v3669 = vsel %vm283, %v3621, 0.0
      %v3670 = vsel %vm284, %v3617, 0.0
      %v3671 = vsel %vm285, %v3621, 0.0
      %v3672 = vsel %vm286, %v3617, 0.0
      %v3673 = vsel %vm287, %v3621, 0.0
      %v3674 = vsel %vm288, %v3617, 0.0
      %v3675 = vsel %vm289, %v3621, 0.0
      %v3676 = vsel %vm290, %v3617, 0.0
      %v3677 = vsel %vm291, %v3621, 0.0
      %v3678 = vsel %vm292, %v3617, 0.0
      %v3679 = vsel %vm293, %v3621, 0.0
      %v3680 = vsel %vm294, %v3617, 0.0
      %v3681 = vsel %vm295, %v3621, 0.0
      %v3682 = vsel %vm296, %v3617, 0.0
      %v3683 = vsel %vm297, %v3621, 0.0
      %v3684 = vsel %vm298, %v3617, 0.0
      %v3685 = vsel %vm299, %v3621, 0.0
      %v3686 = vsel %vm300, %v3617, 0.0
      %v3687 = vsel %vm301, %v3621, 0.0
      %v3688 = vadd.f32 %v3624, %v3625
      %3689 = vadd.xlane.f32.xlu0 %v3688
      %v3690 = vpop.xlane.xlu0 %3689
      %v3691 = vadd.f32 %v3626, %v3627
      %3692 = vadd.xlane.f32.xlu0 %v3691
      %v3693 = vpop.xlane.xlu0 %3692
      %v3694 = vadd.f32 %v3628, %v3629
      %3695 = vadd.xlane.f32.xlu0 %v3694
      %v3696 = vpop.xlane.xlu0 %3695
      %v3697 = vadd.f32 %v3630, %v3631
      %3698 = vadd.xlane.f32.xlu0 %v3697
      %v3699 = vpop.xlane.xlu0 %3698
      %v3700 = vadd.f32 %v3632, %v3633
      %3701 = vadd.xlane.f32.xlu0 %v3700
      %v3702 = vpop.xlane.xlu0 %3701
      %v3703 = vadd.f32 %v3634, %v3635
      %3704 = vadd.xlane.f32.xlu0 %v3703
      %v3705 = vpop.xlane.xlu0 %3704
      %v3706 = vadd.f32 %v3636, %v3637
      %3707 = vadd.xlane.f32.xlu0 %v3706
      %v3708 = vpop.xlane.xlu0 %3707
      %v3709 = vadd.f32 %v3638, %v3639
      %3710 = vadd.xlane.f32.xlu0 %v3709
      %v3711 = vpop.xlane.xlu0 %3710
      %v3712 = vadd.f32 %v3640, %v3641
      %3713 = vadd.xlane.f32.xlu0 %v3712
      %v3714 = vpop.xlane.xlu0 %3713
      %v3715 = vadd.f32 %v3642, %v3643
      %3716 = vadd.xlane.f32.xlu0 %v3715
      %v3717 = vpop.xlane.xlu0 %3716
      %v3718 = vadd.f32 %v3644, %v3645
      %3719 = vadd.xlane.f32.xlu0 %v3718
      %v3720 = vpop.xlane.xlu0 %3719
      %v3721 = vadd.f32 %v3646, %v3647
      %3722 = vadd.xlane.f32.xlu0 %v3721
      %v3723 = vpop.xlane.xlu0 %3722
      %v3724 = vadd.f32 %v3648, %v3649
      %3725 = vadd.xlane.f32.xlu0 %v3724
      %v3726 = vpop.xlane.xlu0 %3725
      %v3727 = vadd.f32 %v3650, %v3651
      %3728 = vadd.xlane.f32.xlu0 %v3727
      %v3729 = vpop.xlane.xlu0 %3728
      %v3730 = vadd.f32 %v3652, %v3653
      %3731 = vadd.xlane.f32.xlu0 %v3730
      %v3732 = vpop.xlane.xlu0 %3731
      %v3733 = vadd.f32 %v3654, %v3655
      %3734 = vadd.xlane.f32.xlu0 %v3733
      %v3735 = vpop.xlane.xlu0 %3734
      %v3736 = vadd.f32 %v3656, %v3657
      %3737 = vadd.xlane.f32.xlu0 %v3736
      %v3738 = vpop.xlane.xlu0 %3737
      %v3739 = vadd.f32 %v3658, %v3659
      %3740 = vadd.xlane.f32.xlu0 %v3739
      %v3741 = vpop.xlane.xlu0 %3740
      %v3742 = vadd.f32 %v3660, %v3661
      %3743 = vadd.xlane.f32.xlu0 %v3742
      %v3744 = vpop.xlane.xlu0 %3743
      %v3745 = vadd.f32 %v3662, %v3663
      %3746 = vadd.xlane.f32.xlu0 %v3745
      %v3747 = vpop.xlane.xlu0 %3746
      %v3748 = vadd.f32 %v3664, %v3665
      %3749 = vadd.xlane.f32.xlu0 %v3748
      %v3750 = vpop.xlane.xlu0 %3749
      %v3751 = vadd.f32 %v3666, %v3667
      %3752 = vadd.xlane.f32.xlu0 %v3751
      %v3753 = vpop.xlane.xlu0 %3752
      %v3754 = vadd.f32 %v3668, %v3669
      %3755 = vadd.xlane.f32.xlu0 %v3754
      %v3756 = vpop.xlane.xlu0 %3755
      %v3757 = vadd.f32 %v3670, %v3671
      %3758 = vadd.xlane.f32.xlu0 %v3757
      %v3759 = vpop.xlane.xlu0 %3758
      %v3760 = vadd.f32 %v3672, %v3673
      %3761 = vadd.xlane.f32.xlu0 %v3760
      %v3762 = vpop.xlane.xlu0 %3761
      %v3763 = vadd.f32 %v3674, %v3675
      %3764 = vadd.xlane.f32.xlu0 %v3763
      %v3765 = vpop.xlane.xlu0 %3764
      %v3766 = vadd.f32 %v3676, %v3677
      %3767 = vadd.xlane.f32.xlu0 %v3766
      %v3768 = vpop.xlane.xlu0 %3767
      %v3769 = vadd.f32 %v3678, %v3679
      %3770 = vadd.xlane.f32.xlu0 %v3769
      %v3771 = vpop.xlane.xlu0 %3770
      %v3772 = vadd.f32 %v3680, %v3681
      %3773 = vadd.xlane.f32.xlu0 %v3772
      %v3774 = vpop.xlane.xlu0 %3773
      %v3775 = vadd.f32 %v3682, %v3683
      %3776 = vadd.xlane.f32.xlu0 %v3775
      %v3777 = vpop.xlane.xlu0 %3776
      %v3778 = vadd.f32 %v3684, %v3685
      %3779 = vadd.xlane.f32.xlu0 %v3778
      %v3780 = vpop.xlane.xlu0 %3779
      %v3781 = vadd.f32 %v3686, %v3687
      %3782 = vadd.xlane.f32.xlu0 %v3781
      %v3783 = vpop.xlane.xlu0 %3782
      %v3784 = vsel %vm302, %v3617, 0.0
      %v3785 = vsel %vm303, %v3621, 0.0
      %v3786 = vsel %vm304, %v3617, 0.0
      %v3787 = vsel %vm305, %v3621, 0.0
      %v3788 = vsel %vm306, %v3617, 0.0
      %v3789 = vsel %vm307, %v3621, 0.0
      %v3790 = vsel %vm308, %v3617, 0.0
      %v3791 = vsel %vm309, %v3621, 0.0
      %v3792 = vsel %vm310, %v3617, 0.0
      %v3793 = vsel %vm311, %v3621, 0.0
      %v3794 = vsel %vm312, %v3617, 0.0
      %v3795 = vsel %vm313, %v3621, 0.0
      %v3796 = vsel %vm314, %v3617, 0.0
      %v3797 = vsel %vm315, %v3621, 0.0
      %v3798 = vsel %vm316, %v3617, 0.0
      %v3799 = vsel %vm317, %v3621, 0.0
      %v3800 = vsel %vm318, %v3617, 0.0
      %v3801 = vsel %vm319, %v3621, 0.0
      %v3802 = vsel %vm320, %v3617, 0.0
      %v3803 = vsel %vm321, %v3621, 0.0
      %v3804 = vsel %vm322, %v3617, 0.0
      %v3805 = vsel %vm323, %v3621, 0.0
      %v3806 = vsel %vm324, %v3617, 0.0
      %v3807 = vsel %vm325, %v3621, 0.0
      %v3808 = vsel %vm326, %v3617, 0.0
      %v3809 = vsel %vm327, %v3621, 0.0
      %v3810 = vsel %vm328, %v3617, 0.0
      %v3811 = vsel %vm329, %v3621, 0.0
      %v3812 = vsel %vm330, %v3617, 0.0
      %v3813 = vsel %vm331, %v3621, 0.0
      %v3814 = vsel %vm332, %v3617, 0.0
      %v3815 = vsel %vm333, %v3621, 0.0
      %v3816 = vsel %vm334, %v3617, 0.0
      %v3817 = vsel %vm335, %v3621, 0.0
      %v3818 = vsel %vm336, %v3617, 0.0
      %v3819 = vsel %vm337, %v3621, 0.0
      %v3820 = vsel %vm338, %v3617, 0.0
      %v3821 = vsel %vm339, %v3621, 0.0
      %v3822 = vsel %vm340, %v3617, 0.0
      %v3823 = vsel %vm341, %v3621, 0.0
      %v3824 = vsel %vm342, %v3617, 0.0
      %v3825 = vsel %vm343, %v3621, 0.0
      %v3826 = vsel %vm344, %v3617, 0.0
      %v3827 = vsel %vm345, %v3621, 0.0
      %v3828 = vsel %vm346, %v3617, 0.0
      %v3829 = vsel %vm347, %v3621, 0.0
      %v3830 = vsel %vm348, %v3617, 0.0
      %v3831 = vsel %vm349, %v3621, 0.0
      %v3832 = vsel %vm350, %v3617, 0.0
      %v3833 = vsel %vm351, %v3621, 0.0
      %v3834 = vsel %vm352, %v3617, 0.0
      %v3835 = vsel %vm353, %v3621, 0.0
      %v3836 = vsel %vm354, %v3617, 0.0
      %v3837 = vsel %vm355, %v3621, 0.0
      %v3838 = vsel %vm356, %v3617, 0.0
      %v3839 = vsel %vm357, %v3621, 0.0
      %v3840 = vsel %vm358, %v3617, 0.0
      %v3841 = vsel %vm359, %v3621, 0.0
      %v3842 = vsel %vm360, %v3617, 0.0
      %v3843 = vsel %vm361, %v3621, 0.0
      %v3844 = vsel %vm362, %v3617, 0.0
      %v3845 = vsel %vm363, %v3621, 0.0
      %v3846 = vsel %vm364, %v3617, 0.0
      %v3847 = vsel %vm365, %v3621, 0.0
      %v3848 = vadd.f32 %v3784, %v3785
      %3849 = vadd.xlane.f32.xlu0 %v3848
      %v3850 = vpop.xlane.xlu0 %3849
      %v3851 = vadd.f32 %v3786, %v3787
      %3852 = vadd.xlane.f32.xlu0 %v3851
      %v3853 = vpop.xlane.xlu0 %3852
      %v3854 = vadd.f32 %v3788, %v3789
      %3855 = vadd.xlane.f32.xlu0 %v3854
      %v3856 = vpop.xlane.xlu0 %3855
      %v3857 = vadd.f32 %v3790, %v3791
      %3858 = vadd.xlane.f32.xlu0 %v3857
      %v3859 = vpop.xlane.xlu0 %3858
      %v3860 = vadd.f32 %v3792, %v3793
      %3861 = vadd.xlane.f32.xlu0 %v3860
      %v3862 = vpop.xlane.xlu0 %3861
      %v3863 = vadd.f32 %v3794, %v3795
      %3864 = vadd.xlane.f32.xlu0 %v3863
      %v3865 = vpop.xlane.xlu0 %3864
      %v3866 = vadd.f32 %v3796, %v3797
      %3867 = vadd.xlane.f32.xlu0 %v3866
      %v3868 = vpop.xlane.xlu0 %3867
      %v3869 = vadd.f32 %v3798, %v3799
      %3870 = vadd.xlane.f32.xlu0 %v3869
      %v3871 = vpop.xlane.xlu0 %3870
      %v3872 = vadd.f32 %v3800, %v3801
      %3873 = vadd.xlane.f32.xlu0 %v3872
      %v3874 = vpop.xlane.xlu0 %3873
      %v3875 = vadd.f32 %v3802, %v3803
      %3876 = vadd.xlane.f32.xlu0 %v3875
      %v3877 = vpop.xlane.xlu0 %3876
      %v3878 = vadd.f32 %v3804, %v3805
      %3879 = vadd.xlane.f32.xlu0 %v3878
      %v3880 = vpop.xlane.xlu0 %3879
      %v3881 = vadd.f32 %v3806, %v3807
      %3882 = vadd.xlane.f32.xlu0 %v3881
      %v3883 = vpop.xlane.xlu0 %3882
      %v3884 = vadd.f32 %v3808, %v3809
      %3885 = vadd.xlane.f32.xlu0 %v3884
      %v3886 = vpop.xlane.xlu0 %3885
      %v3887 = vadd.f32 %v3810, %v3811
      %3888 = vadd.xlane.f32.xlu0 %v3887
      %v3889 = vpop.xlane.xlu0 %3888
      %v3890 = vadd.f32 %v3812, %v3813
      %3891 = vadd.xlane.f32.xlu0 %v3890
      %v3892 = vpop.xlane.xlu0 %3891
      %v3893 = vadd.f32 %v3814, %v3815
      %3894 = vadd.xlane.f32.xlu0 %v3893
      %v3895 = vpop.xlane.xlu0 %3894
      %v3896 = vadd.f32 %v3816, %v3817
      %3897 = vadd.xlane.f32.xlu0 %v3896
      %v3898 = vpop.xlane.xlu0 %3897
      %v3899 = vadd.f32 %v3818, %v3819
      %3900 = vadd.xlane.f32.xlu0 %v3899
      %v3901 = vpop.xlane.xlu0 %3900
      %v3902 = vadd.f32 %v3820, %v3821
      %3903 = vadd.xlane.f32.xlu0 %v3902
      %v3904 = vpop.xlane.xlu0 %3903
      %v3905 = vadd.f32 %v3822, %v3823
      %3906 = vadd.xlane.f32.xlu0 %v3905
      %v3907 = vpop.xlane.xlu0 %3906
      %v3908 = vadd.f32 %v3824, %v3825
      %3909 = vadd.xlane.f32.xlu0 %v3908
      %v3910 = vpop.xlane.xlu0 %3909
      %v3911 = vadd.f32 %v3826, %v3827
      %3912 = vadd.xlane.f32.xlu0 %v3911
      %v3913 = vpop.xlane.xlu0 %3912
      %v3914 = vadd.f32 %v3828, %v3829
      %3915 = vadd.xlane.f32.xlu0 %v3914
      %v3916 = vpop.xlane.xlu0 %3915
      %v3917 = vadd.f32 %v3830, %v3831
      %3918 = vadd.xlane.f32.xlu0 %v3917
      %v3919 = vpop.xlane.xlu0 %3918
      %v3920 = vadd.f32 %v3832, %v3833
      %3921 = vadd.xlane.f32.xlu0 %v3920
      %v3922 = vpop.xlane.xlu0 %3921
      %v3923 = vadd.f32 %v3834, %v3835
      %3924 = vadd.xlane.f32.xlu0 %v3923
      %v3925 = vpop.xlane.xlu0 %3924
      %v3926 = vadd.f32 %v3836, %v3837
      %3927 = vadd.xlane.f32.xlu0 %v3926
      %v3928 = vpop.xlane.xlu0 %3927
      %v3929 = vadd.f32 %v3838, %v3839
      %3930 = vadd.xlane.f32.xlu0 %v3929
      %v3931 = vpop.xlane.xlu0 %3930
      %v3932 = vadd.f32 %v3840, %v3841
      %3933 = vadd.xlane.f32.xlu0 %v3932
      %v3934 = vpop.xlane.xlu0 %3933
      %v3935 = vadd.f32 %v3842, %v3843
      %3936 = vadd.xlane.f32.xlu0 %v3935
      %v3937 = vpop.xlane.xlu0 %3936
      %v3938 = vadd.f32 %v3844, %v3845
      %3939 = vadd.xlane.f32.xlu0 %v3938
      %v3940 = vpop.xlane.xlu0 %3939
      %v3941 = vadd.f32 %v3846, %v3847
      %3942 = vadd.xlane.f32.xlu0 %v3941
      %v3943 = vpop.xlane.xlu0 %3942
      %v3944 = vlaneseq
      %v3945 = vshrl.u32 %v3944, 7
      %v3946 = vsub.s32 0, %v3945
      %v3947 = vrot.slane %v3610, %v3946
      %v3948 = vadd.f32 %v3947, %v3850
      %v3949 = vadd.f32 %v3947, %v3853
      %v3950 = vadd.f32 %v3947, %v3856
      %v3951 = vadd.f32 %v3947, %v3859
      %v3952 = vadd.f32 %v3947, %v3862
      %v3953 = vadd.f32 %v3947, %v3865
      %v3954 = vadd.f32 %v3947, %v3868
      %v3955 = vadd.f32 %v3947, %v3871
      %v3956 = vadd.f32 %v3947, %v3874
      %v3957 = vadd.f32 %v3947, %v3877
      %v3958 = vadd.f32 %v3947, %v3880
      %v3959 = vadd.f32 %v3947, %v3883
      %v3960 = vadd.f32 %v3947, %v3886
      %v3961 = vadd.f32 %v3947, %v3889
      %v3962 = vadd.f32 %v3947, %v3892
      %v3963 = vadd.f32 %v3947, %v3895
      %v3964 = vadd.f32 %v3947, %v3898
      %v3965 = vadd.f32 %v3947, %v3901
      %v3966 = vadd.f32 %v3947, %v3904
      %v3967 = vadd.f32 %v3947, %v3907
      %v3968 = vadd.f32 %v3947, %v3910
      %v3969 = vadd.f32 %v3947, %v3913
      %v3970 = vadd.f32 %v3947, %v3916
      %v3971 = vadd.f32 %v3947, %v3919
      %v3972 = vadd.f32 %v3947, %v3922
      %v3973 = vadd.f32 %v3947, %v3925
      %v3974 = vadd.f32 %v3947, %v3928
      %v3975 = vadd.f32 %v3947, %v3931
      %v3976 = vadd.f32 %v3947, %v3934
      %v3977 = vadd.f32 %v3947, %v3937
      %v3978 = vadd.f32 %v3947, %v3940
      %v3979 = vadd.f32 %v3947, %v3943
      %vm3980 = vcmp.gt.f32.partialorder %v3690, 0.5
      %vm3981 = vcmp.gt.f32.partialorder %v3693, 0.5
      %vm3982 = vcmp.gt.f32.partialorder %v3696, 0.5
      %vm3983 = vcmp.gt.f32.partialorder %v3699, 0.5
      %vm3984 = vcmp.gt.f32.partialorder %v3702, 0.5
      %vm3985 = vcmp.gt.f32.partialorder %v3705, 0.5
      %vm3986 = vcmp.gt.f32.partialorder %v3708, 0.5
      %vm3987 = vcmp.gt.f32.partialorder %v3711, 0.5
      %vm3988 = vcmp.gt.f32.partialorder %v3714, 0.5
      %vm3989 = vcmp.gt.f32.partialorder %v3717, 0.5
      %vm3990 = vcmp.gt.f32.partialorder %v3720, 0.5
      %vm3991 = vcmp.gt.f32.partialorder %v3723, 0.5
      %vm3992 = vcmp.gt.f32.partialorder %v3726, 0.5
      %vm3993 = vcmp.gt.f32.partialorder %v3729, 0.5
      %vm3994 = vcmp.gt.f32.partialorder %v3732, 0.5
      %vm3995 = vcmp.gt.f32.partialorder %v3735, 0.5
      %vm3996 = vcmp.gt.f32.partialorder %v3738, 0.5
      %vm3997 = vcmp.gt.f32.partialorder %v3741, 0.5
      %vm3998 = vcmp.gt.f32.partialorder %v3744, 0.5
      %vm3999 = vcmp.gt.f32.partialorder %v3747, 0.5
      %vm4000 = vcmp.gt.f32.partialorder %v3750, 0.5
      %vm4001 = vcmp.gt.f32.partialorder %v3753, 0.5
      %vm4002 = vcmp.gt.f32.partialorder %v3756, 0.5
      %vm4003 = vcmp.gt.f32.partialorder %v3759, 0.5
      %vm4004 = vcmp.gt.f32.partialorder %v3762, 0.5
      %vm4005 = vcmp.gt.f32.partialorder %v3765, 0.5
      %vm4006 = vcmp.gt.f32.partialorder %v3768, 0.5
      %vm4007 = vcmp.gt.f32.partialorder %v3771, 0.5
      %vm4008 = vcmp.gt.f32.partialorder %v3774, 0.5
      %vm4009 = vcmp.gt.f32.partialorder %v3777, 0.5
      %vm4010 = vcmp.gt.f32.partialorder %v3780, 0.5
      %vm4011 = vcmp.gt.f32.partialorder %v3783, 0.5
      %v4012 = vsel %vm3980, %v3948, -1.0
      %v4013 = vsel %vm3981, %v3949, -1.0
      %v4014 = vsel %vm3982, %v3950, -1.0
      %v4015 = vsel %vm3983, %v3951, -1.0
      %v4016 = vsel %vm3984, %v3952, -1.0
      %v4017 = vsel %vm3985, %v3953, -1.0
      %v4018 = vsel %vm3986, %v3954, -1.0
      %v4019 = vsel %vm3987, %v3955, -1.0
      %v4020 = vsel %vm3988, %v3956, -1.0
      %v4021 = vsel %vm3989, %v3957, -1.0
      %v4022 = vsel %vm3990, %v3958, -1.0
      %v4023 = vsel %vm3991, %v3959, -1.0
      %v4024 = vsel %vm3992, %v3960, -1.0
      %v4025 = vsel %vm3993, %v3961, -1.0
      %v4026 = vsel %vm3994, %v3962, -1.0
      %v4027 = vsel %vm3995, %v3963, -1.0
      %v4028 = vsel %vm3996, %v3964, -1.0
      %v4029 = vsel %vm3997, %v3965, -1.0
      %v4030 = vsel %vm3998, %v3966, -1.0
      %v4031 = vsel %vm3999, %v3967, -1.0
      %v4032 = vsel %vm4000, %v3968, -1.0
      %v4033 = vsel %vm4001, %v3969, -1.0
      %v4034 = vsel %vm4002, %v3970, -1.0
      %v4035 = vsel %vm4003, %v3971, -1.0
      %v4036 = vsel %vm4004, %v3972, -1.0
      %v4037 = vsel %vm4005, %v3973, -1.0
      %v4038 = vsel %vm4006, %v3974, -1.0
      %v4039 = vsel %vm4007, %v3975, -1.0
      %v4040 = vsel %vm4008, %v3976, -1.0
      %v4041 = vsel %vm4009, %v3977, -1.0
      %v4042 = vsel %vm4010, %v3978, -1.0
      %v4043 = vsel %vm4011, %v3979, -1.0
      %vm4044 = vcmp.eq.f32.partialorder %v4012, %v3507
      %vm4045 = vcmp.eq.f32.partialorder %v4013, %v3507
      %vm4046 = vcmp.eq.f32.partialorder %v4014, %v3507
      %vm4047 = vcmp.eq.f32.partialorder %v4015, %v3507
      %vm4048 = vcmp.eq.f32.partialorder %v4016, %v3507
      %vm4049 = vcmp.eq.f32.partialorder %v4017, %v3507
      %vm4050 = vcmp.eq.f32.partialorder %v4018, %v3507
      %vm4051 = vcmp.eq.f32.partialorder %v4019, %v3507
      %vm4052 = vcmp.eq.f32.partialorder %v4020, %v3507
      %vm4053 = vcmp.eq.f32.partialorder %v4021, %v3507
      %vm4054 = vcmp.eq.f32.partialorder %v4022, %v3507
      %vm4055 = vcmp.eq.f32.partialorder %v4023, %v3507
      %vm4056 = vcmp.eq.f32.partialorder %v4024, %v3507
      %vm4057 = vcmp.eq.f32.partialorder %v4025, %v3507
      %vm4058 = vcmp.eq.f32.partialorder %v4026, %v3507
      %vm4059 = vcmp.eq.f32.partialorder %v4027, %v3507
      %vm4060 = vcmp.eq.f32.partialorder %v4028, %v3507
      %vm4061 = vcmp.eq.f32.partialorder %v4029, %v3507
      %vm4062 = vcmp.eq.f32.partialorder %v4030, %v3507
      %vm4063 = vcmp.eq.f32.partialorder %v4031, %v3507
      %vm4064 = vcmp.eq.f32.partialorder %v4032, %v3507
      %vm4065 = vcmp.eq.f32.partialorder %v4033, %v3507
      %vm4066 = vcmp.eq.f32.partialorder %v4034, %v3507
      %vm4067 = vcmp.eq.f32.partialorder %v4035, %v3507
      %vm4068 = vcmp.eq.f32.partialorder %v4036, %v3507
      %vm4069 = vcmp.eq.f32.partialorder %v4037, %v3507
      %vm4070 = vcmp.eq.f32.partialorder %v4038, %v3507
      %vm4071 = vcmp.eq.f32.partialorder %v4039, %v3507
      %vm4072 = vcmp.eq.f32.partialorder %v4040, %v3507
      %vm4073 = vcmp.eq.f32.partialorder %v4041, %v3507
      %vm4074 = vcmp.eq.f32.partialorder %v4042, %v3507
      %vm4075 = vcmp.eq.f32.partialorder %v4043, %v3507
      %v4076 = vsel %vm4044, 1, 0
      %v4077 = vsel %vm4045, 1, 0
      %v4078 = vsel %vm4046, 1, 0
      %v4079 = vsel %vm4047, 1, 0
      %v4080 = vsel %vm4048, 1, 0
      %v4081 = vsel %vm4049, 1, 0
      %v4082 = vsel %vm4050, 1, 0
      %v4083 = vsel %vm4051, 1, 0
      %v4084 = vsel %vm4052, 1, 0
      %v4085 = vsel %vm4053, 1, 0
      %v4086 = vsel %vm4054, 1, 0
      %v4087 = vsel %vm4055, 1, 0
      %v4088 = vsel %vm4056, 1, 0
      %v4089 = vsel %vm4057, 1, 0
      %v4090 = vsel %vm4058, 1, 0
      %v4091 = vsel %vm4059, 1, 0
      %v4092 = vsel %vm4060, 1, 0
      %v4093 = vsel %vm4061, 1, 0
      %v4094 = vsel %vm4062, 1, 0
      %v4095 = vsel %vm4063, 1, 0
      %v4096 = vsel %vm4064, 1, 0
      %v4097 = vsel %vm4065, 1, 0
      %v4098 = vsel %vm4066, 1, 0
      %v4099 = vsel %vm4067, 1, 0
      %v4100 = vsel %vm4068, 1, 0
      %v4101 = vsel %vm4069, 1, 0
      %v4102 = vsel %vm4070, 1, 0
      %v4103 = vsel %vm4071, 1, 0
      %v4104 = vsel %vm4072, 1, 0
      %v4105 = vsel %vm4073, 1, 0
      %v4106 = vsel %vm4074, 1, 0
      %v4107 = vsel %vm4075, 1, 0
      %v4108 = vcvt.s32.f32 %v4076
      %v4109 = vcvt.s32.f32 %v4077
      %v4110 = vcvt.s32.f32 %v4078
      %v4111 = vcvt.s32.f32 %v4079
      %v4112 = vcvt.s32.f32 %v4080
      %v4113 = vcvt.s32.f32 %v4081
      %v4114 = vcvt.s32.f32 %v4082
      %v4115 = vcvt.s32.f32 %v4083
      %v4116 = vcvt.s32.f32 %v4084
      %v4117 = vcvt.s32.f32 %v4085
      %v4118 = vcvt.s32.f32 %v4086
      %v4119 = vcvt.s32.f32 %v4087
      %v4120 = vcvt.s32.f32 %v4088
      %v4121 = vcvt.s32.f32 %v4089
      %v4122 = vcvt.s32.f32 %v4090
      %v4123 = vcvt.s32.f32 %v4091
      %v4124 = vcvt.s32.f32 %v4092
      %v4125 = vcvt.s32.f32 %v4093
      %v4126 = vcvt.s32.f32 %v4094
      %v4127 = vcvt.s32.f32 %v4095
      %v4128 = vcvt.s32.f32 %v4096
      %v4129 = vcvt.s32.f32 %v4097
      %v4130 = vcvt.s32.f32 %v4098
      %v4131 = vcvt.s32.f32 %v4099
      %v4132 = vcvt.s32.f32 %v4100
      %v4133 = vcvt.s32.f32 %v4101
      %v4134 = vcvt.s32.f32 %v4102
      %v4135 = vcvt.s32.f32 %v4103
      %v4136 = vcvt.s32.f32 %v4104
      %v4137 = vcvt.s32.f32 %v4105
      %v4138 = vcvt.s32.f32 %v4106
      %v4139 = vcvt.s32.f32 %v4107
      %s4140 = scalar_lea.vmem %s192, 8
      %v4141 = vld [vmem:[%s4140] sm:$0x77]
      %v4143 = vcombine.high %v4141, %v4141
      %4145 = vmatprep.subr.mxu0 0.0
      %4146 = vmatpush1.msra.mxu0 %v4123
      %4147 = vmatprep.subr.mxu0 0.0
      %4148 = vmatpush1.msra.mxu0 %v4122
      %4149 = vmatprep.subr.mxu0 0.0
      %4150 = vmatpush1.msra.mxu0 %v4121
      %4151 = vmatprep.subr.mxu0 0.0
      %4152 = vmatpush1.msra.mxu0 %v4120
      %4153 = vmatprep.subr.mxu0 0.0
      %4154 = vmatpush1.msra.mxu0 %v4119
      %4155 = vmatprep.subr.mxu0 0.0
      %4156 = vmatpush1.msra.mxu0 %v4118
      %4157 = vmatprep.subr.mxu0 0.0
      %4158 = vmatpush1.msra.mxu0 %v4117
      %4159 = vmatprep.subr.mxu0 0.0
      %4160 = vmatpush1.msra.mxu0 %v4116
      %4161 = vmatprep.subr.mxu0 0.0
      %4162 = vmatpush1.msra.mxu0 %v4115
      %4163 = vmatprep.subr.mxu0 0.0
      %4164 = vmatpush1.msra.mxu0 %v4114
      %4165 = vmatprep.subr.mxu0 0.0
      %4166 = vmatpush1.msra.mxu0 %v4113
      %4167 = vmatprep.subr.mxu0 0.0
      %4168 = vmatpush1.msra.mxu0 %v4112
      %4169 = vmatprep.subr.mxu0 0.0
      %4170 = vmatpush1.msra.mxu0 %v4111
      %4171 = vmatprep.subr.mxu0 0.0
      %4172 = vmatpush1.msra.mxu0 %v4110
      %4173 = vmatprep.subr.mxu0 0.0
      %4174 = vmatpush1.msra.mxu0 %v4109
      %4175 = vmatprep.subr.mxu0 0.0
      %4176 = vmatpush1.msra.mxu0 %v4108
      %4177 = vmatprep.subr.mxu0 0.0
      %4178 = vmatpush2.msra.mxu0 %v4139
      %4179 = vmatprep.subr.mxu0 0.0
      %4180 = vmatpush2.msra.mxu0 %v4138
      %4181 = vmatprep.subr.mxu0 0.0
      %4182 = vmatpush2.msra.mxu0 %v4137
      %4183 = vmatprep.subr.mxu0 0.0
      %4184 = vmatpush2.msra.mxu0 %v4136
      %4185 = vmatprep.subr.mxu0 0.0
      %4186 = vmatpush2.msra.mxu0 %v4135
      %4187 = vmatprep.subr.mxu0 0.0
      %4188 = vmatpush2.msra.mxu0 %v4134
      %4189 = vmatprep.subr.mxu0 0.0
      %4190 = vmatpush2.msra.mxu0 %v4133
      %4191 = vmatprep.subr.mxu0 0.0
      %4192 = vmatpush2.msra.mxu0 %v4132
      %4193 = vmatprep.subr.mxu0 0.0
      %4194 = vmatpush2.msra.mxu0 %v4131
      %4195 = vmatprep.subr.mxu0 0.0
      %4196 = vmatpush2.msra.mxu0 %v4130
      %4197 = vmatprep.subr.mxu0 0.0
      %4198 = vmatpush2.msra.mxu0 %v4129
      %4199 = vmatprep.subr.mxu0 0.0
      %4200 = vmatpush2.msra.mxu0 %v4128
      %4201 = vmatprep.subr.mxu0 0.0
      %4202 = vmatpush2.msra.mxu0 %v4127
      %4203 = vmatprep.subr.mxu0 0.0
      %4204 = vmatpush2.msra.mxu0 %v4126
      %4205 = vmatprep.subr.mxu0 0.0
      %4206 = vmatpush2.msra.mxu0 %v4125
      %4207 = vmatprep.subr.mxu0 0.0
      %4208 = vmatpush2.msra.mxu0 %v4124
      %4209 = vmatprep.mubr.f32.mxu0 %v4143
      %4210 = vmatmul.mubr.f32.gmra.mxu0 %v4141
      %v4211 = vpop.f32.mrf.mxu0
      %v4212 = vadd.f32 0.0, %v4211
      %v4213 = vpop.f32.mrf.mxu0
      %4214 = vdwg.mxu0
      %v4216 = vcombine.high %v3604, %v3604
      %4218 = vmatprep.subr.mxu0 0.0
      %4219 = vmatpush1.msra.mxu0 %v3587
      %4220 = vmatprep.subr.mxu0 0.0
      %4221 = vmatpush1.msra.mxu0 %v3586
      %4222 = vmatprep.subr.mxu0 0.0
      %4223 = vmatpush1.msra.mxu0 %v3585
      %4224 = vmatprep.subr.mxu0 0.0
      %4225 = vmatpush1.msra.mxu0 %v3584
      %4226 = vmatprep.subr.mxu0 0.0
      %4227 = vmatpush1.msra.mxu0 %v3583
      %4228 = vmatprep.subr.mxu0 0.0
      %4229 = vmatpush1.msra.mxu0 %v3582
      %4230 = vmatprep.subr.mxu0 0.0
      %4231 = vmatpush1.msra.mxu0 %v3581
      %4232 = vmatprep.subr.mxu0 0.0
      %4233 = vmatpush1.msra.mxu0 %v3580
      %4234 = vmatprep.subr.mxu0 0.0
      %4235 = vmatpush1.msra.mxu0 %v3579
      %4236 = vmatprep.subr.mxu0 0.0
      %4237 = vmatpush1.msra.mxu0 %v3578
      %4238 = vmatprep.subr.mxu0 0.0
      %4239 = vmatpush1.msra.mxu0 %v3577
      %4240 = vmatprep.subr.mxu0 0.0
      %4241 = vmatpush1.msra.mxu0 %v3576
      %4242 = vmatprep.subr.mxu0 0.0
      %4243 = vmatpush1.msra.mxu0 %v3575
      %4244 = vmatprep.subr.mxu0 0.0
      %4245 = vmatpush1.msra.mxu0 %v3574
      %4246 = vmatprep.subr.mxu0 0.0
      %4247 = vmatpush1.msra.mxu0 %v3573
      %4248 = vmatprep.subr.mxu0 0.0
      %4249 = vmatpush1.msra.mxu0 %v3572
      %4250 = vmatprep.subr.mxu0 0.0
      %4251 = vmatpush2.msra.mxu0 %v3603
      %4252 = vmatprep.subr.mxu0 0.0
      %4253 = vmatpush2.msra.mxu0 %v3602
      %4254 = vmatprep.subr.mxu0 0.0
      %4255 = vmatpush2.msra.mxu0 %v3601
      %4256 = vmatprep.subr.mxu0 0.0
      %4257 = vmatpush2.msra.mxu0 %v3600
      %4258 = vmatprep.subr.mxu0 0.0
      %4259 = vmatpush2.msra.mxu0 %v3599
      %4260 = vmatprep.subr.mxu0 0.0
      %4261 = vmatpush2.msra.mxu0 %v3598
      %4262 = vmatprep.subr.mxu0 0.0
      %4263 = vmatpush2.msra.mxu0 %v3597
      %4264 = vmatprep.subr.mxu0 0.0
      %4265 = vmatpush2.msra.mxu0 %v3596
      %4266 = vmatprep.subr.mxu0 0.0
      %4267 = vmatpush2.msra.mxu0 %v3595
      %4268 = vmatprep.subr.mxu0 0.0
      %4269 = vmatpush2.msra.mxu0 %v3594
      %4270 = vmatprep.subr.mxu0 0.0
      %4271 = vmatpush2.msra.mxu0 %v3593
      %4272 = vmatprep.subr.mxu0 0.0
      %4273 = vmatpush2.msra.mxu0 %v3592
      %4274 = vmatprep.subr.mxu0 0.0
      %4275 = vmatpush2.msra.mxu0 %v3591
      %4276 = vmatprep.subr.mxu0 0.0
      %4277 = vmatpush2.msra.mxu0 %v3590
      %4278 = vmatprep.subr.mxu0 0.0
      %4279 = vmatpush2.msra.mxu0 %v3589
      %4280 = vmatprep.subr.mxu0 0.0
      %4281 = vmatpush2.msra.mxu0 %v3588
      %4282 = vmatprep.mubr.f32.mxu0 %v4216
      %4283 = vmatmul.mubr.f32.gmra.mxu0 %v3604
      %v4284 = vpop.f32.mrf.mxu0
      %v4285 = vadd.f32 %v4212, %v4284
      %v4286 = vpop.f32.mrf.mxu0
      %4287 = vdwg.mxu0
      %4288 = vst [vmem:[%s199] sm:$0x7] %v4285
      %p4289 = scmp.lt.s32.totalorder %s14, 1
      %s4290 = scalar_select %p4289, %s14, 1
      %s4291 = smul.addr %s4290, 4
      %s4292 = scalar_lea.vmem %s3, %s4291
      // Predicated region
      $region33: #{tpu_custom_call.1} parent=31 // pred_check
        %p4293 = pneg %p110
      $region34: #{tpu_custom_call.1} parent=31 // pred_check_branch
        %4295 = sbr.rel (%p4293) target = $region36
      $region35: #{tpu_custom_call.1} parent=31 // pred_region
        _
      $region36: #{tpu_custom_call.1} parent=31 // pred_fallthru
        _
    $region32: #{tpu_custom_call.1} parent=5 // pred_fallthru
      _
    %p4296 = scmp.le.s32.totalorder 2, %s9
    // Predicated region
    $region37: #{tpu_custom_call.1} parent=5 // pred_check
      %p4297 = pneg %p4296
    $region38: #{tpu_custom_call.1} parent=5 // pred_check_branch
      %4299 = sbr.rel (%p4297) target = $region40
    $region39: #{tpu_custom_call.1} parent=5 // pred_region
      %s4300 = ssub.s32 %s9, 2
      // Predicated region
      $region41: #{tpu_custom_call.1} parent=39 // pred_check
        %p4301 = pneg %p116
      $region42: #{tpu_custom_call.1} parent=39 // pred_check_branch
        %4303 = sbr.rel (%p4301) target = $region44
      $region43: #{tpu_custom_call.1} parent=39 // pred_region
        %p4304 = scmp.lt.s32.totalorder %s15, 1
        %s4305 = scalar_select %p4304, %s15, 1
        %s4306 = smul.addr %s4305, 4
        %s4307 = scalar_lea.vmem %s3, %s4306
      $region44: #{tpu_custom_call.1} parent=39 // pred_fallthru
        _
    $region40: #{tpu_custom_call.1} parent=5 // pred_fallthru
      _
  $region6: #{tpu_custom_call.1} parent=0 // loop_footer
    %s13 = sadd.s32 1, %s9
  $region7: #{tpu_custom_call.1} parent=0 // loop_footer_branch
    %8 = sbr.rel target = $region3
  $region8: #{tpu_custom_call.1} parent=0 // loop_exit
    _

</llo_original>
